<compile_context>
chip_gen: v7x
topology: tpu7x:2x2x1
jax: 0.10.0
libtpu: 0.0.40
codegen_flags: <defaults>
</compile_context>

<pallas_src>
import functools

import jax
import jax.numpy as jnp
from jax.experimental import pallas as pl
from jax.experimental.pallas import tpu as pltpu

LANE = 128


# ------------------------------- kernel helpers -------------------------------

def _mish(x):
    # x * tanh(softplus(x)) == x * ((1+e^x)^2 - 1) / ((1+e^x)^2 + 1)
    # 1 EUP exp + 1 approx reciprocal; linear branch above 20 keeps it finite/stable.
    e = jnp.exp(jnp.minimum(x, 20.0))
    u = 1.0 + e
    u2 = u * u
    t = (u2 - 1.0) * pl.reciprocal(u2 + 1.0, approx=True)
    return jnp.where(x > 20.0, x, x * t)


# ---------------------------------- kernel -------------------------------------

def crb_kernel(xcol_ref, cond_ref,
               w0r_ref, b0r_ref, g0_ref, be0_ref,
               w1_ref, b1_ref, g1_ref, be1_ref,
               wl_ref, bl_ref,
               gmat_ref, sb_ref, sbt_ref,
               out_ref, *, K, pad, T, gs, eps=1e-5):
    M, Cp = out_ref.shape                      # M = b_block * T flattened rows
    inv_cnt = 1.0 / float(T * gs)

    G = gmat_ref[...]                          # [Cp, Cp] group membership (channels)
    SB = sb_ref[...]                           # [Bb, M]  per-batch row selector
    SBT = sbt_ref[...]                         # [M, Bb]  row broadcaster (SB^T)

    def group_norm(h, gamma, beta):
        # h: [M, Cp]; stats per (batch, group) via small constant matmuls (MXU).
        stats = jnp.dot(SB, jnp.concatenate([h, h * h], axis=1),
                        preferred_element_type=jnp.float32)               # [Bb, 2Cp]
        s, s2 = stats[:, :Cp], stats[:, Cp:]
        mean = jnp.dot(s, G, preferred_element_type=jnp.float32) * inv_cnt
        ex2 = jnp.dot(s2, G, preferred_element_type=jnp.float32) * inv_cnt
        var = jnp.maximum(ex2 - mean * mean, 0.0)                         # clamp one-pass var
        inv = jax.lax.rsqrt(var + eps)
        a = inv * gamma                                                   # [Bb, Cp]
        b = beta - mean * a
        ab = jnp.dot(SBT, jnp.concatenate([a, b], axis=1),
                     preferred_element_type=jnp.float32)                  # [M, 2Cp]
        return h * ab[:, :Cp] + ab[:, Cp:]

    xcol = xcol_ref[...]                                                  # [M, K*C_in]

    # ---- conv0 + residual 1x1 conv fused into ONE im2col matmul ----
    hr = jnp.dot(xcol, w0r_ref[...], preferred_element_type=jnp.float32) + b0r_ref[...]
    h, res = hr[:, :Cp], hr[:, Cp:]                                       # lane-aligned slices
    h = _mish(group_norm(h, g0_ref[...], be0_ref[...]))

    # ---- FiLM conditioning: Mish -> single Linear producing [scale | bias] ----
    c = _mish(cond_ref[...].astype(jnp.float32)).astype(wl_ref.dtype)     # [Bb, cond_dim]
    scbi = jnp.dot(c, wl_ref[...], preferred_element_type=jnp.float32) + bl_ref[...]
    film = jnp.dot(SBT, scbi, preferred_element_type=jnp.float32)         # [M, 2Cp]
    h = h * film[:, :Cp] + film[:, Cp:]

    # ---- conv1 via XLU rolls + per-batch boundary masks (h stays in vregs) ----
    t_in_b = jax.lax.broadcasted_iota(jnp.int32, (M, 1), 0) % T
    parts = []
    for k in range(K):                                                    # static unroll (K=3)
        s = pad - k
        if s == 0:
            parts.append(h)
        else:
            hrl = pltpu.roll(h, shift=s % M, axis=0)
            msk = (t_in_b >= s) if s > 0 else (t_in_b < T + s)
            parts.append(jnp.where(msk, hrl, 0.0))
    hcol = jnp.concatenate(parts, axis=1).astype(w1_ref.dtype)            # [M, K*Cp]
    h2 = jnp.dot(hcol, w1_ref[...], preferred_element_type=jnp.float32) + b1_ref[...]
    h2 = _mish(group_norm(h2, g1_ref[...], be1_ref[...]))

    # ---- residual add, lane-dense store ----
    out_ref[...] = (h2 + res).astype(out_ref.dtype)


# --------------------------------- wrapper --------------------------------------

def conditional_residual_block1d(x, cond, params, n_groups=8, b_block=None,
                                 weight_dtype=jnp.float32):
    """x: [B, C_in, T] (NCT, like PyTorch), cond: [B, cond_dim] -> [B, C_out, T]."""
    B, C_in, T = x.shape
    C_out, _, K = params["conv0_w"].shape
    cond_dim = cond.shape[1]
    pad = K // 2
    gs = C_out // n_groups
    C_pad = ((C_out + LANE - 1) // LANE) * LANE
    f32 = jnp.float32

    # batch chunk size: target >=128 MXU rows per grid step, keep >=2 grid steps when possible
    if b_block is None:
        b_block = max(1, min(B, LANE // max(1, T)))
    while B % b_block:
        b_block -= 1
    n_steps = B // b_block
    M = b_block * T

    # ---- im2col of x (pre-strided layout from the wrapper; tiny vs. weights) ----
    x_ntc = jnp.transpose(x, (0, 2, 1)).astype(f32)
    x_p = jnp.pad(x_ntc, ((0, 0), (pad, pad), (0, 0)))
    x_col = jnp.concatenate([x_p[:, k:k + T, :] for k in range(K)], axis=-1)
    x_col = x_col.reshape(B * T, K * C_in).astype(weight_dtype)            # [B*T, K*C_in]

    def padc(a):                               # zero-pad channel (last) dim C_out -> C_pad
        return jnp.pad(a.astype(f32), [(0, 0)] * (a.ndim - 1) + [(0, C_pad - C_out)])

    # conv weights as lane-dense matmul operands
    w0 = padc(jnp.transpose(params["conv0_w"], (2, 1, 0)).reshape(K * C_in, C_out)
              ).astype(weight_dtype)                                       # [K*C_in, Cp]
    w1 = jnp.pad(jnp.transpose(params["conv1_w"], (2, 1, 0)).astype(f32),
                 ((0, 0), (0, C_pad - C_out), (0, C_pad - C_out)))
    w1 = w1.reshape(K * C_pad, C_pad).astype(weight_dtype)                 # [K*Cp, Cp]
    b0 = padc(params["conv0_b"].reshape(1, C_out))
    b1 = padc(params["conv1_b"].reshape(1, C_out))
    g0 = padc(params["gn0_g"].reshape(1, C_out))
    be0 = padc(params["gn0_b"].reshape(1, C_out))
    g1 = padc(params["gn1_g"].reshape(1, C_out))
    be1 = padc(params["gn1_b"].reshape(1, C_out))

    # FiLM linear: scale | bias halves packed side by side (slices are lane-aligned at Cp)
    wls = padc(params["lin_w"][:C_out, :].T).astype(weight_dtype)          # [cond_dim, Cp]
    wlb = padc(params["lin_w"][C_out:, :].T).astype(weight_dtype)
    bls = padc(params["lin_b"][:C_out].reshape(1, C_out))
    blb = padc(params["lin_b"][C_out:].reshape(1, C_out))
    wl = jnp.concatenate([wls, wlb], axis=1)                               # [cond_dim, 2Cp]
    bl = jnp.concatenate([bls, blb], axis=1)                               # [1, 2Cp]

    # residual 1x1 conv folded onto the centre tap rows of x_col (identity when in==out),
    # then packed next to conv0 weights so conv0+residual are one matmul.
    if "res_w" in params:
        wr_small = params["res_w"][:, :, 0].T                              # [C_in, C_out]
        br_vec = params["res_b"]
    else:
        wr_small = jnp.eye(C_in, C_out, dtype=f32)
        br_vec = jnp.zeros((C_out,), f32)
    wr = jnp.zeros((K * C_in, C_out), f32)
    wr = wr.at[pad * C_in:(pad + 1) * C_in, :].set(wr_small.astype(f32))
    wr = padc(wr).astype(weight_dtype)
    br = padc(br_vec.reshape(1, C_out))
    w0r = jnp.concatenate([w0, wr], axis=1)                                # [K*C_in, 2Cp]
    b0r = jnp.concatenate([b0, br], axis=1)                                # [1, 2Cp]

    # GroupNorm helper constants (precomputed, grid-invariant)
    ch = jnp.arange(C_pad)
    gid = jnp.where(ch < C_out, ch // gs, -1)
    G = ((gid[:, None] == gid[None, :]) & (gid[:, None] >= 0)).astype(f32)  # [Cp, Cp]
    rows = jnp.arange(M)
    SB = (rows[None, :] // T == jnp.arange(b_block)[:, None]).astype(f32)   # [Bb, M]
    SBT = SB.T                                                              # [M, Bb]

    kernel = functools.partial(crb_kernel, K=K, pad=pad, T=T, gs=gs)

    def inv_spec(shape):
        n = len(shape)
        return pl.BlockSpec(shape, lambda b, n=n: (0,) * n)

    # TODO(synk): at production channel counts, single-buffer the invariant weight inputs
    # (pipeline_mode=pl.Buffered(1)) and pass weight_dtype=jnp.bfloat16 to fit v7x's 64 MiB VMEM.
    out2d = pl.pallas_call(
        kernel,
        out_shape=jax.ShapeDtypeStruct((B * T, C_pad), f32),
        grid=(n_steps,),
        in_specs=[
            pl.BlockSpec((M, K * C_in), lambda b: (b, 0)),        # rows of this batch chunk
            pl.BlockSpec((b_block, cond_dim), lambda b: (b, 0)),  # cond rows of this chunk
            inv_spec(w0r.shape), inv_spec(b0r.shape), inv_spec(g0.shape), inv_spec(be0.shape),
            inv_spec(w1.shape), inv_spec(b1.shape), inv_spec(g1.shape), inv_spec(be1.shape),
            inv_spec(wl.shape), inv_spec(bl.shape),
            inv_spec(G.shape), inv_spec(SB.shape), inv_spec(SBT.shape),
        ],
        out_specs=pl.BlockSpec((M, C_pad), lambda b: (b, 0)),     # lane-dense output slab
        compiler_params=pltpu.CompilerParams(
            dimension_semantics=("parallel",),    # shards batch chunks across TCs (v7x)
            vmem_limit_bytes=48 * 1024 * 1024,
        ),
    )(x_col, cond.astype(f32),
      w0r, b0r, g0, be0, w1, b1, g1, be1, wl, bl, G, SB, SBT)

    out = out2d.reshape(B, T, C_pad)[:, :, :C_out]
    return jnp.transpose(out, (0, 2, 1))                           # back to NCT


# ----------------------------- pure-JAX reference --------------------------------

def _ref_forward(x, cond, params, n_groups):
    K = params["conv0_w"].shape[2]
    pad = K // 2
    hi = jax.lax.Precision.HIGHEST

    def conv1d(v, w, b, p):
        out = jax.lax.conv_general_dilated(
            v, w, (1,), [(p, p)], dimension_numbers=("NCH", "OIH", "NCH"), precision=hi)
        return out + b[None, :, None]

    def gn(v, gamma, beta, eps=1e-5):
        B, C, T = v.shape
        vg = v.reshape(B, n_groups, (C // n_groups) * T)
        mean = vg.mean(-1, keepdims=True)
        var = vg.var(-1, keepdims=True)
        vn = ((vg - mean) / jnp.sqrt(var + eps)).reshape(B, C, T)
        return vn * gamma[None, :, None] + beta[None, :, None]

    def mish(v):
        return v * jnp.tanh(jnp.log(1.0 + jnp.exp(v)))

    C_out = params["conv0_w"].shape[0]
    h = mish(gn(conv1d(x, params["conv0_w"], params["conv0_b"], pad),
                params["gn0_g"], params["gn0_b"]))
    emb = jnp.dot(mish(cond), params["lin_w"].T, precision=hi) + params["lin_b"]
    scale = emb[:, :C_out][:, :, None]
    bias = emb[:, C_out:][:, :, None]
    h = scale * h + bias
    h = mish(gn(conv1d(h, params["conv1_w"], params["conv1_b"], pad),
                params["gn1_g"], params["gn1_b"]))
    if "res_w" in params:
        res = conv1d(x, params["res_w"], params["res_b"], 0)
    else:
        res = x
    return h + res


# ---------------------------------- params --------------------------------------

def init_params(key, C_in, C_out, cond_dim, K):
    ks = jax.random.split(key, 10)

    def nrm(k, shape, s=0.1):
        return (s * jax.random.normal(k, shape)).astype(jnp.float32)

    return dict(
        conv0_w=nrm(ks[0], (C_out, C_in, K)),
        conv0_b=nrm(ks[1], (C_out,)),
        gn0_g=(1.0 + 0.1 * jax.random.normal(ks[2], (C_out,))).astype(jnp.float32),
        gn0_b=nrm(ks[3], (C_out,)),
        conv1_w=nrm(ks[4], (C_out, C_out, K)),
        conv1_b=nrm(ks[5], (C_out,)),
        gn1_g=(1.0 + 0.1 * jax.random.normal(ks[6], (C_out,))).astype(jnp.float32),
        gn1_b=nrm(ks[7], (C_out,)),
        lin_w=nrm(ks[8], (2 * C_out, cond_dim)),
        lin_b=nrm(ks[9], (2 * C_out,)),
        res_w=nrm(ks[0], (C_out, C_in, 1)),
        res_b=nrm(ks[1], (C_out,)),
    )


if __name__ == "__main__":
    B, C_in, C_out, T, cond_dim, K, n_groups = 16, 4, 8, 16, 32, 3, 8

    key = jax.random.PRNGKey(0)
    kx, kc, kp = jax.random.split(key, 3)
    x = jax.random.normal(kx, (B, C_in, T), jnp.float32)
    cond = jax.random.normal(kc, (B, cond_dim), jnp.float32)
    params = init_params(kp, C_in, C_out, cond_dim, K)

    out = conditional_residual_block1d(x, cond, params, n_groups=n_groups)
    out = jax.block_until_ready(out)

    ref = _ref_forward(x, cond, params, n_groups)
    assert out.shape == (B, C_out, T), out.shape
    err = float(jnp.max(jnp.abs(out - ref)))
    # approx reciprocal inside Mish -> ~1e-3-level differences vs. the exact reference
    assert jnp.allclose(out, ref, atol=1e-2, rtol=1e-2), f"max abs err = {err}"
    print("KERNEL_OK")
</pallas_src>

<mosaic_0001>
module attributes {stable_mosaic.version = 11 : i64} {
  func.func @crb_kernel(%arg0: i32, %arg1: memref<128x12xf32, #tpu.memory_space<vmem>>, %arg2: memref<8x32xf32, #tpu.memory_space<vmem>>, %arg3: memref<12x256xf32, #tpu.memory_space<vmem>>, %arg4: memref<1x256xf32, #tpu.memory_space<vmem>>, %arg5: memref<1x128xf32, #tpu.memory_space<vmem>>, %arg6: memref<1x128xf32, #tpu.memory_space<vmem>>, %arg7: memref<384x128xf32, #tpu.memory_space<vmem>>, %arg8: memref<1x128xf32, #tpu.memory_space<vmem>>, %arg9: memref<1x128xf32, #tpu.memory_space<vmem>>, %arg10: memref<1x128xf32, #tpu.memory_space<vmem>>, %arg11: memref<32x256xf32, #tpu.memory_space<vmem>>, %arg12: memref<1x256xf32, #tpu.memory_space<vmem>>, %arg13: memref<128x128xf32, #tpu.memory_space<vmem>>, %arg14: memref<8x128xf32, #tpu.memory_space<vmem>>, %arg15: memref<128x8xf32, #tpu.memory_space<vmem>>, %arg16: memref<128x128xf32, #tpu.memory_space<vmem>>) attributes {dimension_semantics = [#tpu.dimension_semantics<parallel>], iteration_bounds = array<i64: 2>, scalar_prefetch = 0 : i64, scratch_operands = 0 : i64, tpu.core_type = #tpu.core_type<tc>, window_params = [{transform_indices = @transform_0, window_bounds = array<i64: 128, 12>}, {transform_indices = @transform_1, window_bounds = array<i64: 8, 32>}, {pipeline_mode = #tpu.pipeline_mode<synchronous>, transform_indices = @transform_2, window_bounds = array<i64: 12, 256>}, {pipeline_mode = #tpu.pipeline_mode<synchronous>, transform_indices = @transform_3, window_bounds = array<i64: 1, 256>}, {pipeline_mode = #tpu.pipeline_mode<synchronous>, transform_indices = @transform_4, window_bounds = array<i64: 1, 128>}, {pipeline_mode = #tpu.pipeline_mode<synchronous>, transform_indices = @transform_5, window_bounds = array<i64: 1, 128>}, {pipeline_mode = #tpu.pipeline_mode<synchronous>, transform_indices = @transform_6, window_bounds = array<i64: 384, 128>}, {pipeline_mode = #tpu.pipeline_mode<synchronous>, transform_indices = @transform_7, window_bounds = array<i64: 1, 128>}, {pipeline_mode = #tpu.pipeline_mode<synchronous>, transform_indices = @transform_8, window_bounds = array<i64: 1, 128>}, {pipeline_mode = #tpu.pipeline_mode<synchronous>, transform_indices = @transform_9, window_bounds = array<i64: 1, 128>}, {pipeline_mode = #tpu.pipeline_mode<synchronous>, transform_indices = @transform_10, window_bounds = array<i64: 32, 256>}, {pipeline_mode = #tpu.pipeline_mode<synchronous>, transform_indices = @transform_11, window_bounds = array<i64: 1, 256>}, {pipeline_mode = #tpu.pipeline_mode<synchronous>, transform_indices = @transform_12, window_bounds = array<i64: 128, 128>}, {pipeline_mode = #tpu.pipeline_mode<synchronous>, transform_indices = @transform_13, window_bounds = array<i64: 8, 128>}, {pipeline_mode = #tpu.pipeline_mode<synchronous>, transform_indices = @transform_14, window_bounds = array<i64: 128, 8>}, {transform_indices = @transform_15, window_bounds = array<i64: 128, 128>}]} {
    %c0 = arith.constant 0 : index
    %c0_0 = arith.constant 0 : index
    %0 = vector.load %arg13[%c0, %c0_0] : memref<128x128xf32, #tpu.memory_space<vmem>>, vector<128x128xf32>
    %c0_1 = arith.constant 0 : index
    %c0_2 = arith.constant 0 : index
    %1 = vector.load %arg14[%c0_1, %c0_2] : memref<8x128xf32, #tpu.memory_space<vmem>>, vector<8x128xf32>
    %c0_3 = arith.constant 0 : index
    %c0_4 = arith.constant 0 : index
    %2 = vector.load %arg15[%c0_3, %c0_4] : memref<128x8xf32, #tpu.memory_space<vmem>>, vector<128x8xf32>
    %c0_5 = arith.constant 0 : index
    %c0_6 = arith.constant 0 : index
    %3 = vector.load %arg1[%c0_5, %c0_6] : memref<128x12xf32, #tpu.memory_space<vmem>>, vector<128x12xf32>
    %c0_7 = arith.constant 0 : index
    %c0_8 = arith.constant 0 : index
    %4 = vector.load %arg3[%c0_7, %c0_8] : memref<12x256xf32, #tpu.memory_space<vmem>>, vector<12x256xf32>
    %cst = arith.constant dense<0.000000e+00> : vector<128x256xf32>
    %5 = tpu.matmul %3, %4, %cst {dimension_numbers = #tpu.dot_dimension_numbers<[1], [0], [0], [1], [0, 0, 1, 1], [], []>} : vector<128x12xf32>, vector<12x256xf32>, vector<128x256xf32> -> vector<128x256xf32>
    %c0_9 = arith.constant 0 : index
    %c0_10 = arith.constant 0 : index
    %6 = vector.load %arg4[%c0_9, %c0_10] : memref<1x256xf32, #tpu.memory_space<vmem>>, vector<1x256xf32>
    %7 = vector.broadcast %6 : vector<1x256xf32> to vector<128x256xf32>
    %8 = arith.addf %5, %7 : vector<128x256xf32>
    %9 = vector.extract_strided_slice %8 {offsets = [0, 0], sizes = [128, 128], strides = [1, 1]} : vector<128x256xf32> to vector<128x128xf32>
    %10 = vector.extract_strided_slice %8 {offsets = [0, 128], sizes = [128, 128], strides = [1, 1]} : vector<128x256xf32> to vector<128x128xf32>
    %c0_11 = arith.constant 0 : index
    %c0_12 = arith.constant 0 : index
    %11 = vector.load %arg5[%c0_11, %c0_12] : memref<1x128xf32, #tpu.memory_space<vmem>>, vector<1x128xf32>
    %c0_13 = arith.constant 0 : index
    %c0_14 = arith.constant 0 : index
    %12 = vector.load %arg6[%c0_13, %c0_14] : memref<1x128xf32, #tpu.memory_space<vmem>>, vector<1x128xf32>
    %13 = arith.mulf %9, %9 : vector<128x128xf32>
    %14 = tpu.concatenate %9, %13 in 1 : vector<128x128xf32>, vector<128x128xf32> -> vector<128x256xf32>
    %cst_15 = arith.constant dense<0.000000e+00> : vector<8x256xf32>
    %15 = tpu.matmul %1, %14, %cst_15 {dimension_numbers = #tpu.dot_dimension_numbers<[1], [0], [0], [1], [0, 0, 1, 1], [], []>} : vector<8x128xf32>, vector<128x256xf32>, vector<8x256xf32> -> vector<8x256xf32>
    %16 = vector.extract_strided_slice %15 {offsets = [0, 0], sizes = [8, 128], strides = [1, 1]} : vector<8x256xf32> to vector<8x128xf32>
    %17 = vector.extract_strided_slice %15 {offsets = [0, 128], sizes = [8, 128], strides = [1, 1]} : vector<8x256xf32> to vector<8x128xf32>
    %cst_16 = arith.constant dense<0.000000e+00> : vector<8x128xf32>
    %18 = tpu.matmul %16, %0, %cst_16 {dimension_numbers = #tpu.dot_dimension_numbers<[1], [0], [0], [1], [0, 0, 1, 1], [], []>} : vector<8x128xf32>, vector<128x128xf32>, vector<8x128xf32> -> vector<8x128xf32>
    %cst_17 = arith.constant 6.250000e-02 : f32
    %19 = vector.broadcast %cst_17 : f32 to vector<8x128xf32>
    %20 = arith.mulf %18, %19 : vector<8x128xf32>
    %cst_18 = arith.constant dense<0.000000e+00> : vector<8x128xf32>
    %21 = tpu.matmul %17, %0, %cst_18 {dimension_numbers = #tpu.dot_dimension_numbers<[1], [0], [0], [1], [0, 0, 1, 1], [], []>} : vector<8x128xf32>, vector<128x128xf32>, vector<8x128xf32> -> vector<8x128xf32>
    %cst_19 = arith.constant 6.250000e-02 : f32
    %22 = vector.broadcast %cst_19 : f32 to vector<8x128xf32>
    %23 = arith.mulf %21, %22 : vector<8x128xf32>
    %24 = arith.mulf %20, %20 : vector<8x128xf32>
    %25 = arith.subf %23, %24 : vector<8x128xf32>
    %cst_20 = arith.constant 0.000000e+00 : f32
    %26 = vector.broadcast %cst_20 : f32 to vector<8x128xf32>
    %27 = arith.maximumf %25, %26 : vector<8x128xf32>
    %cst_21 = arith.constant 9.99999974E-6 : f32
    %28 = vector.broadcast %cst_21 : f32 to vector<8x128xf32>
    %29 = arith.addf %27, %28 : vector<8x128xf32>
    %30 = math.rsqrt %29 : vector<8x128xf32>
    %31 = vector.broadcast %11 : vector<1x128xf32> to vector<8x128xf32>
    %32 = arith.mulf %30, %31 : vector<8x128xf32>
    %33 = arith.mulf %20, %32 : vector<8x128xf32>
    %34 = vector.broadcast %12 : vector<1x128xf32> to vector<8x128xf32>
    %35 = arith.subf %34, %33 : vector<8x128xf32>
    %36 = tpu.concatenate %32, %35 in 1 : vector<8x128xf32>, vector<8x128xf32> -> vector<8x256xf32>
    %cst_22 = arith.constant dense<0.000000e+00> : vector<128x256xf32>
    %37 = tpu.matmul %2, %36, %cst_22 {dimension_numbers = #tpu.dot_dimension_numbers<[1], [0], [0], [1], [0, 0, 1, 1], [], []>} : vector<128x8xf32>, vector<8x256xf32>, vector<128x256xf32> -> vector<128x256xf32>
    %38 = vector.extract_strided_slice %37 {offsets = [0, 0], sizes = [128, 128], strides = [1, 1]} : vector<128x256xf32> to vector<128x128xf32>
    %39 = arith.mulf %9, %38 : vector<128x128xf32>
    %40 = vector.extract_strided_slice %37 {offsets = [0, 128], sizes = [128, 128], strides = [1, 1]} : vector<128x256xf32> to vector<128x128xf32>
    %41 = arith.addf %39, %40 : vector<128x128xf32>
    %cst_23 = arith.constant 2.000000e+01 : f32
    %42 = vector.broadcast %cst_23 : f32 to vector<128x128xf32>
    %43 = arith.minimumf %41, %42 : vector<128x128xf32>
    %44 = math.exp %43 : vector<128x128xf32>
    %cst_24 = arith.constant 1.000000e+00 : f32
    %45 = vector.broadcast %cst_24 : f32 to vector<128x128xf32>
    %46 = arith.addf %45, %44 : vector<128x128xf32>
    %47 = arith.mulf %46, %46 : vector<128x128xf32>
    %cst_25 = arith.constant 1.000000e+00 : f32
    %48 = vector.broadcast %cst_25 : f32 to vector<128x128xf32>
    %49 = arith.subf %47, %48 : vector<128x128xf32>
    %cst_26 = arith.constant 1.000000e+00 : f32
    %50 = vector.broadcast %cst_26 : f32 to vector<128x128xf32>
    %51 = arith.addf %47, %50 : vector<128x128xf32>
    %52 = tpu.reciprocal %51 {approx = true} : vector<128x128xf32> -> vector<128x128xf32>
    %53 = arith.mulf %49, %52 : vector<128x128xf32>
    %cst_27 = arith.constant 2.000000e+01 : f32
    %54 = vector.broadcast %cst_27 : f32 to vector<128x128xf32>
    %55 = arith.cmpf ogt, %41, %54 : vector<128x128xf32>
    %56 = arith.mulf %41, %53 : vector<128x128xf32>
    %57 = arith.select %55, %41, %56 : vector<128x128xi1>, vector<128x128xf32>
    %c0_28 = arith.constant 0 : index
    %c0_29 = arith.constant 0 : index
    %58 = vector.load %arg2[%c0_28, %c0_29] : memref<8x32xf32, #tpu.memory_space<vmem>>, vector<8x32xf32>
    %cst_30 = arith.constant 2.000000e+01 : f32
    %59 = vector.broadcast %cst_30 : f32 to vector<8x32xf32>
    %60 = arith.minimumf %58, %59 : vector<8x32xf32>
    %61 = math.exp %60 : vector<8x32xf32>
    %cst_31 = arith.constant 1.000000e+00 : f32
    %62 = vector.broadcast %cst_31 : f32 to vector<8x32xf32>
    %63 = arith.addf %62, %61 : vector<8x32xf32>
    %64 = arith.mulf %63, %63 : vector<8x32xf32>
    %cst_32 = arith.constant 1.000000e+00 : f32
    %65 = vector.broadcast %cst_32 : f32 to vector<8x32xf32>
    %66 = arith.subf %64, %65 : vector<8x32xf32>
    %cst_33 = arith.constant 1.000000e+00 : f32
    %67 = vector.broadcast %cst_33 : f32 to vector<8x32xf32>
    %68 = arith.addf %64, %67 : vector<8x32xf32>
    %69 = tpu.reciprocal %68 {approx = true} : vector<8x32xf32> -> vector<8x32xf32>
    %70 = arith.mulf %66, %69 : vector<8x32xf32>
    %cst_34 = arith.constant 2.000000e+01 : f32
    %71 = vector.broadcast %cst_34 : f32 to vector<8x32xf32>
    %72 = arith.cmpf ogt, %58, %71 : vector<8x32xf32>
    %73 = arith.mulf %58, %70 : vector<8x32xf32>
    %74 = arith.select %72, %58, %73 : vector<8x32xi1>, vector<8x32xf32>
    %c0_35 = arith.constant 0 : index
    %c0_36 = arith.constant 0 : index
    %75 = vector.load %arg11[%c0_35, %c0_36] : memref<32x256xf32, #tpu.memory_space<vmem>>, vector<32x256xf32>
    %cst_37 = arith.constant dense<0.000000e+00> : vector<8x256xf32>
    %76 = tpu.matmul %74, %75, %cst_37 {dimension_numbers = #tpu.dot_dimension_numbers<[1], [0], [0], [1], [0, 0, 1, 1], [], []>} : vector<8x32xf32>, vector<32x256xf32>, vector<8x256xf32> -> vector<8x256xf32>
    %c0_38 = arith.constant 0 : index
    %c0_39 = arith.constant 0 : index
    %77 = vector.load %arg12[%c0_38, %c0_39] : memref<1x256xf32, #tpu.memory_space<vmem>>, vector<1x256xf32>
    %78 = vector.broadcast %77 : vector<1x256xf32> to vector<8x256xf32>
    %79 = arith.addf %76, %78 : vector<8x256xf32>
    %cst_40 = arith.constant dense<0.000000e+00> : vector<128x256xf32>
    %80 = tpu.matmul %2, %79, %cst_40 {dimension_numbers = #tpu.dot_dimension_numbers<[1], [0], [0], [1], [0, 0, 1, 1], [], []>} : vector<128x8xf32>, vector<8x256xf32>, vector<128x256xf32> -> vector<128x256xf32>
    %81 = vector.extract_strided_slice %80 {offsets = [0, 0], sizes = [128, 128], strides = [1, 1]} : vector<128x256xf32> to vector<128x128xf32>
    %82 = arith.mulf %57, %81 : vector<128x128xf32>
    %83 = vector.extract_strided_slice %80 {offsets = [0, 128], sizes = [128, 128], strides = [1, 1]} : vector<128x256xf32> to vector<128x128xf32>
    %84 = arith.addf %82, %83 : vector<128x128xf32>
    %85 = tpu.iota {dimensions = array<i32: 0>} : vector<128x1xi32>
    %c16_i32 = arith.constant 16 : i32
    %c0_i32 = arith.constant 0 : i32
    %86 = arith.cmpi eq, %c16_i32, %c0_i32 : i32
    %c1_i32 = arith.constant 1 : i32
    %87 = arith.select %86, %c1_i32, %c16_i32 : i32
    %88 = vector.broadcast %87 : i32 to vector<128x1xi32>
    %89 = arith.remsi %85, %88 : vector<128x1xi32>
    %c0_i32_41 = arith.constant 0 : i32
    %90 = vector.broadcast %c0_i32_41 : i32 to vector<128x1xi32>
    %91 = arith.cmpi ne, %89, %90 : vector<128x1xi32>
    %c0_i32_42 = arith.constant 0 : i32
    %92 = vector.broadcast %c0_i32_42 : i32 to vector<128x1xi32>
    %93 = arith.cmpi slt, %89, %92 : vector<128x1xi32>
    %c0_i32_43 = arith.constant 0 : i32
    %94 = arith.cmpi slt, %87, %c0_i32_43 : i32
    %95 = vector.broadcast %94 : i1 to vector<128x1xi1>
    %96 = vector.broadcast %95 : vector<128x1xi1> to vector<128x1xi1>
    %97 = arith.xori %93, %96 : vector<128x1xi1>
    %98 = arith.andi %97, %91 : vector<128x1xi1>
    %99 = vector.broadcast %87 : i32 to vector<128x1xi32>
    %100 = arith.addi %89, %99 : vector<128x1xi32>
    %101 = arith.select %98, %100, %89 : vector<128x1xi1>, vector<128x1xi32>
    %c1_i32_44 = arith.constant 1 : i32
    %102 = tpu.dynamic_rotate %84 by %c1_i32_44 dim 0 : vector<128x128xf32>, i32 -> vector<128x128xf32>
    %c1_i32_45 = arith.constant 1 : i32
    %103 = vector.broadcast %c1_i32_45 : i32 to vector<128x1xi32>
    %104 = arith.cmpi sge, %101, %103 : vector<128x1xi32>
    %cst_46 = arith.constant 0.000000e+00 : f32
    %105 = vector.shape_cast %104 : vector<128x1xi1> to vector<128x1xi1>
    %106 = vector.broadcast %105 : vector<128x1xi1> to vector<128x128xi1>
    %107 = vector.broadcast %cst_46 : f32 to vector<128x128xf32>
    %108 = arith.select %106, %102, %107 : vector<128x128xi1>, vector<128x128xf32>
    %c127_i32 = arith.constant 127 : i32
    %109 = tpu.dynamic_rotate %84 by %c127_i32 dim 0 : vector<128x128xf32>, i32 -> vector<128x128xf32>
    %c15_i32 = arith.constant 15 : i32
    %110 = vector.broadcast %c15_i32 : i32 to vector<128x1xi32>
    %111 = arith.cmpi slt, %101, %110 : vector<128x1xi32>
    %cst_47 = arith.constant 0.000000e+00 : f32
    %112 = vector.shape_cast %111 : vector<128x1xi1> to vector<128x1xi1>
    %113 = vector.broadcast %112 : vector<128x1xi1> to vector<128x128xi1>
    %114 = vector.broadcast %cst_47 : f32 to vector<128x128xf32>
    %115 = arith.select %113, %109, %114 : vector<128x128xi1>, vector<128x128xf32>
    %116 = tpu.concatenate %108, %84, %115 in 1 : vector<128x128xf32>, vector<128x128xf32>, vector<128x128xf32> -> vector<128x384xf32>
    %c0_48 = arith.constant 0 : index
    %c0_49 = arith.constant 0 : index
    %117 = vector.load %arg7[%c0_48, %c0_49] : memref<384x128xf32, #tpu.memory_space<vmem>>, vector<384x128xf32>
    %cst_50 = arith.constant dense<0.000000e+00> : vector<128x128xf32>
    %118 = tpu.matmul %116, %117, %cst_50 {dimension_numbers = #tpu.dot_dimension_numbers<[1], [0], [0], [1], [0, 0, 1, 1], [], []>} : vector<128x384xf32>, vector<384x128xf32>, vector<128x128xf32> -> vector<128x128xf32>
    %c0_51 = arith.constant 0 : index
    %c0_52 = arith.constant 0 : index
    %119 = vector.load %arg8[%c0_51, %c0_52] : memref<1x128xf32, #tpu.memory_space<vmem>>, vector<1x128xf32>
    %120 = vector.broadcast %119 : vector<1x128xf32> to vector<128x128xf32>
    %121 = arith.addf %118, %120 : vector<128x128xf32>
    %c0_53 = arith.constant 0 : index
    %c0_54 = arith.constant 0 : index
    %122 = vector.load %arg9[%c0_53, %c0_54] : memref<1x128xf32, #tpu.memory_space<vmem>>, vector<1x128xf32>
    %c0_55 = arith.constant 0 : index
    %c0_56 = arith.constant 0 : index
    %123 = vector.load %arg10[%c0_55, %c0_56] : memref<1x128xf32, #tpu.memory_space<vmem>>, vector<1x128xf32>
    %124 = arith.mulf %121, %121 : vector<128x128xf32>
    %125 = tpu.concatenate %121, %124 in 1 : vector<128x128xf32>, vector<128x128xf32> -> vector<128x256xf32>
    %cst_57 = arith.constant dense<0.000000e+00> : vector<8x256xf32>
    %126 = tpu.matmul %1, %125, %cst_57 {dimension_numbers = #tpu.dot_dimension_numbers<[1], [0], [0], [1], [0, 0, 1, 1], [], []>} : vector<8x128xf32>, vector<128x256xf32>, vector<8x256xf32> -> vector<8x256xf32>
    %127 = vector.extract_strided_slice %126 {offsets = [0, 0], sizes = [8, 128], strides = [1, 1]} : vector<8x256xf32> to vector<8x128xf32>
    %128 = vector.extract_strided_slice %126 {offsets = [0, 128], sizes = [8, 128], strides = [1, 1]} : vector<8x256xf32> to vector<8x128xf32>
    %cst_58 = arith.constant dense<0.000000e+00> : vector<8x128xf32>
    %129 = tpu.matmul %127, %0, %cst_58 {dimension_numbers = #tpu.dot_dimension_numbers<[1], [0], [0], [1], [0, 0, 1, 1], [], []>} : vector<8x128xf32>, vector<128x128xf32>, vector<8x128xf32> -> vector<8x128xf32>
    %cst_59 = arith.constant 6.250000e-02 : f32
    %130 = vector.broadcast %cst_59 : f32 to vector<8x128xf32>
    %131 = arith.mulf %129, %130 : vector<8x128xf32>
    %cst_60 = arith.constant dense<0.000000e+00> : vector<8x128xf32>
    %132 = tpu.matmul %128, %0, %cst_60 {dimension_numbers = #tpu.dot_dimension_numbers<[1], [0], [0], [1], [0, 0, 1, 1], [], []>} : vector<8x128xf32>, vector<128x128xf32>, vector<8x128xf32> -> vector<8x128xf32>
    %cst_61 = arith.constant 6.250000e-02 : f32
    %133 = vector.broadcast %cst_61 : f32 to vector<8x128xf32>
    %134 = arith.mulf %132, %133 : vector<8x128xf32>
    %135 = arith.mulf %131, %131 : vector<8x128xf32>
    %136 = arith.subf %134, %135 : vector<8x128xf32>
    %cst_62 = arith.constant 0.000000e+00 : f32
    %137 = vector.broadcast %cst_62 : f32 to vector<8x128xf32>
    %138 = arith.maximumf %136, %137 : vector<8x128xf32>
    %cst_63 = arith.constant 9.99999974E-6 : f32
    %139 = vector.broadcast %cst_63 : f32 to vector<8x128xf32>
    %140 = arith.addf %138, %139 : vector<8x128xf32>
    %141 = math.rsqrt %140 : vector<8x128xf32>
    %142 = vector.broadcast %122 : vector<1x128xf32> to vector<8x128xf32>
    %143 = arith.mulf %141, %142 : vector<8x128xf32>
    %144 = arith.mulf %131, %143 : vector<8x128xf32>
    %145 = vector.broadcast %123 : vector<1x128xf32> to vector<8x128xf32>
    %146 = arith.subf %145, %144 : vector<8x128xf32>
    %147 = tpu.concatenate %143, %146 in 1 : vector<8x128xf32>, vector<8x128xf32> -> vector<8x256xf32>
    %cst_64 = arith.constant dense<0.000000e+00> : vector<128x256xf32>
    %148 = tpu.matmul %2, %147, %cst_64 {dimension_numbers = #tpu.dot_dimension_numbers<[1], [0], [0], [1], [0, 0, 1, 1], [], []>} : vector<128x8xf32>, vector<8x256xf32>, vector<128x256xf32> -> vector<128x256xf32>
    %149 = vector.extract_strided_slice %148 {offsets = [0, 0], sizes = [128, 128], strides = [1, 1]} : vector<128x256xf32> to vector<128x128xf32>
    %150 = arith.mulf %121, %149 : vector<128x128xf32>
    %151 = vector.extract_strided_slice %148 {offsets = [0, 128], sizes = [128, 128], strides = [1, 1]} : vector<128x256xf32> to vector<128x128xf32>
    %152 = arith.addf %150, %151 : vector<128x128xf32>
    %cst_65 = arith.constant 2.000000e+01 : f32
    %153 = vector.broadcast %cst_65 : f32 to vector<128x128xf32>
    %154 = arith.minimumf %152, %153 : vector<128x128xf32>
    %155 = math.exp %154 : vector<128x128xf32>
    %cst_66 = arith.constant 1.000000e+00 : f32
    %156 = vector.broadcast %cst_66 : f32 to vector<128x128xf32>
    %157 = arith.addf %156, %155 : vector<128x128xf32>
    %158 = arith.mulf %157, %157 : vector<128x128xf32>
    %cst_67 = arith.constant 1.000000e+00 : f32
    %159 = vector.broadcast %cst_67 : f32 to vector<128x128xf32>
    %160 = arith.subf %158, %159 : vector<128x128xf32>
    %cst_68 = arith.constant 1.000000e+00 : f32
    %161 = vector.broadcast %cst_68 : f32 to vector<128x128xf32>
    %162 = arith.addf %158, %161 : vector<128x128xf32>
    %163 = tpu.reciprocal %162 {approx = true} : vector<128x128xf32> -> vector<128x128xf32>
    %164 = arith.mulf %160, %163 : vector<128x128xf32>
    %cst_69 = arith.constant 2.000000e+01 : f32
    %165 = vector.broadcast %cst_69 : f32 to vector<128x128xf32>
    %166 = arith.cmpf ogt, %152, %165 : vector<128x128xf32>
    %167 = arith.mulf %152, %164 : vector<128x128xf32>
    %168 = arith.select %166, %152, %167 : vector<128x128xi1>, vector<128x128xf32>
    %169 = arith.addf %168, %10 : vector<128x128xf32>
    %c0_70 = arith.constant 0 : index
    %c0_71 = arith.constant 0 : index
    %170 = vector.load %arg16[%c0_70, %c0_71] : memref<128x128xf32, #tpu.memory_space<vmem>>, vector<128x128xf32>
    tpu.vector_store %arg16[%c0_70, %c0_71], %169 {strides = array<i32>} : memref<128x128xf32, #tpu.memory_space<vmem>>, vector<128x128xf32>,
    return
  }
  func.func @transform_0(%arg0: i32) -> (i32, i32) {
    %c0_i32 = arith.constant 0 : i32
    %c0_i32_0 = arith.constant 0 : i32
    return %arg0, %c0_i32 : i32, i32
  }
  func.func @transform_1(%arg0: i32) -> (i32, i32) {
    %c0_i32 = arith.constant 0 : i32
    %c0_i32_0 = arith.constant 0 : i32
    return %arg0, %c0_i32 : i32, i32
  }
  func.func @transform_2(%arg0: i32) -> (i32, i32) {
    %c0_i32 = arith.constant 0 : i32
    %c0_i32_0 = arith.constant 0 : i32
    %c0_i32_1 = arith.constant 0 : i32
    return %c0_i32, %c0_i32_0 : i32, i32
  }
  func.func @transform_3(%arg0: i32) -> (i32, i32) {
    %c0_i32 = arith.constant 0 : i32
    %c0_i32_0 = arith.constant 0 : i32
    %c0_i32_1 = arith.constant 0 : i32
    return %c0_i32, %c0_i32_0 : i32, i32
  }
  func.func @transform_4(%arg0: i32) -> (i32, i32) {
    %c0_i32 = arith.constant 0 : i32
    %c0_i32_0 = arith.constant 0 : i32
    %c0_i32_1 = arith.constant 0 : i32
    return %c0_i32, %c0_i32_0 : i32, i32
  }
  func.func @transform_5(%arg0: i32) -> (i32, i32) {
    %c0_i32 = arith.constant 0 : i32
    %c0_i32_0 = arith.constant 0 : i32
    %c0_i32_1 = arith.constant 0 : i32
    return %c0_i32, %c0_i32_0 : i32, i32
  }
  func.func @transform_6(%arg0: i32) -> (i32, i32) {
    %c0_i32 = arith.constant 0 : i32
    %c0_i32_0 = arith.constant 0 : i32
    %c0_i32_1 = arith.constant 0 : i32
    return %c0_i32, %c0_i32_0 : i32, i32
  }
  func.func @transform_7(%arg0: i32) -> (i32, i32) {
    %c0_i32 = arith.constant 0 : i32
    %c0_i32_0 = arith.constant 0 : i32
    %c0_i32_1 = arith.constant 0 : i32
    return %c0_i32, %c0_i32_0 : i32, i32
  }
  func.func @transform_8(%arg0: i32) -> (i32, i32) {
    %c0_i32 = arith.constant 0 : i32
    %c0_i32_0 = arith.constant 0 : i32
    %c0_i32_1 = arith.constant 0 : i32
    return %c0_i32, %c0_i32_0 : i32, i32
  }
  func.func @transform_9(%arg0: i32) -> (i32, i32) {
    %c0_i32 = arith.constant 0 : i32
    %c0_i32_0 = arith.constant 0 : i32
    %c0_i32_1 = arith.constant 0 : i32
    return %c0_i32, %c0_i32_0 : i32, i32
  }
  func.func @transform_10(%arg0: i32) -> (i32, i32) {
    %c0_i32 = arith.constant 0 : i32
    %c0_i32_0 = arith.constant 0 : i32
    %c0_i32_1 = arith.constant 0 : i32
    return %c0_i32, %c0_i32_0 : i32, i32
  }
  func.func @transform_11(%arg0: i32) -> (i32, i32) {
    %c0_i32 = arith.constant 0 : i32
    %c0_i32_0 = arith.constant 0 : i32
    %c0_i32_1 = arith.constant 0 : i32
    return %c0_i32, %c0_i32_0 : i32, i32
  }
  func.func @transform_12(%arg0: i32) -> (i32, i32) {
    %c0_i32 = arith.constant 0 : i32
    %c0_i32_0 = arith.constant 0 : i32
    %c0_i32_1 = arith.constant 0 : i32
    return %c0_i32, %c0_i32_0 : i32, i32
  }
  func.func @transform_13(%arg0: i32) -> (i32, i32) {
    %c0_i32 = arith.constant 0 : i32
    %c0_i32_0 = arith.constant 0 : i32
    %c0_i32_1 = arith.constant 0 : i32
    return %c0_i32, %c0_i32_0 : i32, i32
  }
  func.func @transform_14(%arg0: i32) -> (i32, i32) {
    %c0_i32 = arith.constant 0 : i32
    %c0_i32_0 = arith.constant 0 : i32
    %c0_i32_1 = arith.constant 0 : i32
    return %c0_i32, %c0_i32_0 : i32, i32
  }
  func.func @transform_15(%arg0: i32) -> (i32, i32) {
    %c0_i32 = arith.constant 0 : i32
    %c0_i32_0 = arith.constant 0 : i32
    return %arg0, %c0_i32 : i32, i32
  }
}

</mosaic_0001>

<llo_original>
// kernel: tpu_custom_call.1
$region0: #{tpu_custom_call.1}
  #allocation0 [shape = 'u32[]', space=smem, size = 0x4, offset = 0x4, fixed_abs, tag = 'smem constant byte address 0x4 - core index']
  #allocation1 [shape = 'u32[144,128]{1,0:T(1,128)}', space=vmem, size = 0x12000, scoped, tag = 'internal scratch']
  %s0 = inlined_call_operand.vmem [shape: f32[256,12], index: 0, kind: input, shape index: {}]
  %s1 = inlined_call_operand.hbm [shape: f32[16,32], index: 1, kind: input, shape index: {}]
  %s2 = inlined_call_operand.hbm [shape: f32[12,256], index: 2, kind: input, shape index: {}]
  %s3 = inlined_call_operand.hbm [shape: f32[1,256], index: 3, kind: input, shape index: {}]
  %s4 = inlined_call_operand.vmem [shape: f32[1,128], index: 4, kind: input, shape index: {}]
  %s5 = inlined_call_operand.hbm [shape: f32[1,128], index: 5, kind: input, shape index: {}]
  %s6 = inlined_call_operand.vmem [shape: f32[384,128], index: 6, kind: input, shape index: {}]
  %s7 = inlined_call_operand.hbm [shape: f32[1,128], index: 7, kind: input, shape index: {}]
  %s8 = inlined_call_operand.hbm [shape: f32[1,128], index: 8, kind: input, shape index: {}]
  %s9 = inlined_call_operand.hbm [shape: f32[1,128], index: 9, kind: input, shape index: {}]
  %s10 = inlined_call_operand.vmem [shape: f32[32,256], index: 10, kind: input, shape index: {}]
  %s11 = inlined_call_operand.hbm [shape: f32[1,256], index: 11, kind: input, shape index: {}]
  %s12 = inlined_call_operand.hbm [shape: f32[128,128], index: 12, kind: input, shape index: {}]
  %s13 = inlined_call_operand.vmem [shape: f32[8,128], index: 13, kind: input, shape index: {}]
  %s14 = inlined_call_operand.vmem [shape: f32[128,8], index: 14, kind: input, shape index: {}]
  %s15 = inlined_call_operand.hbm [shape: f32[256,128], index: 15, kind: output, shape index: {}]
  %s16 = sld [smem:[#allocation0]]
  $region129: #{tpu_custom_call.1} parent=0
    _
  %s18 = ssub.s32 1, %s16
  %s19 = scalar_select 0, %s18, %s16
  $region1: #{tpu_custom_call.1} parent=0
    #allocation2 [shape = 'u8[8192]{0}', space=vmem, size = 0x2000, scoped, tag = 'input window, operand 1']
    #allocation3 [shape = 's32[2]{0}', space=sflag, size = 0x8, scoped, tag = 'scoped memory for tpu_custom_call.1']
    #allocation4 [shape = 's32[2]{0}', space=sflag, size = 0x8, scoped, tag = 'scoped memory for tpu_custom_call.1']
    #allocation5 [shape = 'u8[16384]{0}', space=vmem, size = 0x4000, scoped, tag = 'input window, operand 2, single buffered']
    #allocation6 [shape = 's32[1]{0}', space=sflag, size = 0x4, scoped, tag = 'scoped memory for tpu_custom_call.1']
    #allocation7 [shape = 'u8[1024]{0}', space=vmem, size = 0x400, scoped, tag = 'input window, operand 3, single buffered']
    #allocation8 [shape = 'u8[512]{0}', space=vmem, size = 0x400, scoped, tag = 'input window, operand 5, single buffered']
    #allocation9 [shape = 's32[1]{0}', space=sflag, size = 0x4, scoped, tag = 'scoped memory for tpu_custom_call.1']
    #allocation10 [shape = 'u8[512]{0}', space=vmem, size = 0x400, scoped, tag = 'input window, operand 7, single buffered']
    #allocation11 [shape = 'u8[512]{0}', space=vmem, size = 0x400, scoped, tag = 'input window, operand 8, single buffered']
    #allocation12 [shape = 's32[1]{0}', space=sflag, size = 0x4, scoped, tag = 'scoped memory for tpu_custom_call.1']
    #allocation13 [shape = 'u8[512]{0}', space=vmem, size = 0x400, scoped, tag = 'input window, operand 9, single buffered']
    #allocation14 [shape = 'u8[1024]{0}', space=vmem, size = 0x400, scoped, tag = 'input window, operand 11, single buffered']
    #allocation15 [shape = 's32[1]{0}', space=sflag, size = 0x4, scoped, tag = 'scoped memory for tpu_custom_call.1']
    #allocation16 [shape = 'u8[65536]{0}', space=vmem, size = 0x10000, scoped, tag = 'input window, operand 12, single buffered']
    #allocation17 [shape = 'u8[131072]{0}', space=vmem, size = 0x20000, scoped, tag = 'output window, operand 0']
    %20 = vsyncpa [#allocation3], 0
    %s21 = scalar_lea.sflag [#allocation3], 1
    %22 = vsyncpa %s21, 0
    %23 = vsyncpa [#allocation6], 0
    %24 = vsyncpa [#allocation9], 0
    %25 = vsyncpa [#allocation12], 0
    %26 = vsyncpa [#allocation15], 0
    %27 = vsyncpa [#allocation4], 0
    %s28 = scalar_lea.sflag [#allocation4], 1
    %29 = vsyncpa %s28, 0
    loop: start=0, step=1, limit=4
    $region2: #{tpu_custom_call.1} parent=1 // loop_pre_header
      _
    $region3: #{tpu_custom_call.1} parent=1 // loop_header
      %s31 = sphi 0, %s35
      %p32 = scmp.ge.s32.totalorder %s31, 4
      %s41 = sphi 0, %s43
      %s44 = sphi 0, %s41
      %s45 = sphi 0, %s44
      %s61 = sphi 0, %s45
      %s67 = sphi 0, %s69
      %s70 = sphi 0, %s67
      %s71 = sphi 0, %s70
      %s87 = sphi 0, %s71
      %s91 = sphi 0, %s91
      %s93 = sphi 0, %s91
      %s94 = sphi 0, %s93
      %s108 = sphi 0, %s94
      %s112 = sphi 0, %s112
      %s114 = sphi 0, %s112
      %s115 = sphi 0, %s114
      %s129 = sphi 0, %s115
      %s133 = sphi 0, %s133
      %s135 = sphi 0, %s133
      %s136 = sphi 0, %s135
      %s150 = sphi 0, %s136
      %s154 = sphi 0, %s154
      %s156 = sphi 0, %s154
      %s157 = sphi 0, %s156
      %s171 = sphi 0, %s157
      %s175 = sphi 0, %s175
      %s177 = sphi 0, %s175
      %s178 = sphi 0, %s177
      %s192 = sphi 0, %s178
      %s196 = sphi 0, %s196
      %s198 = sphi 0, %s196
      %s199 = sphi 0, %s198
      %s213 = sphi 0, %s199
      %s217 = sphi 0, %s217
      %s219 = sphi 0, %s217
      %s220 = sphi 0, %s219
      %s234 = sphi 0, %s220
      %s238 = sphi 0, %s238
      %s240 = sphi 0, %s238
      %s241 = sphi 0, %s240
      %s255 = sphi 0, %s241
      %s259 = sphi 0, %s259
      %s261 = sphi 0, %s259
      %s262 = sphi 0, %s261
      %s276 = sphi 0, %s262
      %s280 = sphi 0, %s280
      %s282 = sphi 0, %s280
      %s283 = sphi 0, %s282
      %s297 = sphi 0, %s283
      %s301 = sphi 0, %s301
      %s303 = sphi 0, %s301
      %s304 = sphi 0, %s303
      %s318 = sphi 0, %s304
      %s322 = sphi 0, %s322
      %s324 = sphi 0, %s322
      %s325 = sphi 0, %s324
      %s339 = sphi 0, %s325
      %s343 = sphi 0, %s343
      %s345 = sphi 0, %s343
      %s346 = sphi 0, %s345
      %s360 = sphi 0, %s346
      %s366 = sphi 0, %s368
      %s369 = sphi 0, %s366
      %s370 = sphi 0, %s369
      %s386 = sphi 0, %s370
    $region4: #{tpu_custom_call.1} parent=1 // loop_header_branch
      %34 = sbr.rel (%p32) target = $region8
    $region5: #{tpu_custom_call.1} parent=1 // loop_body
      %s36 = ssub.s32 %s31, 1
      %s37 = ssub.s32 %s31, 2
      %s38 = sadd.s32 %s31, 1
      %s39 = ssub.s32 %s31, %s38
      %p40 = scmp.eq.s32.totalorder %s39, 0
      %s42 = sadd.s32 %s41, 1
      %s43 = scalar_select %p40, %s41, %s42
      %p46 = pneg %p40
      %p47 = scmp.eq.s32.totalorder %s31, 1
      %p48 = por %p46, %p47
      %p49 = scmp.ne.s32.totalorder %s41, %s44
      %p50 = scmp.eq.s32.totalorder %s31, 0
      %p51 = por %p49, %p50
      %p52 = scmp.ne.s32.totalorder %s41, %s44
      %p53 = scmp.eq.s32.totalorder %s36, 1
      %p54 = por %p52, %p53
      %p55 = scmp.ne.s32.totalorder %s44, %s45
      %p56 = scmp.eq.s32.totalorder %s36, 0
      %p57 = por %p55, %p56
      %p58 = scmp.ne.s32.totalorder %s44, %s45
      %p59 = scmp.eq.s32.totalorder %s37, 1
      %p60 = por %p58, %p59
      %p62 = scmp.ne.s32.totalorder %s45, %s61
      %p63 = scmp.eq.s32.totalorder %s37, 0
      %p64 = por %p62, %p63
      %s65 = ssub.s32 %s31, %s38
      %p66 = scmp.eq.s32.totalorder %s65, 0
      %s68 = sadd.s32 %s67, 1
      %s69 = scalar_select %p66, %s67, %s68
      %p72 = pneg %p66
      %p73 = scmp.eq.s32.totalorder %s31, 1
      %p74 = por %p72, %p73
      %p75 = scmp.ne.s32.totalorder %s67, %s70
      %p76 = scmp.eq.s32.totalorder %s31, 0
      %p77 = por %p75, %p76
      %p78 = scmp.ne.s32.totalorder %s67, %s70
      %p79 = scmp.eq.s32.totalorder %s36, 1
      %p80 = por %p78, %p79
      %p81 = scmp.ne.s32.totalorder %s70, %s71
      %p82 = scmp.eq.s32.totalorder %s36, 0
      %p83 = por %p81, %p82
      %p84 = scmp.ne.s32.totalorder %s70, %s71
      %p85 = scmp.eq.s32.totalorder %s37, 1
      %p86 = por %p84, %p85
      %p88 = scmp.ne.s32.totalorder %s71, %s87
      %p89 = scmp.eq.s32.totalorder %s37, 0
      %p90 = por %p88, %p89
      %s92 = sadd.s32 %s91, 1
      %p95 = scmp.eq.s32.totalorder %s31, 1
      %p96 = scmp.ne.s32.totalorder %s91, %s93
      %p97 = scmp.eq.s32.totalorder %s31, 0
      %p98 = por %p96, %p97
      %p99 = scmp.ne.s32.totalorder %s91, %s93
      %p100 = scmp.eq.s32.totalorder %s36, 1
      %p101 = por %p99, %p100
      %p102 = scmp.ne.s32.totalorder %s93, %s94
      %p103 = scmp.eq.s32.totalorder %s36, 0
      %p104 = por %p102, %p103
      %p105 = scmp.ne.s32.totalorder %s93, %s94
      %p106 = scmp.eq.s32.totalorder %s37, 1
      %p107 = por %p105, %p106
      %p109 = scmp.ne.s32.totalorder %s94, %s108
      %p110 = scmp.eq.s32.totalorder %s37, 0
      %p111 = por %p109, %p110
      %s113 = sadd.s32 %s112, 1
      %p116 = scmp.eq.s32.totalorder %s31, 1
      %p117 = scmp.ne.s32.totalorder %s112, %s114
      %p118 = scmp.eq.s32.totalorder %s31, 0
      %p119 = por %p117, %p118
      %p120 = scmp.ne.s32.totalorder %s112, %s114
      %p121 = scmp.eq.s32.totalorder %s36, 1
      %p122 = por %p120, %p121
      %p123 = scmp.ne.s32.totalorder %s114, %s115
      %p124 = scmp.eq.s32.totalorder %s36, 0
      %p125 = por %p123, %p124
      %p126 = scmp.ne.s32.totalorder %s114, %s115
      %p127 = scmp.eq.s32.totalorder %s37, 1
      %p128 = por %p126, %p127
      %p130 = scmp.ne.s32.totalorder %s115, %s129
      %p131 = scmp.eq.s32.totalorder %s37, 0
      %p132 = por %p130, %p131
      %s134 = sadd.s32 %s133, 1
      %p137 = scmp.eq.s32.totalorder %s31, 1
      %p138 = scmp.ne.s32.totalorder %s133, %s135
      %p139 = scmp.eq.s32.totalorder %s31, 0
      %p140 = por %p138, %p139
      %p141 = scmp.ne.s32.totalorder %s133, %s135
      %p142 = scmp.eq.s32.totalorder %s36, 1
      %p143 = por %p141, %p142
      %p144 = scmp.ne.s32.totalorder %s135, %s136
      %p145 = scmp.eq.s32.totalorder %s36, 0
      %p146 = por %p144, %p145
      %p147 = scmp.ne.s32.totalorder %s135, %s136
      %p148 = scmp.eq.s32.totalorder %s37, 1
      %p149 = por %p147, %p148
      %p151 = scmp.ne.s32.totalorder %s136, %s150
      %p152 = scmp.eq.s32.totalorder %s37, 0
      %p153 = por %p151, %p152
      %s155 = sadd.s32 %s154, 1
      %p158 = scmp.eq.s32.totalorder %s31, 1
      %p159 = scmp.ne.s32.totalorder %s154, %s156
      %p160 = scmp.eq.s32.totalorder %s31, 0
      %p161 = por %p159, %p160
      %p162 = scmp.ne.s32.totalorder %s154, %s156
      %p163 = scmp.eq.s32.totalorder %s36, 1
      %p164 = por %p162, %p163
      %p165 = scmp.ne.s32.totalorder %s156, %s157
      %p166 = scmp.eq.s32.totalorder %s36, 0
      %p167 = por %p165, %p166
      %p168 = scmp.ne.s32.totalorder %s156, %s157
      %p169 = scmp.eq.s32.totalorder %s37, 1
      %p170 = por %p168, %p169
      %p172 = scmp.ne.s32.totalorder %s157, %s171
      %p173 = scmp.eq.s32.totalorder %s37, 0
      %p174 = por %p172, %p173
      %s176 = sadd.s32 %s175, 1
      %p179 = scmp.eq.s32.totalorder %s31, 1
      %p180 = scmp.ne.s32.totalorder %s175, %s177
      %p181 = scmp.eq.s32.totalorder %s31, 0
      %p182 = por %p180, %p181
      %p183 = scmp.ne.s32.totalorder %s175, %s177
      %p184 = scmp.eq.s32.totalorder %s36, 1
      %p185 = por %p183, %p184
      %p186 = scmp.ne.s32.totalorder %s177, %s178
      %p187 = scmp.eq.s32.totalorder %s36, 0
      %p188 = por %p186, %p187
      %p189 = scmp.ne.s32.totalorder %s177, %s178
      %p190 = scmp.eq.s32.totalorder %s37, 1
      %p191 = por %p189, %p190
      %p193 = scmp.ne.s32.totalorder %s178, %s192
      %p194 = scmp.eq.s32.totalorder %s37, 0
      %p195 = por %p193, %p194
      %s197 = sadd.s32 %s196, 1
      %p200 = scmp.eq.s32.totalorder %s31, 1
      %p201 = scmp.ne.s32.totalorder %s196, %s198
      %p202 = scmp.eq.s32.totalorder %s31, 0
      %p203 = por %p201, %p202
      %p204 = scmp.ne.s32.totalorder %s196, %s198
      %p205 = scmp.eq.s32.totalorder %s36, 1
      %p206 = por %p204, %p205
      %p207 = scmp.ne.s32.totalorder %s198, %s199
      %p208 = scmp.eq.s32.totalorder %s36, 0
      %p209 = por %p207, %p208
      %p210 = scmp.ne.s32.totalorder %s198, %s199
      %p211 = scmp.eq.s32.totalorder %s37, 1
      %p212 = por %p210, %p211
      %p214 = scmp.ne.s32.totalorder %s199, %s213
      %p215 = scmp.eq.s32.totalorder %s37, 0
      %p216 = por %p214, %p215
      %s218 = sadd.s32 %s217, 1
      %p221 = scmp.eq.s32.totalorder %s31, 1
      %p222 = scmp.ne.s32.totalorder %s217, %s219
      %p223 = scmp.eq.s32.totalorder %s31, 0
      %p224 = por %p222, %p223
      %p225 = scmp.ne.s32.totalorder %s217, %s219
      %p226 = scmp.eq.s32.totalorder %s36, 1
      %p227 = por %p225, %p226
      %p228 = scmp.ne.s32.totalorder %s219, %s220
      %p229 = scmp.eq.s32.totalorder %s36, 0
      %p230 = por %p228, %p229
      %p231 = scmp.ne.s32.totalorder %s219, %s220
      %p232 = scmp.eq.s32.totalorder %s37, 1
      %p233 = por %p231, %p232
      %p235 = scmp.ne.s32.totalorder %s220, %s234
      %p236 = scmp.eq.s32.totalorder %s37, 0
      %p237 = por %p235, %p236
      %s239 = sadd.s32 %s238, 1
      %p242 = scmp.eq.s32.totalorder %s31, 1
      %p243 = scmp.ne.s32.totalorder %s238, %s240
      %p244 = scmp.eq.s32.totalorder %s31, 0
      %p245 = por %p243, %p244
      %p246 = scmp.ne.s32.totalorder %s238, %s240
      %p247 = scmp.eq.s32.totalorder %s36, 1
      %p248 = por %p246, %p247
      %p249 = scmp.ne.s32.totalorder %s240, %s241
      %p250 = scmp.eq.s32.totalorder %s36, 0
      %p251 = por %p249, %p250
      %p252 = scmp.ne.s32.totalorder %s240, %s241
      %p253 = scmp.eq.s32.totalorder %s37, 1
      %p254 = por %p252, %p253
      %p256 = scmp.ne.s32.totalorder %s241, %s255
      %p257 = scmp.eq.s32.totalorder %s37, 0
      %p258 = por %p256, %p257
      %s260 = sadd.s32 %s259, 1
      %p263 = scmp.eq.s32.totalorder %s31, 1
      %p264 = scmp.ne.s32.totalorder %s259, %s261
      %p265 = scmp.eq.s32.totalorder %s31, 0
      %p266 = por %p264, %p265
      %p267 = scmp.ne.s32.totalorder %s259, %s261
      %p268 = scmp.eq.s32.totalorder %s36, 1
      %p269 = por %p267, %p268
      %p270 = scmp.ne.s32.totalorder %s261, %s262
      %p271 = scmp.eq.s32.totalorder %s36, 0
      %p272 = por %p270, %p271
      %p273 = scmp.ne.s32.totalorder %s261, %s262
      %p274 = scmp.eq.s32.totalorder %s37, 1
      %p275 = por %p273, %p274
      %p277 = scmp.ne.s32.totalorder %s262, %s276
      %p278 = scmp.eq.s32.totalorder %s37, 0
      %p279 = por %p277, %p278
      %s281 = sadd.s32 %s280, 1
      %p284 = scmp.eq.s32.totalorder %s31, 1
      %p285 = scmp.ne.s32.totalorder %s280, %s282
      %p286 = scmp.eq.s32.totalorder %s31, 0
      %p287 = por %p285, %p286
      %p288 = scmp.ne.s32.totalorder %s280, %s282
      %p289 = scmp.eq.s32.totalorder %s36, 1
      %p290 = por %p288, %p289
      %p291 = scmp.ne.s32.totalorder %s282, %s283
      %p292 = scmp.eq.s32.totalorder %s36, 0
      %p293 = por %p291, %p292
      %p294 = scmp.ne.s32.totalorder %s282, %s283
      %p295 = scmp.eq.s32.totalorder %s37, 1
      %p296 = por %p294, %p295
      %p298 = scmp.ne.s32.totalorder %s283, %s297
      %p299 = scmp.eq.s32.totalorder %s37, 0
      %p300 = por %p298, %p299
      %s302 = sadd.s32 %s301, 1
      %p305 = scmp.eq.s32.totalorder %s31, 1
      %p306 = scmp.ne.s32.totalorder %s301, %s303
      %p307 = scmp.eq.s32.totalorder %s31, 0
      %p308 = por %p306, %p307
      %p309 = scmp.ne.s32.totalorder %s301, %s303
      %p310 = scmp.eq.s32.totalorder %s36, 1
      %p311 = por %p309, %p310
      %p312 = scmp.ne.s32.totalorder %s303, %s304
      %p313 = scmp.eq.s32.totalorder %s36, 0
      %p314 = por %p312, %p313
      %p315 = scmp.ne.s32.totalorder %s303, %s304
      %p316 = scmp.eq.s32.totalorder %s37, 1
      %p317 = por %p315, %p316
      %p319 = scmp.ne.s32.totalorder %s304, %s318
      %p320 = scmp.eq.s32.totalorder %s37, 0
      %p321 = por %p319, %p320
      %s323 = sadd.s32 %s322, 1
      %p326 = scmp.eq.s32.totalorder %s31, 1
      %p327 = scmp.ne.s32.totalorder %s322, %s324
      %p328 = scmp.eq.s32.totalorder %s31, 0
      %p329 = por %p327, %p328
      %p330 = scmp.ne.s32.totalorder %s322, %s324
      %p331 = scmp.eq.s32.totalorder %s36, 1
      %p332 = por %p330, %p331
      %p333 = scmp.ne.s32.totalorder %s324, %s325
      %p334 = scmp.eq.s32.totalorder %s36, 0
      %p335 = por %p333, %p334
      %p336 = scmp.ne.s32.totalorder %s324, %s325
      %p337 = scmp.eq.s32.totalorder %s37, 1
      %p338 = por %p336, %p337
      %p340 = scmp.ne.s32.totalorder %s325, %s339
      %p341 = scmp.eq.s32.totalorder %s37, 0
      %p342 = por %p340, %p341
      %s344 = sadd.s32 %s343, 1
      %p347 = scmp.eq.s32.totalorder %s31, 1
      %p348 = scmp.ne.s32.totalorder %s343, %s345
      %p349 = scmp.eq.s32.totalorder %s31, 0
      %p350 = por %p348, %p349
      %p351 = scmp.ne.s32.totalorder %s343, %s345
      %p352 = scmp.eq.s32.totalorder %s36, 1
      %p353 = por %p351, %p352
      %p354 = scmp.ne.s32.totalorder %s345, %s346
      %p355 = scmp.eq.s32.totalorder %s36, 0
      %p356 = por %p354, %p355
      %p357 = scmp.ne.s32.totalorder %s345, %s346
      %p358 = scmp.eq.s32.totalorder %s37, 1
      %p359 = por %p357, %p358
      %p361 = scmp.ne.s32.totalorder %s346, %s360
      %p362 = scmp.eq.s32.totalorder %s37, 0
      %p363 = por %p361, %p362
      %s364 = ssub.s32 %s31, %s38
      %p365 = scmp.eq.s32.totalorder %s364, 0
      %s367 = sadd.s32 %s366, 1
      %s368 = scalar_select %p365, %s366, %s367
      %p371 = pneg %p365
      %p372 = scmp.eq.s32.totalorder %s31, 1
      %p373 = por %p371, %p372
      %p374 = scmp.ne.s32.totalorder %s366, %s369
      %p375 = scmp.eq.s32.totalorder %s31, 0
      %p376 = por %p374, %p375
      %p377 = scmp.ne.s32.totalorder %s366, %s369
      %p378 = scmp.eq.s32.totalorder %s36, 1
      %p379 = por %p377, %p378
      %p380 = scmp.ne.s32.totalorder %s369, %s370
      %p381 = scmp.eq.s32.totalorder %s36, 0
      %p382 = por %p380, %p381
      %p383 = scmp.ne.s32.totalorder %s369, %s370
      %p384 = scmp.eq.s32.totalorder %s37, 1
      %p385 = por %p383, %p384
      %p387 = scmp.ne.s32.totalorder %s370, %s386
      %p388 = scmp.eq.s32.totalorder %s37, 0
      %p389 = por %p387, %p388
      %p390 = scmp.le.s32.totalorder 1, %s31
      %p391 = scmp.lt.s32.totalorder %s31, 3
      %p392 = pnand %p390, %p391
      %p393 = pneg %p392
      // Predicated region
      $region9: #{tpu_custom_call.1} parent=5 // pred_check
        _
      $region10: #{tpu_custom_call.1} parent=5 // pred_check_branch
        %395 = sbr.rel (%p392) target = $region12
      $region11: #{tpu_custom_call.1} parent=5 // pred_region
        %s396 = ssub.s32 %s31, 1
        // Predicated region
        $region13: #{tpu_custom_call.1} parent=11 // pred_check
          %p397 = pneg %p104
        $region14: #{tpu_custom_call.1} parent=11 // pred_check_branch
          %399 = sbr.rel (%p397) target = $region16
        $region15: #{tpu_custom_call.1} parent=11 // pred_region
          %s401 = ssub.s32 512, 512
          %402 = vsyncadd [#allocation6], %s401
          %s403 = sshll.u32 [#allocation5], 4
          %s404 = int_to_ptr.vmem [resolvable:$true] %s403
          %409 = dma.hbm_to_vmem [thread:$0]  %s2, 512, %s404, [#allocation6], 256, 256, 16
        $region16: #{tpu_custom_call.1} parent=11 // pred_fallthru
          _
        // Predicated region
        $region17: #{tpu_custom_call.1} parent=11 // pred_check
          %p410 = pneg %p125
        $region18: #{tpu_custom_call.1} parent=11 // pred_check_branch
          %412 = sbr.rel (%p410) target = $region20
        $region19: #{tpu_custom_call.1} parent=11 // pred_region
          %s414 = ssub.s32 32, 32
          %415 = vsyncadd [#allocation6], %s414
          %s417 = sshll.u32 [#allocation7], 4
          %s418 = int_to_ptr.vmem [resolvable:$true] %s417
          %420 = dma.hbm_to_vmem [thread:$0]  %s3, 32, %s418, [#allocation6]
        $region20: #{tpu_custom_call.1} parent=11 // pred_fallthru
          _
        // Predicated region
        $region21: #{tpu_custom_call.1} parent=11 // pred_check
          %p421 = pneg %p146
        $region22: #{tpu_custom_call.1} parent=11 // pred_check_branch
          %423 = sbr.rel (%p421) target = $region24
        $region23: #{tpu_custom_call.1} parent=11 // pred_region
          _
        $region24: #{tpu_custom_call.1} parent=11 // pred_fallthru
          _
        // Predicated region
        $region25: #{tpu_custom_call.1} parent=11 // pred_check
          %p424 = pneg %p167
        $region26: #{tpu_custom_call.1} parent=11 // pred_check_branch
          %426 = sbr.rel (%p424) target = $region28
        $region27: #{tpu_custom_call.1} parent=11 // pred_region
          %s428 = ssub.s32 16, 16
          %429 = vsyncadd [#allocation9], %s428
          %s431 = sshll.u32 [#allocation8], 4
          %s432 = int_to_ptr.vmem [resolvable:$true] %s431
          %434 = dma.hbm_to_vmem [thread:$0]  %s5, 16, %s432, [#allocation9]
        $region28: #{tpu_custom_call.1} parent=11 // pred_fallthru
          _
        // Predicated region
        $region29: #{tpu_custom_call.1} parent=11 // pred_check
          %p435 = pneg %p188
        $region30: #{tpu_custom_call.1} parent=11 // pred_check_branch
          %437 = sbr.rel (%p435) target = $region32
        $region31: #{tpu_custom_call.1} parent=11 // pred_region
          _
        $region32: #{tpu_custom_call.1} parent=11 // pred_fallthru
          _
        // Predicated region
        $region33: #{tpu_custom_call.1} parent=11 // pred_check
          %p438 = pneg %p209
        $region34: #{tpu_custom_call.1} parent=11 // pred_check_branch
          %440 = sbr.rel (%p438) target = $region36
        $region35: #{tpu_custom_call.1} parent=11 // pred_region
          %s442 = ssub.s32 16, 16
          %443 = vsyncadd [#allocation9], %s442
          %s445 = sshll.u32 [#allocation10], 4
          %s446 = int_to_ptr.vmem [resolvable:$true] %s445
          %448 = dma.hbm_to_vmem [thread:$0]  %s7, 16, %s446, [#allocation9]
        $region36: #{tpu_custom_call.1} parent=11 // pred_fallthru
          _
        // Predicated region
        $region37: #{tpu_custom_call.1} parent=11 // pred_check
          %p449 = pneg %p230
        $region38: #{tpu_custom_call.1} parent=11 // pred_check_branch
          %451 = sbr.rel (%p449) target = $region40
        $region39: #{tpu_custom_call.1} parent=11 // pred_region
          %s453 = ssub.s32 16, 16
          %454 = vsyncadd [#allocation12], %s453
          %s456 = sshll.u32 [#allocation11], 4
          %s457 = int_to_ptr.vmem [resolvable:$true] %s456
          %459 = dma.hbm_to_vmem [thread:$0]  %s8, 16, %s457, [#allocation12]
        $region40: #{tpu_custom_call.1} parent=11 // pred_fallthru
          _
        // Predicated region
        $region41: #{tpu_custom_call.1} parent=11 // pred_check
          %p460 = pneg %p251
        $region42: #{tpu_custom_call.1} parent=11 // pred_check_branch
          %462 = sbr.rel (%p460) target = $region44
        $region43: #{tpu_custom_call.1} parent=11 // pred_region
          %s464 = ssub.s32 16, 16
          %465 = vsyncadd [#allocation12], %s464
          %s467 = sshll.u32 [#allocation13], 4
          %s468 = int_to_ptr.vmem [resolvable:$true] %s467
          %470 = dma.hbm_to_vmem [thread:$0]  %s9, 16, %s468, [#allocation12]
        $region44: #{tpu_custom_call.1} parent=11 // pred_fallthru
          _
        // Predicated region
        $region45: #{tpu_custom_call.1} parent=11 // pred_check
          %p471 = pneg %p272
        $region46: #{tpu_custom_call.1} parent=11 // pred_check_branch
          %473 = sbr.rel (%p471) target = $region48
        $region47: #{tpu_custom_call.1} parent=11 // pred_region
          _
        $region48: #{tpu_custom_call.1} parent=11 // pred_fallthru
          _
        // Predicated region
        $region49: #{tpu_custom_call.1} parent=11 // pred_check
          %p474 = pneg %p293
        $region50: #{tpu_custom_call.1} parent=11 // pred_check_branch
          %476 = sbr.rel (%p474) target = $region52
        $region51: #{tpu_custom_call.1} parent=11 // pred_region
          %s478 = ssub.s32 32, 32
          %479 = vsyncadd [#allocation15], %s478
          %s481 = sshll.u32 [#allocation14], 4
          %s482 = int_to_ptr.vmem [resolvable:$true] %s481
          %484 = dma.hbm_to_vmem [thread:$0]  %s11, 32, %s482, [#allocation15]
        $region52: #{tpu_custom_call.1} parent=11 // pred_fallthru
          _
        // Predicated region
        $region53: #{tpu_custom_call.1} parent=11 // pred_check
          %p485 = pneg %p314
        $region54: #{tpu_custom_call.1} parent=11 // pred_check_branch
          %487 = sbr.rel (%p485) target = $region56
        $region55: #{tpu_custom_call.1} parent=11 // pred_region
          %s489 = ssub.s32 2048, 2048
          %490 = vsyncadd [#allocation15], %s489
          %s491 = sshll.u32 [#allocation16], 4
          %s492 = int_to_ptr.vmem [resolvable:$true] %s491
          %497 = dma.hbm_to_vmem [thread:$0]  %s12, 2048, %s492, [#allocation15], 128, 128, 8
        $region56: #{tpu_custom_call.1} parent=11 // pred_fallthru
          _
        // Predicated region
        $region57: #{tpu_custom_call.1} parent=11 // pred_check
          %p498 = pneg %p335
        $region58: #{tpu_custom_call.1} parent=11 // pred_check_branch
          %500 = sbr.rel (%p498) target = $region60
        $region59: #{tpu_custom_call.1} parent=11 // pred_region
          _
        $region60: #{tpu_custom_call.1} parent=11 // pred_fallthru
          _
        // Predicated region
        $region61: #{tpu_custom_call.1} parent=11 // pred_check
          %p501 = pneg %p356
        $region62: #{tpu_custom_call.1} parent=11 // pred_check_branch
          %503 = sbr.rel (%p501) target = $region64
        $region63: #{tpu_custom_call.1} parent=11 // pred_region
          _
        $region64: #{tpu_custom_call.1} parent=11 // pred_fallthru
          _
      $region12: #{tpu_custom_call.1} parent=5 // pred_fallthru
        _
      %p504 = scmp.lt.s32.totalorder %s31, 2
      // Predicated region
      $region65: #{tpu_custom_call.1} parent=5 // pred_check
        %p505 = pneg %p504
      $region66: #{tpu_custom_call.1} parent=5 // pred_check_branch
        %507 = sbr.rel (%p505) target = $region68
      $region67: #{tpu_custom_call.1} parent=5 // pred_region
        // Predicated region
        $region69: #{tpu_custom_call.1} parent=67 // pred_check
          %p508 = pneg %p51
        $region70: #{tpu_custom_call.1} parent=67 // pred_check_branch
          %510 = sbr.rel (%p508) target = $region72
        $region71: #{tpu_custom_call.1} parent=67 // pred_region
          %s511 = smul.u32 16, %s31
          %p512 = scmp.lt.s32.totalorder %s511, 31
          %s513 = scalar_select %p512, %s511, 31
          %s514 = smul.addr %s513, 8
          %s515 = scalar_lea.vmem %s0, %s514
          %s516 = smul.u32 16, %s31
        $region72: #{tpu_custom_call.1} parent=67 // pred_fallthru
          _
        // Predicated region
        $region73: #{tpu_custom_call.1} parent=67 // pred_check
          %p517 = pneg %p77
        $region74: #{tpu_custom_call.1} parent=67 // pred_check_branch
          %519 = sbr.rel (%p517) target = $region76
        $region75: #{tpu_custom_call.1} parent=67 // pred_region
          %s520 = sand.u32 %s67, 1
          %s521 = scalar_lea.sflag [#allocation3], %s520
          %s522 = sand.u32 %s67, 1
          %s523 = smul.addr %s522, 8
          %s524 = scalar_lea.vmem [#allocation2], %s523
          %s526 = ssub.s32 128, 128
          %527 = vsyncadd %s521, %s526
          %s528 = smul.addr %s31, 128
          %s529 = scalar_lea.hbm %s1, %s528
          %s531 = sshll.u32 %s524, 4
          %s532 = int_to_ptr.vmem [resolvable:$true] %s531
          %534 = dma.hbm_to_vmem [thread:$0]  %s529, 128, %s532, %s521
        $region76: #{tpu_custom_call.1} parent=67 // pred_fallthru
          _
      $region68: #{tpu_custom_call.1} parent=5 // pred_fallthru
        _
      %p535 = scmp.le.s32.totalorder 1, %s31
      %p536 = scmp.lt.s32.totalorder %s31, 3
      %p537 = pnand %p535, %p536
      %p538 = pneg %p537
      // Predicated region
      $region77: #{tpu_custom_call.1} parent=5 // pred_check
        _
      $region78: #{tpu_custom_call.1} parent=5 // pred_check_branch
        %540 = sbr.rel (%p537) target = $region80
      $region79: #{tpu_custom_call.1} parent=5 // pred_region
        %s541 = ssub.s32 %s31, 1
        %s542 = sand.u32 %s70, 1
        %s543 = scalar_lea.sflag [#allocation3], %s542
        %s544 = sand.u32 %s70, 1
        %s545 = smul.addr %s544, 8
        %s546 = scalar_lea.vmem [#allocation2], %s545
        // Predicated region
        $region81: #{tpu_custom_call.1} parent=79 // pred_check
          %p547 = pneg %p83
        $region82: #{tpu_custom_call.1} parent=79 // pred_check_branch
          %549 = sbr.rel (%p547) target = $region84
        $region83: #{tpu_custom_call.1} parent=79 // pred_region
          %550 = dma.done %s543, 128
        $region84: #{tpu_custom_call.1} parent=79 // pred_fallthru
          _
        // Predicated region
        $region85: #{tpu_custom_call.1} parent=79 // pred_check
          %p551 = pneg %p104
        $region86: #{tpu_custom_call.1} parent=79 // pred_check_branch
          %553 = sbr.rel (%p551) target = $region88
        $region87: #{tpu_custom_call.1} parent=79 // pred_region
          %554 = dma.done [#allocation6], 512
        $region88: #{tpu_custom_call.1} parent=79 // pred_fallthru
          _
        // Predicated region
        $region89: #{tpu_custom_call.1} parent=79 // pred_check
          %p555 = pneg %p125
        $region90: #{tpu_custom_call.1} parent=79 // pred_check_branch
          %557 = sbr.rel (%p555) target = $region92
        $region91: #{tpu_custom_call.1} parent=79 // pred_region
          %558 = dma.done [#allocation6], 32
        $region92: #{tpu_custom_call.1} parent=79 // pred_fallthru
          _
        // Predicated region
        $region93: #{tpu_custom_call.1} parent=79 // pred_check
          %p559 = pneg %p167
        $region94: #{tpu_custom_call.1} parent=79 // pred_check_branch
          %561 = sbr.rel (%p559) target = $region96
        $region95: #{tpu_custom_call.1} parent=79 // pred_region
          %562 = dma.done [#allocation9], 16
        $region96: #{tpu_custom_call.1} parent=79 // pred_fallthru
          _
        // Predicated region
        $region97: #{tpu_custom_call.1} parent=79 // pred_check
          %p563 = pneg %p209
        $region98: #{tpu_custom_call.1} parent=79 // pred_check_branch
          %565 = sbr.rel (%p563) target = $region100
        $region99: #{tpu_custom_call.1} parent=79 // pred_region
          %566 = dma.done [#allocation9], 16
        $region100: #{tpu_custom_call.1} parent=79 // pred_fallthru
          _
        // Predicated region
        $region101: #{tpu_custom_call.1} parent=79 // pred_check
          %p567 = pneg %p230
        $region102: #{tpu_custom_call.1} parent=79 // pred_check_branch
          %569 = sbr.rel (%p567) target = $region104
        $region103: #{tpu_custom_call.1} parent=79 // pred_region
          %570 = dma.done [#allocation12], 16
        $region104: #{tpu_custom_call.1} parent=79 // pred_fallthru
          _
        // Predicated region
        $region105: #{tpu_custom_call.1} parent=79 // pred_check
          %p571 = pneg %p251
        $region106: #{tpu_custom_call.1} parent=79 // pred_check_branch
          %573 = sbr.rel (%p571) target = $region108
        $region107: #{tpu_custom_call.1} parent=79 // pred_region
          %574 = dma.done [#allocation12], 16
        $region108: #{tpu_custom_call.1} parent=79 // pred_fallthru
          _
        // Predicated region
        $region109: #{tpu_custom_call.1} parent=79 // pred_check
          %p575 = pneg %p293
        $region110: #{tpu_custom_call.1} parent=79 // pred_check_branch
          %577 = sbr.rel (%p575) target = $region112
        $region111: #{tpu_custom_call.1} parent=79 // pred_region
          %578 = dma.done [#allocation15], 32
        $region112: #{tpu_custom_call.1} parent=79 // pred_fallthru
          _
        // Predicated region
        $region113: #{tpu_custom_call.1} parent=79 // pred_check
          %p579 = pneg %p314
        $region114: #{tpu_custom_call.1} parent=79 // pred_check_branch
          %581 = sbr.rel (%p579) target = $region116
        $region115: #{tpu_custom_call.1} parent=79 // pred_region
          %582 = dma.done [#allocation15], 2048
        $region116: #{tpu_custom_call.1} parent=79 // pred_fallthru
          _
        %s583 = smul.u32 16, %s36
        %p584 = scmp.lt.s32.totalorder %s583, 31
        %s585 = scalar_select %p584, %s583, 31
        %s586 = smul.addr %s585, 8
        %s587 = scalar_lea.vmem %s0, %s586
        %p588 = pneg %p57
        %p589 = pneg %p54
        %s590 = sand.u32 %s70, 1
        %s591 = scalar_lea.sflag [#allocation3], %s590
        %s592 = sand.u32 %s70, 1
        %s593 = smul.addr %s592, 8
        %s594 = scalar_lea.vmem [#allocation2], %s593
        %p595 = pneg %p83
        %p596 = pneg %p80
        %p597 = pneg %p104
        %p598 = pneg %p101
        %p599 = pneg %p125
        %p600 = pneg %p122
        %p601 = pneg %p146
        %p602 = pneg %p143
        %p603 = pneg %p167
        %p604 = pneg %p164
        %p605 = pneg %p188
        %p606 = pneg %p185
        %p607 = pneg %p209
        %p608 = pneg %p206
        %p609 = pneg %p230
        %p610 = pneg %p227
        %p611 = pneg %p251
        %p612 = pneg %p248
        %p613 = pneg %p272
        %p614 = pneg %p269
        %p615 = pneg %p293
        %p616 = pneg %p290
        %p617 = pneg %p314
        %p618 = pneg %p311
        %p619 = pneg %p335
        %p620 = pneg %p332
        %p621 = pneg %p356
        %p622 = pneg %p353
        %p623 = pneg %p382
        %p624 = pneg %p379
        %s625 = sand.u32 %s369, 1
        %s626 = scalar_lea.sflag [#allocation4], %s625
        %s627 = sand.u32 %s369, 1
        %s628 = smul.addr %s627, 128
        %s629 = scalar_lea.vmem [#allocation17], %s628
        %s630 = smul.u32 16, %s36
        %p631 = scmp.lt.s32.totalorder %s630, 31
        %s632 = scalar_select %p631, %s630, 31
        %s633 = smul.addr %s632, 8
        %s634 = scalar_lea.vmem %s0, %s633
        %s635 = smul.u32 16, %s36
        %s636 = smul.u32 16, %s36
        %v637 = vld [vmem:[#allocation16] sm:$0xff]
        %v638 = vld [vmem:[#allocation16 + $0x8] sm:$0xff]
        %v639 = vld [vmem:[#allocation16 + $0x10] sm:$0xff]
        %v640 = vld [vmem:[#allocation16 + $0x18] sm:$0xff]
        %v641 = vld [vmem:[#allocation16 + $0x20] sm:$0xff]
        %v642 = vld [vmem:[#allocation16 + $0x28] sm:$0xff]
        %v643 = vld [vmem:[#allocation16 + $0x30] sm:$0xff]
        %v644 = vld [vmem:[#allocation16 + $0x38] sm:$0xff]
        %v645 = vld [vmem:[#allocation16 + $0x40] sm:$0xff]
        %v646 = vld [vmem:[#allocation16 + $0x48] sm:$0xff]
        %v647 = vld [vmem:[#allocation16 + $0x50] sm:$0xff]
        %v648 = vld [vmem:[#allocation16 + $0x58] sm:$0xff]
        %v649 = vld [vmem:[#allocation16 + $0x60] sm:$0xff]
        %v650 = vld [vmem:[#allocation16 + $0x68] sm:$0xff]
        %v651 = vld [vmem:[#allocation16 + $0x70] sm:$0xff]
        %v652 = vld [vmem:[#allocation16 + $0x78] sm:$0xff]
        %v653 = vld [vmem:[%s13] sm:$0xff]
        %v654 = vld [vmem:[%s14] sm:$0xff]
        %v655 = vld [vmem:[%s14 + $0x8] sm:$0xff]
        %v656 = vld [vmem:[%s14 + $0x10] sm:$0xff]
        %v657 = vld [vmem:[%s14 + $0x18] sm:$0xff]
        %v658 = vld [vmem:[%s14 + $0x20] sm:$0xff]
        %v659 = vld [vmem:[%s14 + $0x28] sm:$0xff]
        %v660 = vld [vmem:[%s14 + $0x30] sm:$0xff]
        %v661 = vld [vmem:[%s14 + $0x38] sm:$0xff]
        %v662 = vld [vmem:[%s14 + $0x40] sm:$0xff]
        %v663 = vld [vmem:[%s14 + $0x48] sm:$0xff]
        %v664 = vld [vmem:[%s14 + $0x50] sm:$0xff]
        %v665 = vld [vmem:[%s14 + $0x58] sm:$0xff]
        %v666 = vld [vmem:[%s14 + $0x60] sm:$0xff]
        %v667 = vld [vmem:[%s14 + $0x68] sm:$0xff]
        %v668 = vld [vmem:[%s14 + $0x70] sm:$0xff]
        %v669 = vld [vmem:[%s14 + $0x78] sm:$0xff]
        %v670 = vld [vmem:[%s634] sm:$0xff]
        %v671 = vld [vmem:[%s634 + $0x8] sm:$0xff]
        %v672 = vld [vmem:[%s634 + $0x10] sm:$0xff]
        %v673 = vld [vmem:[%s634 + $0x18] sm:$0xff]
        %v674 = vld [vmem:[%s634 + $0x20] sm:$0xff]
        %v675 = vld [vmem:[%s634 + $0x28] sm:$0xff]
        %v676 = vld [vmem:[%s634 + $0x30] sm:$0xff]
        %v677 = vld [vmem:[%s634 + $0x38] sm:$0xff]
        %v678 = vld [vmem:[%s634 + $0x40] sm:$0xff]
        %v679 = vld [vmem:[%s634 + $0x48] sm:$0xff]
        %v680 = vld [vmem:[%s634 + $0x50] sm:$0xff]
        %v681 = vld [vmem:[%s634 + $0x58] sm:$0xff]
        %v682 = vld [vmem:[%s634 + $0x60] sm:$0xff]
        %v683 = vld [vmem:[%s634 + $0x68] sm:$0xff]
        %v684 = vld [vmem:[%s634 + $0x70] sm:$0xff]
        %v685 = vld [vmem:[%s634 + $0x78] sm:$0xff]
        %v686 = vld [vmem:[#allocation5] sm:$0xff]
        %v687 = vld [vmem:[#allocation5 + $0x8] sm:$0xff]
        %v688 = vld [vmem:[#allocation5 + $0x10] sm:$0xf]
        %v689 = vld [vmem:[#allocation5 + $0x18] sm:$0xf]
        %v690 = vld [vmem:[#allocation7] sm:$0x3]
        %v692 = vlaneseq
        %v693 = vshrl.u32 %v692, 7
        %v694 = vsub.s32 0, %v693
        %v695 = vrot.slane %v690, %v694
        %v696 = vlaneseq
        %v697 = vshrl.u32 %v696, 7
        %v698 = vsub.s32 1, %v697
        %v699 = vrot.slane %v690, %v698
        %vm702 = vcmask 97280
        %v704 = vsel %vm702, %v670, 0
        %v707 = vsel %vm702, %v671, 0
        %v710 = vsel %vm702, %v672, 0
        %v713 = vsel %vm702, %v673, 0
        %v716 = vsel %vm702, %v674, 0
        %v719 = vsel %vm702, %v675, 0
        %v722 = vsel %vm702, %v676, 0
        %v725 = vsel %vm702, %v677, 0
        %v728 = vsel %vm702, %v678, 0
        %v731 = vsel %vm702, %v679, 0
        %v734 = vsel %vm702, %v680, 0
        %v737 = vsel %vm702, %v681, 0
        %v740 = vsel %vm702, %v682, 0
        %v743 = vsel %vm702, %v683, 0
        %v746 = vsel %vm702, %v684, 0
        %v749 = vsel %vm702, %v685, 0
        %vm751 = vcmask 1043456
        %v753 = vsel %vm751, %v688, 0
        %v756 = vsel %vm751, %v689, 0
        %758 = vmatprep.subr.mxu0 %v687
        %759 = vmatpush1.msra.mxu0 %v686
        %760 = vmatprep.subr.mxu0 %v756
        %761 = vmatpush1.msra.mxu0 %v753
        %762 = vmatprep.subr.mxu0 0.0
        %763 = vmatpush1.msra.mxu0 0.0
        %764 = vmatprep.subr.mxu0 0.0
        %765 = vmatpush1.msra.mxu0 0.0
        %766 = vmatprep.subr.mxu0 0.0
        %767 = vmatpush1.msra.mxu0 0.0
        %768 = vmatprep.subr.mxu0 0.0
        %769 = vmatpush1.msra.mxu0 0.0
        %770 = vmatprep.subr.mxu0 0.0
        %771 = vmatpush1.msra.mxu0 0.0
        %772 = vmatprep.subr.mxu0 0.0
        %773 = vmatpush1.msra.mxu0 0.0
        %774 = vmatprep.subr.mxu0 0.0
        %775 = vmatpush1.msra.mxu0 0.0
        %776 = vmatprep.subr.mxu0 0.0
        %777 = vmatpush1.msra.mxu0 0.0
        %778 = vmatprep.subr.mxu0 0.0
        %779 = vmatpush1.msra.mxu0 0.0
        %780 = vmatprep.subr.mxu0 0.0
        %781 = vmatpush1.msra.mxu0 0.0
        %782 = vmatprep.subr.mxu0 0.0
        %783 = vmatpush1.msra.mxu0 0.0
        %784 = vmatprep.subr.mxu0 0.0
        %785 = vmatpush1.msra.mxu0 0.0
        %786 = vmatprep.subr.mxu0 0.0
        %787 = vmatpush1.msra.mxu0 0.0
        %788 = vmatprep.subr.mxu0 0.0
        %789 = vmatpush1.msra.mxu0 0.0
        %790 = vmatprep.subr.mxu0 0.0
        %791 = vmatpush1.msra.mxu0 0.0
        %792 = vmatprep.subr.mxu0 0.0
        %793 = vmatpush1.msra.mxu0 0.0
        %794 = vmatprep.subr.mxu0 0.0
        %795 = vmatpush1.msra.mxu0 0.0
        %796 = vmatprep.subr.mxu0 0.0
        %797 = vmatpush1.msra.mxu0 0.0
        %798 = vmatprep.subr.mxu0 0.0
        %799 = vmatpush1.msra.mxu0 0.0
        %800 = vmatprep.subr.mxu0 0.0
        %801 = vmatpush1.msra.mxu0 0.0
        %802 = vmatprep.subr.mxu0 0.0
        %803 = vmatpush1.msra.mxu0 0.0
        %804 = vmatprep.subr.mxu0 0.0
        %805 = vmatpush1.msra.mxu0 0.0
        %806 = vmatprep.subr.mxu0 0.0
        %807 = vmatpush1.msra.mxu0 0.0
        %808 = vmatprep.subr.mxu0 0.0
        %809 = vmatpush1.msra.mxu0 0.0
        %810 = vmatprep.subr.mxu0 0.0
        %811 = vmatpush1.msra.mxu0 0.0
        %812 = vmatprep.subr.mxu0 0.0
        %813 = vmatpush1.msra.mxu0 0.0
        %814 = vmatprep.subr.mxu0 0.0
        %815 = vmatpush1.msra.mxu0 0.0
        %816 = vmatprep.subr.mxu0 0.0
        %817 = vmatpush1.msra.mxu0 0.0
        %818 = vmatprep.subr.mxu0 0.0
        %819 = vmatpush1.msra.mxu0 0.0
        %820 = vmatprep.subr.mxu0 0.0
        %821 = vmatpush1.msra.mxu0 0.0
        %822 = vmatprep.mubr.f32.mxu0 0.0
        %823 = vmatmul.mubr.f32.gmra.mrb[0].mxu0 %v704
        %v824 = vpop.f32.mrb[0].mxu0
        %v825 = vadd.f32 %v695, %v824
        %v826 = vpop.f32.mrb[0].mxu0
        %v827 = vadd.f32 %v699, %v826
        %828 = vmatprep.mubr.f32.mxu0 0.0
        %829 = vmatmul.mubr.f32.gmra.mrb[0].mxu0 %v707
        %v830 = vpop.f32.mrb[0].mxu0
        %v831 = vadd.f32 %v695, %v830
        %v832 = vpop.f32.mrb[0].mxu0
        %v833 = vadd.f32 %v699, %v832
        %834 = vmatprep.mubr.f32.mxu0 0.0
        %835 = vmatmul.mubr.f32.gmra.mrb[0].mxu0 %v710
        %v836 = vpop.f32.mrb[0].mxu0
        %v837 = vadd.f32 %v695, %v836
        %v838 = vpop.f32.mrb[0].mxu0
        %v839 = vadd.f32 %v699, %v838
        %840 = vmatprep.mubr.f32.mxu0 0.0
        %841 = vmatmul.mubr.f32.gmra.mrb[0].mxu0 %v713
        %v842 = vpop.f32.mrb[0].mxu0
        %v843 = vadd.f32 %v695, %v842
        %v844 = vpop.f32.mrb[0].mxu0
        %v845 = vadd.f32 %v699, %v844
        %846 = vmatprep.mubr.f32.mxu0 0.0
        %847 = vmatmul.mubr.f32.gmra.mrb[0].mxu0 %v716
        %v848 = vpop.f32.mrb[0].mxu0
        %v849 = vadd.f32 %v695, %v848
        %v850 = vpop.f32.mrb[0].mxu0
        %v851 = vadd.f32 %v699, %v850
        %852 = vmatprep.mubr.f32.mxu0 0.0
        %853 = vmatmul.mubr.f32.gmra.mrb[0].mxu0 %v719
        %v854 = vpop.f32.mrb[0].mxu0
        %v855 = vadd.f32 %v695, %v854
        %v856 = vpop.f32.mrb[0].mxu0
        %v857 = vadd.f32 %v699, %v856
        %858 = vmatprep.mubr.f32.mxu0 0.0
        %859 = vmatmul.mubr.f32.gmra.mrb[0].mxu0 %v722
        %v860 = vpop.f32.mrb[0].mxu0
        %v861 = vadd.f32 %v695, %v860
        %v862 = vpop.f32.mrb[0].mxu0
        %v863 = vadd.f32 %v699, %v862
        %864 = vmatprep.mubr.f32.mxu0 0.0
        %865 = vmatmul.mubr.f32.gmra.mrb[0].mxu0 %v725
        %v866 = vpop.f32.mrb[0].mxu0
        %v867 = vadd.f32 %v695, %v866
        %v868 = vpop.f32.mrb[0].mxu0
        %v869 = vadd.f32 %v699, %v868
        %870 = vmatprep.mubr.f32.mxu0 0.0
        %871 = vmatmul.mubr.f32.gmra.mrb[0].mxu0 %v728
        %v872 = vpop.f32.mrb[0].mxu0
        %v873 = vadd.f32 %v695, %v872
        %v874 = vpop.f32.mrb[0].mxu0
        %v875 = vadd.f32 %v699, %v874
        %876 = vmatprep.mubr.f32.mxu0 0.0
        %877 = vmatmul.mubr.f32.gmra.mrb[0].mxu0 %v731
        %v878 = vpop.f32.mrb[0].mxu0
        %v879 = vadd.f32 %v695, %v878
        %v880 = vpop.f32.mrb[0].mxu0
        %v881 = vadd.f32 %v699, %v880
        %882 = vmatprep.mubr.f32.mxu0 0.0
        %883 = vmatmul.mubr.f32.gmra.mrb[0].mxu0 %v734
        %v884 = vpop.f32.mrb[0].mxu0
        %v885 = vadd.f32 %v695, %v884
        %v886 = vpop.f32.mrb[0].mxu0
        %v887 = vadd.f32 %v699, %v886
        %888 = vmatprep.mubr.f32.mxu0 0.0
        %889 = vmatmul.mubr.f32.gmra.mrb[0].mxu0 %v737
        %v890 = vpop.f32.mrb[0].mxu0
        %v891 = vadd.f32 %v695, %v890
        %v892 = vpop.f32.mrb[0].mxu0
        %v893 = vadd.f32 %v699, %v892
        %894 = vmatprep.mubr.f32.mxu0 0.0
        %895 = vmatmul.mubr.f32.gmra.mrb[0].mxu0 %v740
        %v896 = vpop.f32.mrb[0].mxu0
        %v897 = vadd.f32 %v695, %v896
        %v898 = vpop.f32.mrb[0].mxu0
        %v899 = vadd.f32 %v699, %v898
        %900 = vmatprep.mubr.f32.mxu0 0.0
        %901 = vmatmul.mubr.f32.gmra.mrb[0].mxu0 %v743
        %v902 = vpop.f32.mrb[0].mxu0
        %v903 = vadd.f32 %v695, %v902
        %v904 = vpop.f32.mrb[0].mxu0
        %v905 = vadd.f32 %v699, %v904
        %906 = vmatprep.mubr.f32.mxu0 0.0
        %907 = vmatmul.mubr.f32.gmra.mrb[0].mxu0 %v746
        %v908 = vpop.f32.mrb[0].mxu0
        %v909 = vadd.f32 %v695, %v908
        %v910 = vpop.f32.mrb[0].mxu0
        %v911 = vadd.f32 %v699, %v910
        %912 = vmatprep.mubr.f32.mxu0 0.0
        %913 = vmatmul.mubr.f32.gmra.mrb[0].mxu0 %v749
        %v914 = vpop.f32.mrb[0].mxu0
        %v915 = vadd.f32 %v695, %v914
        %v916 = vpop.f32.mrb[0].mxu0
        %v917 = vadd.f32 %v699, %v916
        %918 = vdwg.mxu0
        %v919 = vld [vmem:[%s4] sm:$0x1]
        %v920 = vld [vmem:[#allocation8] sm:$0x1]
        %v921 = vmul.f32 %v825, %v825
        %v922 = vmul.f32 %v831, %v831
        %v923 = vmul.f32 %v837, %v837
        %v924 = vmul.f32 %v843, %v843
        %v925 = vmul.f32 %v849, %v849
        %v926 = vmul.f32 %v855, %v855
        %v927 = vmul.f32 %v861, %v861
        %v928 = vmul.f32 %v867, %v867
        %v929 = vmul.f32 %v873, %v873
        %v930 = vmul.f32 %v879, %v879
        %v931 = vmul.f32 %v885, %v885
        %v932 = vmul.f32 %v891, %v891
        %v933 = vmul.f32 %v897, %v897
        %v934 = vmul.f32 %v903, %v903
        %v935 = vmul.f32 %v909, %v909
        %v936 = vmul.f32 %v915, %v915
        %937 = vmatprep.subr.mxu0 %v921
        %938 = vmatpush1.msra.mxu0 %v825
        %939 = vmatprep.subr.mxu0 %v922
        %940 = vmatpush1.msra.mxu0 %v831
        %941 = vmatprep.subr.mxu0 %v923
        %942 = vmatpush1.msra.mxu0 %v837
        %943 = vmatprep.subr.mxu0 %v924
        %944 = vmatpush1.msra.mxu0 %v843
        %945 = vmatprep.subr.mxu0 %v925
        %946 = vmatpush1.msra.mxu0 %v849
        %947 = vmatprep.subr.mxu0 %v926
        %948 = vmatpush1.msra.mxu0 %v855
        %949 = vmatprep.subr.mxu0 %v927
        %950 = vmatpush1.msra.mxu0 %v861
        %951 = vmatprep.subr.mxu0 %v928
        %952 = vmatpush1.msra.mxu0 %v867
        %953 = vmatprep.subr.mxu0 %v929
        %954 = vmatpush1.msra.mxu0 %v873
        %955 = vmatprep.subr.mxu0 %v930
        %956 = vmatpush1.msra.mxu0 %v879
        %957 = vmatprep.subr.mxu0 %v931
        %958 = vmatpush1.msra.mxu0 %v885
        %959 = vmatprep.subr.mxu0 %v932
        %960 = vmatpush1.msra.mxu0 %v891
        %961 = vmatprep.subr.mxu0 %v933
        %962 = vmatpush1.msra.mxu0 %v897
        %963 = vmatprep.subr.mxu0 %v934
        %964 = vmatpush1.msra.mxu0 %v903
        %965 = vmatprep.subr.mxu0 %v935
        %966 = vmatpush1.msra.mxu0 %v909
        %967 = vmatprep.subr.mxu0 %v936
        %968 = vmatpush1.msra.mxu0 %v915
        %969 = vmatprep.subr.mxu0 0.0
        %970 = vmatpush1.msra.mxu0 0.0
        %971 = vmatprep.subr.mxu0 0.0
        %972 = vmatpush1.msra.mxu0 0.0
        %973 = vmatprep.subr.mxu0 0.0
        %974 = vmatpush1.msra.mxu0 0.0
        %975 = vmatprep.subr.mxu0 0.0
        %976 = vmatpush1.msra.mxu0 0.0
        %977 = vmatprep.subr.mxu0 0.0
        %978 = vmatpush1.msra.mxu0 0.0
        %979 = vmatprep.subr.mxu0 0.0
        %980 = vmatpush1.msra.mxu0 0.0
        %981 = vmatprep.subr.mxu0 0.0
        %982 = vmatpush1.msra.mxu0 0.0
        %983 = vmatprep.subr.mxu0 0.0
        %984 = vmatpush1.msra.mxu0 0.0
        %985 = vmatprep.subr.mxu0 0.0
        %986 = vmatpush1.msra.mxu0 0.0
        %987 = vmatprep.subr.mxu0 0.0
        %988 = vmatpush1.msra.mxu0 0.0
        %989 = vmatprep.subr.mxu0 0.0
        %990 = vmatpush1.msra.mxu0 0.0
        %991 = vmatprep.subr.mxu0 0.0
        %992 = vmatpush1.msra.mxu0 0.0
        %993 = vmatprep.subr.mxu0 0.0
        %994 = vmatpush1.msra.mxu0 0.0
        %995 = vmatprep.subr.mxu0 0.0
        %996 = vmatpush1.msra.mxu0 0.0
        %997 = vmatprep.subr.mxu0 0.0
        %998 = vmatpush1.msra.mxu0 0.0
        %999 = vmatprep.subr.mxu0 0.0
        %1000 = vmatpush1.msra.mxu0 0.0
        %1001 = vmatprep.mubr.f32.mxu0 0.0
        %1002 = vmatmul.mubr.f32.gmra.mrb[0].mxu0 %v653
        %v1003 = vpop.f32.mrb[0].mxu0
        %v1004 = vadd.f32 0.0, %v1003
        %v1005 = vpop.f32.mrb[0].mxu0
        %v1006 = vadd.f32 0.0, %v1005
        %1007 = vdwg.mxu0
        %1008 = vmatprep.subr.mxu0 0.0
        %1009 = vmatpush1.msra.mxu0 %v637
        %1010 = vmatprep.subr.mxu0 0.0
        %1011 = vmatpush1.msra.mxu0 %v638
        %1012 = vmatprep.subr.mxu0 0.0
        %1013 = vmatpush1.msra.mxu0 %v639
        %1014 = vmatprep.subr.mxu0 0.0
        %1015 = vmatpush1.msra.mxu0 %v640
        %1016 = vmatprep.subr.mxu0 0.0
        %1017 = vmatpush1.msra.mxu0 %v641
        %1018 = vmatprep.subr.mxu0 0.0
        %1019 = vmatpush1.msra.mxu0 %v642
        %1020 = vmatprep.subr.mxu0 0.0
        %1021 = vmatpush1.msra.mxu0 %v643
        %1022 = vmatprep.subr.mxu0 0.0
        %1023 = vmatpush1.msra.mxu0 %v644
        %1024 = vmatprep.subr.mxu0 0.0
        %1025 = vmatpush1.msra.mxu0 %v645
        %1026 = vmatprep.subr.mxu0 0.0
        %1027 = vmatpush1.msra.mxu0 %v646
        %1028 = vmatprep.subr.mxu0 0.0
        %1029 = vmatpush1.msra.mxu0 %v647
        %1030 = vmatprep.subr.mxu0 0.0
        %1031 = vmatpush1.msra.mxu0 %v648
        %1032 = vmatprep.subr.mxu0 0.0
        %1033 = vmatpush1.msra.mxu0 %v649
        %1034 = vmatprep.subr.mxu0 0.0
        %1035 = vmatpush1.msra.mxu0 %v650
        %1036 = vmatprep.subr.mxu0 0.0
        %1037 = vmatpush1.msra.mxu0 %v651
        %1038 = vmatprep.subr.mxu0 0.0
        %1039 = vmatpush1.msra.mxu0 %v652
        %1040 = vmatprep.subr.mxu0 0.0
        %1041 = vmatpush1.msra.mxu0 0.0
        %1042 = vmatprep.subr.mxu0 0.0
        %1043 = vmatpush1.msra.mxu0 0.0
        %1044 = vmatprep.subr.mxu0 0.0
        %1045 = vmatpush1.msra.mxu0 0.0
        %1046 = vmatprep.subr.mxu0 0.0
        %1047 = vmatpush1.msra.mxu0 0.0
        %1048 = vmatprep.subr.mxu0 0.0
        %1049 = vmatpush1.msra.mxu0 0.0
        %1050 = vmatprep.subr.mxu0 0.0
        %1051 = vmatpush1.msra.mxu0 0.0
        %1052 = vmatprep.subr.mxu0 0.0
        %1053 = vmatpush1.msra.mxu0 0.0
        %1054 = vmatprep.subr.mxu0 0.0
        %1055 = vmatpush1.msra.mxu0 0.0
        %1056 = vmatprep.subr.mxu0 0.0
        %1057 = vmatpush1.msra.mxu0 0.0
        %1058 = vmatprep.subr.mxu0 0.0
        %1059 = vmatpush1.msra.mxu0 0.0
        %1060 = vmatprep.subr.mxu0 0.0
        %1061 = vmatpush1.msra.mxu0 0.0
        %1062 = vmatprep.subr.mxu0 0.0
        %1063 = vmatpush1.msra.mxu0 0.0
        %1064 = vmatprep.subr.mxu0 0.0
        %1065 = vmatpush1.msra.mxu0 0.0
        %1066 = vmatprep.subr.mxu0 0.0
        %1067 = vmatpush1.msra.mxu0 0.0
        %1068 = vmatprep.subr.mxu0 0.0
        %1069 = vmatpush1.msra.mxu0 0.0
        %1070 = vmatprep.subr.mxu0 0.0
        %1071 = vmatpush1.msra.mxu0 0.0
        %1072 = vmatprep.mubr.f32.mxu0 0.0
        %1073 = vmatmul.mubr.f32.gmra.mrb[0].mxu0 %v1004
        %v1074 = vpop.f32.mrb[0].mxu0
        %v1075 = vadd.f32 0.0, %v1074
        %v1076 = vpop.f32.mrb[0].mxu0
        %1077 = vdwg.mxu0
        %v1078 = vmul.f32 %v1075, 0.0625
        %1079 = vmatprep.subr.mxu0 0.0
        %1080 = vmatpush1.msra.mxu0 %v637
        %1081 = vmatprep.subr.mxu0 0.0
        %1082 = vmatpush1.msra.mxu0 %v638
        %1083 = vmatprep.subr.mxu0 0.0
        %1084 = vmatpush1.msra.mxu0 %v639
        %1085 = vmatprep.subr.mxu0 0.0
        %1086 = vmatpush1.msra.mxu0 %v640
        %1087 = vmatprep.subr.mxu0 0.0
        %1088 = vmatpush1.msra.mxu0 %v641
        %1089 = vmatprep.subr.mxu0 0.0
        %1090 = vmatpush1.msra.mxu0 %v642
        %1091 = vmatprep.subr.mxu0 0.0
        %1092 = vmatpush1.msra.mxu0 %v643
        %1093 = vmatprep.subr.mxu0 0.0
        %1094 = vmatpush1.msra.mxu0 %v644
        %1095 = vmatprep.subr.mxu0 0.0
        %1096 = vmatpush1.msra.mxu0 %v645
        %1097 = vmatprep.subr.mxu0 0.0
        %1098 = vmatpush1.msra.mxu0 %v646
        %1099 = vmatprep.subr.mxu0 0.0
        %1100 = vmatpush1.msra.mxu0 %v647
        %1101 = vmatprep.subr.mxu0 0.0
        %1102 = vmatpush1.msra.mxu0 %v648
        %1103 = vmatprep.subr.mxu0 0.0
        %1104 = vmatpush1.msra.mxu0 %v649
        %1105 = vmatprep.subr.mxu0 0.0
        %1106 = vmatpush1.msra.mxu0 %v650
        %1107 = vmatprep.subr.mxu0 0.0
        %1108 = vmatpush1.msra.mxu0 %v651
        %1109 = vmatprep.subr.mxu0 0.0
        %1110 = vmatpush1.msra.mxu0 %v652
        %1111 = vmatprep.subr.mxu0 0.0
        %1112 = vmatpush1.msra.mxu0 0.0
        %1113 = vmatprep.subr.mxu0 0.0
        %1114 = vmatpush1.msra.mxu0 0.0
        %1115 = vmatprep.subr.mxu0 0.0
        %1116 = vmatpush1.msra.mxu0 0.0
        %1117 = vmatprep.subr.mxu0 0.0
        %1118 = vmatpush1.msra.mxu0 0.0
        %1119 = vmatprep.subr.mxu0 0.0
        %1120 = vmatpush1.msra.mxu0 0.0
        %1121 = vmatprep.subr.mxu0 0.0
        %1122 = vmatpush1.msra.mxu0 0.0
        %1123 = vmatprep.subr.mxu0 0.0
        %1124 = vmatpush1.msra.mxu0 0.0
        %1125 = vmatprep.subr.mxu0 0.0
        %1126 = vmatpush1.msra.mxu0 0.0
        %1127 = vmatprep.subr.mxu0 0.0
        %1128 = vmatpush1.msra.mxu0 0.0
        %1129 = vmatprep.subr.mxu0 0.0
        %1130 = vmatpush1.msra.mxu0 0.0
        %1131 = vmatprep.subr.mxu0 0.0
        %1132 = vmatpush1.msra.mxu0 0.0
        %1133 = vmatprep.subr.mxu0 0.0
        %1134 = vmatpush1.msra.mxu0 0.0
        %1135 = vmatprep.subr.mxu0 0.0
        %1136 = vmatpush1.msra.mxu0 0.0
        %1137 = vmatprep.subr.mxu0 0.0
        %1138 = vmatpush1.msra.mxu0 0.0
        %1139 = vmatprep.subr.mxu0 0.0
        %1140 = vmatpush1.msra.mxu0 0.0
        %1141 = vmatprep.subr.mxu0 0.0
        %1142 = vmatpush1.msra.mxu0 0.0
        %1143 = vmatprep.mubr.f32.mxu0 0.0
        %1144 = vmatmul.mubr.f32.gmra.mrb[0].mxu0 %v1006
        %v1145 = vpop.f32.mrb[0].mxu0
        %v1146 = vadd.f32 0.0, %v1145
        %v1147 = vpop.f32.mrb[0].mxu0
        %1148 = vdwg.mxu0
        %v1149 = vmul.f32 %v1146, 0.0625
        %v1150 = vmul.f32 %v1078, %v1078
        %v1151 = vsub.f32 %v1149, %v1150
        %v1152 = vmax.f32 %v1151, 0.0
        %v1153 = vadd.f32 %v1152, 1e-05
        %v1154 = vrsqrt.pop %v1153
        %v1156 = vlaneseq
        %v1157 = vshrl.u32 %v1156, 7
        %v1158 = vsub.s32 0, %v1157
        %v1159 = vrot.slane %v919, %v1158
        %v1161 = vmul.f32 %v1154, %v1159
        %v1162 = vmul.f32 %v1078, %v1161
        %v1164 = vlaneseq
        %v1165 = vshrl.u32 %v1164, 7
        %v1166 = vsub.s32 0, %v1165
        %v1167 = vrot.slane %v920, %v1166
        %v1169 = vsub.f32 %v1167, %v1162
        %vm1170 = vcmask 64512
        %v1172 = vsel %vm1170, %v654, 0
        %v1175 = vsel %vm1170, %v655, 0
        %v1178 = vsel %vm1170, %v656, 0
        %v1181 = vsel %vm1170, %v657, 0
        %v1184 = vsel %vm1170, %v658, 0
        %v1187 = vsel %vm1170, %v659, 0
        %v1190 = vsel %vm1170, %v660, 0
        %v1193 = vsel %vm1170, %v661, 0
        %v1196 = vsel %vm1170, %v662, 0
        %v1199 = vsel %vm1170, %v663, 0
        %v1202 = vsel %vm1170, %v664, 0
        %v1205 = vsel %vm1170, %v665, 0
        %v1208 = vsel %vm1170, %v666, 0
        %v1211 = vsel %vm1170, %v667, 0
        %v1214 = vsel %vm1170, %v668, 0
        %v1217 = vsel %vm1170, %v669, 0
        %1219 = vmatprep.subr.mxu0 %v1169
        %1220 = vmatpush1.msra.mxu0 %v1161
        %1221 = vmatprep.subr.mxu0 0.0
        %1222 = vmatpush1.msra.mxu0 0.0
        %1223 = vmatprep.subr.mxu0 0.0
        %1224 = vmatpush1.msra.mxu0 0.0
        %1225 = vmatprep.subr.mxu0 0.0
        %1226 = vmatpush1.msra.mxu0 0.0
        %1227 = vmatprep.subr.mxu0 0.0
        %1228 = vmatpush1.msra.mxu0 0.0
        %1229 = vmatprep.subr.mxu0 0.0
        %1230 = vmatpush1.msra.mxu0 0.0
        %1231 = vmatprep.subr.mxu0 0.0
        %1232 = vmatpush1.msra.mxu0 0.0
        %1233 = vmatprep.subr.mxu0 0.0
        %1234 = vmatpush1.msra.mxu0 0.0
        %1235 = vmatprep.subr.mxu0 0.0
        %1236 = vmatpush1.msra.mxu0 0.0
        %1237 = vmatprep.subr.mxu0 0.0
        %1238 = vmatpush1.msra.mxu0 0.0
        %1239 = vmatprep.subr.mxu0 0.0
        %1240 = vmatpush1.msra.mxu0 0.0
        %1241 = vmatprep.subr.mxu0 0.0
        %1242 = vmatpush1.msra.mxu0 0.0
        %1243 = vmatprep.subr.mxu0 0.0
        %1244 = vmatpush1.msra.mxu0 0.0
        %1245 = vmatprep.subr.mxu0 0.0
        %1246 = vmatpush1.msra.mxu0 0.0
        %1247 = vmatprep.subr.mxu0 0.0
        %1248 = vmatpush1.msra.mxu0 0.0
        %1249 = vmatprep.subr.mxu0 0.0
        %1250 = vmatpush1.msra.mxu0 0.0
        %1251 = vmatprep.subr.mxu0 0.0
        %1252 = vmatpush1.msra.mxu0 0.0
        %1253 = vmatprep.subr.mxu0 0.0
        %1254 = vmatpush1.msra.mxu0 0.0
        %1255 = vmatprep.subr.mxu0 0.0
        %1256 = vmatpush1.msra.mxu0 0.0
        %1257 = vmatprep.subr.mxu0 0.0
        %1258 = vmatpush1.msra.mxu0 0.0
        %1259 = vmatprep.subr.mxu0 0.0
        %1260 = vmatpush1.msra.mxu0 0.0
        %1261 = vmatprep.subr.mxu0 0.0
        %1262 = vmatpush1.msra.mxu0 0.0
        %1263 = vmatprep.subr.mxu0 0.0
        %1264 = vmatpush1.msra.mxu0 0.0
        %1265 = vmatprep.subr.mxu0 0.0
        %1266 = vmatpush1.msra.mxu0 0.0
        %1267 = vmatprep.subr.mxu0 0.0
        %1268 = vmatpush1.msra.mxu0 0.0
        %1269 = vmatprep.subr.mxu0 0.0
        %1270 = vmatpush1.msra.mxu0 0.0
        %1271 = vmatprep.subr.mxu0 0.0
        %1272 = vmatpush1.msra.mxu0 0.0
        %1273 = vmatprep.subr.mxu0 0.0
        %1274 = vmatpush1.msra.mxu0 0.0
        %1275 = vmatprep.subr.mxu0 0.0
        %1276 = vmatpush1.msra.mxu0 0.0
        %1277 = vmatprep.subr.mxu0 0.0
        %1278 = vmatpush1.msra.mxu0 0.0
        %1279 = vmatprep.subr.mxu0 0.0
        %1280 = vmatpush1.msra.mxu0 0.0
        %1281 = vmatprep.subr.mxu0 0.0
        %1282 = vmatpush1.msra.mxu0 0.0
        %1283 = vmatprep.mubr.f32.mxu0 0.0
        %1284 = vmatmul.mubr.f32.gmra.mrb[0].mxu0 %v1172
        %v1285 = vpop.f32.mrb[0].mxu0
        %v1286 = vadd.f32 0.0, %v1285
        %v1287 = vpop.f32.mrb[0].mxu0
        %v1288 = vadd.f32 0.0, %v1287
        %1289 = vmatprep.mubr.f32.mxu0 0.0
        %1290 = vmatmul.mubr.f32.gmra.mrb[0].mxu0 %v1175
        %v1291 = vpop.f32.mrb[0].mxu0
        %v1292 = vadd.f32 0.0, %v1291
        %v1293 = vpop.f32.mrb[0].mxu0
        %v1294 = vadd.f32 0.0, %v1293
        %1295 = vmatprep.mubr.f32.mxu0 0.0
        %1296 = vmatmul.mubr.f32.gmra.mrb[0].mxu0 %v1178
        %v1297 = vpop.f32.mrb[0].mxu0
        %v1298 = vadd.f32 0.0, %v1297
        %v1299 = vpop.f32.mrb[0].mxu0
        %v1300 = vadd.f32 0.0, %v1299
        %1301 = vmatprep.mubr.f32.mxu0 0.0
        %1302 = vmatmul.mubr.f32.gmra.mrb[0].mxu0 %v1181
        %v1303 = vpop.f32.mrb[0].mxu0
        %v1304 = vadd.f32 0.0, %v1303
        %v1305 = vpop.f32.mrb[0].mxu0
        %v1306 = vadd.f32 0.0, %v1305
        %1307 = vmatprep.mubr.f32.mxu0 0.0
        %1308 = vmatmul.mubr.f32.gmra.mrb[0].mxu0 %v1184
        %v1309 = vpop.f32.mrb[0].mxu0
        %v1310 = vadd.f32 0.0, %v1309
        %v1311 = vpop.f32.mrb[0].mxu0
        %v1312 = vadd.f32 0.0, %v1311
        %1313 = vmatprep.mubr.f32.mxu0 0.0
        %1314 = vmatmul.mubr.f32.gmra.mrb[0].mxu0 %v1187
        %v1315 = vpop.f32.mrb[0].mxu0
        %v1316 = vadd.f32 0.0, %v1315
        %v1317 = vpop.f32.mrb[0].mxu0
        %v1318 = vadd.f32 0.0, %v1317
        %1319 = vmatprep.mubr.f32.mxu0 0.0
        %1320 = vmatmul.mubr.f32.gmra.mrb[0].mxu0 %v1190
        %v1321 = vpop.f32.mrb[0].mxu0
        %v1322 = vadd.f32 0.0, %v1321
        %v1323 = vpop.f32.mrb[0].mxu0
        %v1324 = vadd.f32 0.0, %v1323
        %1325 = vmatprep.mubr.f32.mxu0 0.0
        %1326 = vmatmul.mubr.f32.gmra.mrb[0].mxu0 %v1193
        %v1327 = vpop.f32.mrb[0].mxu0
        %v1328 = vadd.f32 0.0, %v1327
        %v1329 = vpop.f32.mrb[0].mxu0
        %v1330 = vadd.f32 0.0, %v1329
        %1331 = vmatprep.mubr.f32.mxu0 0.0
        %1332 = vmatmul.mubr.f32.gmra.mrb[0].mxu0 %v1196
        %v1333 = vpop.f32.mrb[0].mxu0
        %v1334 = vadd.f32 0.0, %v1333
        %v1335 = vpop.f32.mrb[0].mxu0
        %v1336 = vadd.f32 0.0, %v1335
        %1337 = vmatprep.mubr.f32.mxu0 0.0
        %1338 = vmatmul.mubr.f32.gmra.mrb[0].mxu0 %v1199
        %v1339 = vpop.f32.mrb[0].mxu0
        %v1340 = vadd.f32 0.0, %v1339
        %v1341 = vpop.f32.mrb[0].mxu0
        %v1342 = vadd.f32 0.0, %v1341
        %1343 = vmatprep.mubr.f32.mxu0 0.0
        %1344 = vmatmul.mubr.f32.gmra.mrb[0].mxu0 %v1202
        %v1345 = vpop.f32.mrb[0].mxu0
        %v1346 = vadd.f32 0.0, %v1345
        %v1347 = vpop.f32.mrb[0].mxu0
        %v1348 = vadd.f32 0.0, %v1347
        %1349 = vmatprep.mubr.f32.mxu0 0.0
        %1350 = vmatmul.mubr.f32.gmra.mrb[0].mxu0 %v1205
        %v1351 = vpop.f32.mrb[0].mxu0
        %v1352 = vadd.f32 0.0, %v1351
        %v1353 = vpop.f32.mrb[0].mxu0
        %v1354 = vadd.f32 0.0, %v1353
        %1355 = vmatprep.mubr.f32.mxu0 0.0
        %1356 = vmatmul.mubr.f32.gmra.mrb[0].mxu0 %v1208
        %v1357 = vpop.f32.mrb[0].mxu0
        %v1358 = vadd.f32 0.0, %v1357
        %v1359 = vpop.f32.mrb[0].mxu0
        %v1360 = vadd.f32 0.0, %v1359
        %1361 = vmatprep.mubr.f32.mxu0 0.0
        %1362 = vmatmul.mubr.f32.gmra.mrb[0].mxu0 %v1211
        %v1363 = vpop.f32.mrb[0].mxu0
        %v1364 = vadd.f32 0.0, %v1363
        %v1365 = vpop.f32.mrb[0].mxu0
        %v1366 = vadd.f32 0.0, %v1365
        %1367 = vmatprep.mubr.f32.mxu0 0.0
        %1368 = vmatmul.mubr.f32.gmra.mrb[0].mxu0 %v1214
        %v1369 = vpop.f32.mrb[0].mxu0
        %v1370 = vadd.f32 0.0, %v1369
        %v1371 = vpop.f32.mrb[0].mxu0
        %v1372 = vadd.f32 0.0, %v1371
        %1373 = vmatprep.mubr.f32.mxu0 0.0
        %1374 = vmatmul.mubr.f32.gmra.mrb[0].mxu0 %v1217
        %v1375 = vpop.f32.mrb[0].mxu0
        %v1376 = vadd.f32 0.0, %v1375
        %v1377 = vpop.f32.mrb[0].mxu0
        %v1378 = vadd.f32 0.0, %v1377
        %1379 = vdwg.mxu0
        %v1380 = vmul.f32 %v825, %v1286
        %v1381 = vmul.f32 %v831, %v1292
        %v1382 = vmul.f32 %v837, %v1298
        %v1383 = vmul.f32 %v843, %v1304
        %v1384 = vmul.f32 %v849, %v1310
        %v1385 = vmul.f32 %v855, %v1316
        %v1386 = vmul.f32 %v861, %v1322
        %v1387 = vmul.f32 %v867, %v1328
        %v1388 = vmul.f32 %v873, %v1334
        %v1389 = vmul.f32 %v879, %v1340
        %v1390 = vmul.f32 %v885, %v1346
        %v1391 = vmul.f32 %v891, %v1352
        %v1392 = vmul.f32 %v897, %v1358
        %v1393 = vmul.f32 %v903, %v1364
        %v1394 = vmul.f32 %v909, %v1370
        %v1395 = vmul.f32 %v915, %v1376
        %v1396 = vadd.f32 %v1380, %v1288
        %v1397 = vadd.f32 %v1381, %v1294
        %v1398 = vadd.f32 %v1382, %v1300
        %v1399 = vadd.f32 %v1383, %v1306
        %v1400 = vadd.f32 %v1384, %v1312
        %v1401 = vadd.f32 %v1385, %v1318
        %v1402 = vadd.f32 %v1386, %v1324
        %v1403 = vadd.f32 %v1387, %v1330
        %v1404 = vadd.f32 %v1388, %v1336
        %v1405 = vadd.f32 %v1389, %v1342
        %v1406 = vadd.f32 %v1390, %v1348
        %v1407 = vadd.f32 %v1391, %v1354
        %v1408 = vadd.f32 %v1392, %v1360
        %v1409 = vadd.f32 %v1393, %v1366
        %v1410 = vadd.f32 %v1394, %v1372
        %v1411 = vadd.f32 %v1395, %v1378
        %v1412 = vmin.f32 %v1396, 20.0
        %v1413 = vmin.f32 %v1397, 20.0
        %v1414 = vmin.f32 %v1398, 20.0
        %v1415 = vmin.f32 %v1399, 20.0
        %v1416 = vmin.f32 %v1400, 20.0
        %v1417 = vmin.f32 %v1401, 20.0
        %v1418 = vmin.f32 %v1402, 20.0
        %v1419 = vmin.f32 %v1403, 20.0
        %v1420 = vmin.f32 %v1404, 20.0
        %v1421 = vmin.f32 %v1405, 20.0
        %v1422 = vmin.f32 %v1406, 20.0
        %v1423 = vmin.f32 %v1407, 20.0
        %v1424 = vmin.f32 %v1408, 20.0
        %v1425 = vmin.f32 %v1409, 20.0
        %v1426 = vmin.f32 %v1410, 20.0
        %v1427 = vmin.f32 %v1411, 20.0
        %v1428 = vmul.f32 %v1412, 1.442695
        %v1429 = vpow.pop %v1428
        %v1430 = vmul.f32 %v1413, 1.442695
        %v1431 = vpow.pop %v1430
        %v1432 = vmul.f32 %v1414, 1.442695
        %v1433 = vpow.pop %v1432
        %v1434 = vmul.f32 %v1415, 1.442695
        %v1435 = vpow.pop %v1434
        %v1436 = vmul.f32 %v1416, 1.442695
        %v1437 = vpow.pop %v1436
        %v1438 = vmul.f32 %v1417, 1.442695
        %v1439 = vpow.pop %v1438
        %v1440 = vmul.f32 %v1418, 1.442695
        %v1441 = vpow.pop %v1440
        %v1442 = vmul.f32 %v1419, 1.442695
        %v1443 = vpow.pop %v1442
        %v1444 = vmul.f32 %v1420, 1.442695
        %v1445 = vpow.pop %v1444
        %v1446 = vmul.f32 %v1421, 1.442695
        %v1447 = vpow.pop %v1446
        %v1448 = vmul.f32 %v1422, 1.442695
        %v1449 = vpow.pop %v1448
        %v1450 = vmul.f32 %v1423, 1.442695
        %v1451 = vpow.pop %v1450
        %v1452 = vmul.f32 %v1424, 1.442695
        %v1453 = vpow.pop %v1452
        %v1454 = vmul.f32 %v1425, 1.442695
        %v1455 = vpow.pop %v1454
        %v1456 = vmul.f32 %v1426, 1.442695
        %v1457 = vpow.pop %v1456
        %v1458 = vmul.f32 %v1427, 1.442695
        %v1459 = vpow.pop %v1458
        %v1460 = vadd.f32 %v1429, 1.0
        %v1461 = vadd.f32 %v1431, 1.0
        %v1462 = vadd.f32 %v1433, 1.0
        %v1463 = vadd.f32 %v1435, 1.0
        %v1464 = vadd.f32 %v1437, 1.0
        %v1465 = vadd.f32 %v1439, 1.0
        %v1466 = vadd.f32 %v1441, 1.0
        %v1467 = vadd.f32 %v1443, 1.0
        %v1468 = vadd.f32 %v1445, 1.0
        %v1469 = vadd.f32 %v1447, 1.0
        %v1470 = vadd.f32 %v1449, 1.0
        %v1471 = vadd.f32 %v1451, 1.0
        %v1472 = vadd.f32 %v1453, 1.0
        %v1473 = vadd.f32 %v1455, 1.0
        %v1474 = vadd.f32 %v1457, 1.0
        %v1475 = vadd.f32 %v1459, 1.0
        %v1476 = vmul.f32 %v1460, %v1460
        %v1477 = vmul.f32 %v1461, %v1461
        %v1478 = vmul.f32 %v1462, %v1462
        %v1479 = vmul.f32 %v1463, %v1463
        %v1480 = vmul.f32 %v1464, %v1464
        %v1481 = vmul.f32 %v1465, %v1465
        %v1482 = vmul.f32 %v1466, %v1466
        %v1483 = vmul.f32 %v1467, %v1467
        %v1484 = vmul.f32 %v1468, %v1468
        %v1485 = vmul.f32 %v1469, %v1469
        %v1486 = vmul.f32 %v1470, %v1470
        %v1487 = vmul.f32 %v1471, %v1471
        %v1488 = vmul.f32 %v1472, %v1472
        %v1489 = vmul.f32 %v1473, %v1473
        %v1490 = vmul.f32 %v1474, %v1474
        %v1491 = vmul.f32 %v1475, %v1475
        %v1492 = vsub.f32 %v1476, 1.0
        %v1493 = vsub.f32 %v1477, 1.0
        %v1494 = vsub.f32 %v1478, 1.0
        %v1495 = vsub.f32 %v1479, 1.0
        %v1496 = vsub.f32 %v1480, 1.0
        %v1497 = vsub.f32 %v1481, 1.0
        %v1498 = vsub.f32 %v1482, 1.0
        %v1499 = vsub.f32 %v1483, 1.0
        %v1500 = vsub.f32 %v1484, 1.0
        %v1501 = vsub.f32 %v1485, 1.0
        %v1502 = vsub.f32 %v1486, 1.0
        %v1503 = vsub.f32 %v1487, 1.0
        %v1504 = vsub.f32 %v1488, 1.0
        %v1505 = vsub.f32 %v1489, 1.0
        %v1506 = vsub.f32 %v1490, 1.0
        %v1507 = vsub.f32 %v1491, 1.0
        %v1508 = vadd.f32 %v1476, 1.0
        %v1509 = vadd.f32 %v1477, 1.0
        %v1510 = vadd.f32 %v1478, 1.0
        %v1511 = vadd.f32 %v1479, 1.0
        %v1512 = vadd.f32 %v1480, 1.0
        %v1513 = vadd.f32 %v1481, 1.0
        %v1514 = vadd.f32 %v1482, 1.0
        %v1515 = vadd.f32 %v1483, 1.0
        %v1516 = vadd.f32 %v1484, 1.0
        %v1517 = vadd.f32 %v1485, 1.0
        %v1518 = vadd.f32 %v1486, 1.0
        %v1519 = vadd.f32 %v1487, 1.0
        %v1520 = vadd.f32 %v1488, 1.0
        %v1521 = vadd.f32 %v1489, 1.0
        %v1522 = vadd.f32 %v1490, 1.0
        %v1523 = vadd.f32 %v1491, 1.0
        %v1524 = vrcp.pop %v1508
        %v1525 = vrcp.pop %v1509
        %v1526 = vrcp.pop %v1510
        %v1527 = vrcp.pop %v1511
        %v1528 = vrcp.pop %v1512
        %v1529 = vrcp.pop %v1513
        %v1530 = vrcp.pop %v1514
        %v1531 = vrcp.pop %v1515
        %v1532 = vrcp.pop %v1516
        %v1533 = vrcp.pop %v1517
        %v1534 = vrcp.pop %v1518
        %v1535 = vrcp.pop %v1519
        %v1536 = vrcp.pop %v1520
        %v1537 = vrcp.pop %v1521
        %v1538 = vrcp.pop %v1522
        %v1539 = vrcp.pop %v1523
        %v1540 = vmul.f32 %v1492, %v1524
        %v1541 = vmul.f32 %v1493, %v1525
        %v1542 = vmul.f32 %v1494, %v1526
        %v1543 = vmul.f32 %v1495, %v1527
        %v1544 = vmul.f32 %v1496, %v1528
        %v1545 = vmul.f32 %v1497, %v1529
        %v1546 = vmul.f32 %v1498, %v1530
        %v1547 = vmul.f32 %v1499, %v1531
        %v1548 = vmul.f32 %v1500, %v1532
        %v1549 = vmul.f32 %v1501, %v1533
        %v1550 = vmul.f32 %v1502, %v1534
        %v1551 = vmul.f32 %v1503, %v1535
        %v1552 = vmul.f32 %v1504, %v1536
        %v1553 = vmul.f32 %v1505, %v1537
        %v1554 = vmul.f32 %v1506, %v1538
        %v1555 = vmul.f32 %v1507, %v1539
        %vm1556 = vcmp.gt.f32.partialorder %v1396, 20.0
        %vm1557 = vcmp.gt.f32.partialorder %v1397, 20.0
        %vm1558 = vcmp.gt.f32.partialorder %v1398, 20.0
        %vm1559 = vcmp.gt.f32.partialorder %v1399, 20.0
        %vm1560 = vcmp.gt.f32.partialorder %v1400, 20.0
        %vm1561 = vcmp.gt.f32.partialorder %v1401, 20.0
        %vm1562 = vcmp.gt.f32.partialorder %v1402, 20.0
        %vm1563 = vcmp.gt.f32.partialorder %v1403, 20.0
        %vm1564 = vcmp.gt.f32.partialorder %v1404, 20.0
        %vm1565 = vcmp.gt.f32.partialorder %v1405, 20.0
        %vm1566 = vcmp.gt.f32.partialorder %v1406, 20.0
        %vm1567 = vcmp.gt.f32.partialorder %v1407, 20.0
        %vm1568 = vcmp.gt.f32.partialorder %v1408, 20.0
        %vm1569 = vcmp.gt.f32.partialorder %v1409, 20.0
        %vm1570 = vcmp.gt.f32.partialorder %v1410, 20.0
        %vm1571 = vcmp.gt.f32.partialorder %v1411, 20.0
        %v1572 = vmul.f32 %v1396, %v1540
        %v1573 = vmul.f32 %v1397, %v1541
        %v1574 = vmul.f32 %v1398, %v1542
        %v1575 = vmul.f32 %v1399, %v1543
        %v1576 = vmul.f32 %v1400, %v1544
        %v1577 = vmul.f32 %v1401, %v1545
        %v1578 = vmul.f32 %v1402, %v1546
        %v1579 = vmul.f32 %v1403, %v1547
        %v1580 = vmul.f32 %v1404, %v1548
        %v1581 = vmul.f32 %v1405, %v1549
        %v1582 = vmul.f32 %v1406, %v1550
        %v1583 = vmul.f32 %v1407, %v1551
        %v1584 = vmul.f32 %v1408, %v1552
        %v1585 = vmul.f32 %v1409, %v1553
        %v1586 = vmul.f32 %v1410, %v1554
        %v1587 = vmul.f32 %v1411, %v1555
        %v1588 = vsel %vm1556, %v1396, %v1572
        %v1589 = vsel %vm1557, %v1397, %v1573
        %v1590 = vsel %vm1558, %v1398, %v1574
        %v1591 = vsel %vm1559, %v1399, %v1575
        %v1592 = vsel %vm1560, %v1400, %v1576
        %v1593 = vsel %vm1561, %v1401, %v1577
        %v1594 = vsel %vm1562, %v1402, %v1578
        %v1595 = vsel %vm1563, %v1403, %v1579
        %v1596 = vsel %vm1564, %v1404, %v1580
        %v1597 = vsel %vm1565, %v1405, %v1581
        %v1598 = vsel %vm1566, %v1406, %v1582
        %v1599 = vsel %vm1567, %v1407, %v1583
        %v1600 = vsel %vm1568, %v1408, %v1584
        %v1601 = vsel %vm1569, %v1409, %v1585
        %v1602 = vsel %vm1570, %v1410, %v1586
        %v1603 = vsel %vm1571, %v1411, %v1587
        %v1604 = vld [vmem:[%s546] sm:$0xff]
        %v1605 = vmin.f32 %v1604, 20.0
        %v1606 = vmul.f32 %v1605, 1.442695
        %v1607 = vpow.pop %v1606
        %v1608 = vadd.f32 %v1607, 1.0
        %v1609 = vmul.f32 %v1608, %v1608
        %v1610 = vsub.f32 %v1609, 1.0
        %v1611 = vadd.f32 %v1609, 1.0
        %v1612 = vrcp.pop %v1611
        %v1613 = vmul.f32 %v1610, %v1612
        %vm1614 = vcmp.gt.f32.partialorder %v1604, 20.0
        %v1615 = vmul.f32 %v1604, %v1613
        %v1616 = vsel %vm1614, %v1604, %v1615
        %v1617 = vld [vmem:[%s10] sm:$0xff]
        %v1618 = vld [vmem:[%s10 + $0x8] sm:$0xff]
        %v1619 = vld [vmem:[%s10 + $0x10] sm:$0xff]
        %v1620 = vld [vmem:[%s10 + $0x18] sm:$0xff]
        %v1621 = vld [vmem:[%s10 + $0x20] sm:$0xff]
        %v1622 = vld [vmem:[%s10 + $0x28] sm:$0xff]
        %v1623 = vld [vmem:[%s10 + $0x30] sm:$0xff]
        %v1624 = vld [vmem:[%s10 + $0x38] sm:$0xff]
        %v1625 = vld [vmem:[#allocation14] sm:$0x3]
        %v1627 = vlaneseq
        %v1628 = vshrl.u32 %v1627, 7
        %v1629 = vsub.s32 0, %v1628
        %v1630 = vrot.slane %v1625, %v1629
        %v1631 = vlaneseq
        %v1632 = vshrl.u32 %v1631, 7
        %v1633 = vsub.s32 1, %v1632
        %v1634 = vrot.slane %v1625, %v1633
        %vm1637 = vcmask 261120
        %v1639 = vsel %vm1637, %v1616, 0
        %1641 = vmatprep.subr.mxu0 %v1618
        %1642 = vmatpush1.msra.mxu0 %v1617
        %1643 = vmatprep.subr.mxu0 %v1620
        %1644 = vmatpush1.msra.mxu0 %v1619
        %1645 = vmatprep.subr.mxu0 %v1622
        %1646 = vmatpush1.msra.mxu0 %v1621
        %1647 = vmatprep.subr.mxu0 %v1624
        %1648 = vmatpush1.msra.mxu0 %v1623
        %1649 = vmatprep.subr.mxu0 0.0
        %1650 = vmatpush1.msra.mxu0 0.0
        %1651 = vmatprep.subr.mxu0 0.0
        %1652 = vmatpush1.msra.mxu0 0.0
        %1653 = vmatprep.subr.mxu0 0.0
        %1654 = vmatpush1.msra.mxu0 0.0
        %1655 = vmatprep.subr.mxu0 0.0
        %1656 = vmatpush1.msra.mxu0 0.0
        %1657 = vmatprep.subr.mxu0 0.0
        %1658 = vmatpush1.msra.mxu0 0.0
        %1659 = vmatprep.subr.mxu0 0.0
        %1660 = vmatpush1.msra.mxu0 0.0
        %1661 = vmatprep.subr.mxu0 0.0
        %1662 = vmatpush1.msra.mxu0 0.0
        %1663 = vmatprep.subr.mxu0 0.0
        %1664 = vmatpush1.msra.mxu0 0.0
        %1665 = vmatprep.subr.mxu0 0.0
        %1666 = vmatpush1.msra.mxu0 0.0
        %1667 = vmatprep.subr.mxu0 0.0
        %1668 = vmatpush1.msra.mxu0 0.0
        %1669 = vmatprep.subr.mxu0 0.0
        %1670 = vmatpush1.msra.mxu0 0.0
        %1671 = vmatprep.subr.mxu0 0.0
        %1672 = vmatpush1.msra.mxu0 0.0
        %1673 = vmatprep.subr.mxu0 0.0
        %1674 = vmatpush1.msra.mxu0 0.0
        %1675 = vmatprep.subr.mxu0 0.0
        %1676 = vmatpush1.msra.mxu0 0.0
        %1677 = vmatprep.subr.mxu0 0.0
        %1678 = vmatpush1.msra.mxu0 0.0
        %1679 = vmatprep.subr.mxu0 0.0
        %1680 = vmatpush1.msra.mxu0 0.0
        %1681 = vmatprep.subr.mxu0 0.0
        %1682 = vmatpush1.msra.mxu0 0.0
        %1683 = vmatprep.subr.mxu0 0.0
        %1684 = vmatpush1.msra.mxu0 0.0
        %1685 = vmatprep.subr.mxu0 0.0
        %1686 = vmatpush1.msra.mxu0 0.0
        %1687 = vmatprep.subr.mxu0 0.0
        %1688 = vmatpush1.msra.mxu0 0.0
        %1689 = vmatprep.subr.mxu0 0.0
        %1690 = vmatpush1.msra.mxu0 0.0
        %1691 = vmatprep.subr.mxu0 0.0
        %1692 = vmatpush1.msra.mxu0 0.0
        %1693 = vmatprep.subr.mxu0 0.0
        %1694 = vmatpush1.msra.mxu0 0.0
        %1695 = vmatprep.subr.mxu0 0.0
        %1696 = vmatpush1.msra.mxu0 0.0
        %1697 = vmatprep.subr.mxu0 0.0
        %1698 = vmatpush1.msra.mxu0 0.0
        %1699 = vmatprep.subr.mxu0 0.0
        %1700 = vmatpush1.msra.mxu0 0.0
        %1701 = vmatprep.subr.mxu0 0.0
        %1702 = vmatpush1.msra.mxu0 0.0
        %1703 = vmatprep.subr.mxu0 0.0
        %1704 = vmatpush1.msra.mxu0 0.0
        %1705 = vmatprep.mubr.f32.mxu0 0.0
        %1706 = vmatmul.mubr.f32.gmra.mrb[0].mxu0 %v1639
        %v1707 = vpop.f32.mrb[0].mxu0
        %v1708 = vadd.f32 %v1630, %v1707
        %v1709 = vpop.f32.mrb[0].mxu0
        %v1710 = vadd.f32 %v1634, %v1709
        %1711 = vdwg.mxu0
        %1712 = vmatprep.subr.mxu0 %v1710
        %1713 = vmatpush1.msra.mxu0 %v1708
        %1714 = vmatprep.subr.mxu0 0.0
        %1715 = vmatpush1.msra.mxu0 0.0
        %1716 = vmatprep.subr.mxu0 0.0
        %1717 = vmatpush1.msra.mxu0 0.0
        %1718 = vmatprep.subr.mxu0 0.0
        %1719 = vmatpush1.msra.mxu0 0.0
        %1720 = vmatprep.subr.mxu0 0.0
        %1721 = vmatpush1.msra.mxu0 0.0
        %1722 = vmatprep.subr.mxu0 0.0
        %1723 = vmatpush1.msra.mxu0 0.0
        %1724 = vmatprep.subr.mxu0 0.0
        %1725 = vmatpush1.msra.mxu0 0.0
        %1726 = vmatprep.subr.mxu0 0.0
        %1727 = vmatpush1.msra.mxu0 0.0
        %1728 = vmatprep.subr.mxu0 0.0
        %1729 = vmatpush1.msra.mxu0 0.0
        %1730 = vmatprep.subr.mxu0 0.0
        %1731 = vmatpush1.msra.mxu0 0.0
        %1732 = vmatprep.subr.mxu0 0.0
        %1733 = vmatpush1.msra.mxu0 0.0
        %1734 = vmatprep.subr.mxu0 0.0
        %1735 = vmatpush1.msra.mxu0 0.0
        %1736 = vmatprep.subr.mxu0 0.0
        %1737 = vmatpush1.msra.mxu0 0.0
        %1738 = vmatprep.subr.mxu0 0.0
        %1739 = vmatpush1.msra.mxu0 0.0
        %1740 = vmatprep.subr.mxu0 0.0
        %1741 = vmatpush1.msra.mxu0 0.0
        %1742 = vmatprep.subr.mxu0 0.0
        %1743 = vmatpush1.msra.mxu0 0.0
        %1744 = vmatprep.subr.mxu0 0.0
        %1745 = vmatpush1.msra.mxu0 0.0
        %1746 = vmatprep.subr.mxu0 0.0
        %1747 = vmatpush1.msra.mxu0 0.0
        %1748 = vmatprep.subr.mxu0 0.0
        %1749 = vmatpush1.msra.mxu0 0.0
        %1750 = vmatprep.subr.mxu0 0.0
        %1751 = vmatpush1.msra.mxu0 0.0
        %1752 = vmatprep.subr.mxu0 0.0
        %1753 = vmatpush1.msra.mxu0 0.0
        %1754 = vmatprep.subr.mxu0 0.0
        %1755 = vmatpush1.msra.mxu0 0.0
        %1756 = vmatprep.subr.mxu0 0.0
        %1757 = vmatpush1.msra.mxu0 0.0
        %1758 = vmatprep.subr.mxu0 0.0
        %1759 = vmatpush1.msra.mxu0 0.0
        %1760 = vmatprep.subr.mxu0 0.0
        %1761 = vmatpush1.msra.mxu0 0.0
        %1762 = vmatprep.subr.mxu0 0.0
        %1763 = vmatpush1.msra.mxu0 0.0
        %1764 = vmatprep.subr.mxu0 0.0
        %1765 = vmatpush1.msra.mxu0 0.0
        %1766 = vmatprep.subr.mxu0 0.0
        %1767 = vmatpush1.msra.mxu0 0.0
        %1768 = vmatprep.subr.mxu0 0.0
        %1769 = vmatpush1.msra.mxu0 0.0
        %1770 = vmatprep.subr.mxu0 0.0
        %1771 = vmatpush1.msra.mxu0 0.0
        %1772 = vmatprep.subr.mxu0 0.0
        %1773 = vmatpush1.msra.mxu0 0.0
        %1774 = vmatprep.subr.mxu0 0.0
        %1775 = vmatpush1.msra.mxu0 0.0
        %1776 = vmatprep.mubr.f32.mxu0 0.0
        %1777 = vmatmul.mubr.f32.gmra.mrb[0].mxu0 %v1172
        %v1778 = vpop.f32.mrb[0].mxu0
        %v1779 = vadd.f32 0.0, %v1778
        %v1780 = vpop.f32.mrb[0].mxu0
        %v1781 = vadd.f32 0.0, %v1780
        %1782 = vmatprep.mubr.f32.mxu0 0.0
        %1783 = vmatmul.mubr.f32.gmra.mrb[0].mxu0 %v1175
        %v1784 = vpop.f32.mrb[0].mxu0
        %v1785 = vadd.f32 0.0, %v1784
        %v1786 = vpop.f32.mrb[0].mxu0
        %v1787 = vadd.f32 0.0, %v1786
        %1788 = vmatprep.mubr.f32.mxu0 0.0
        %1789 = vmatmul.mubr.f32.gmra.mrb[0].mxu0 %v1178
        %v1790 = vpop.f32.mrb[0].mxu0
        %v1791 = vadd.f32 0.0, %v1790
        %v1792 = vpop.f32.mrb[0].mxu0
        %v1793 = vadd.f32 0.0, %v1792
        %1794 = vmatprep.mubr.f32.mxu0 0.0
        %1795 = vmatmul.mubr.f32.gmra.mrb[0].mxu0 %v1181
        %v1796 = vpop.f32.mrb[0].mxu0
        %v1797 = vadd.f32 0.0, %v1796
        %v1798 = vpop.f32.mrb[0].mxu0
        %v1799 = vadd.f32 0.0, %v1798
        %1800 = vmatprep.mubr.f32.mxu0 0.0
        %1801 = vmatmul.mubr.f32.gmra.mrb[0].mxu0 %v1184
        %v1802 = vpop.f32.mrb[0].mxu0
        %v1803 = vadd.f32 0.0, %v1802
        %v1804 = vpop.f32.mrb[0].mxu0
        %v1805 = vadd.f32 0.0, %v1804
        %1806 = vmatprep.mubr.f32.mxu0 0.0
        %1807 = vmatmul.mubr.f32.gmra.mrb[0].mxu0 %v1187
        %v1808 = vpop.f32.mrb[0].mxu0
        %v1809 = vadd.f32 0.0, %v1808
        %v1810 = vpop.f32.mrb[0].mxu0
        %v1811 = vadd.f32 0.0, %v1810
        %1812 = vmatprep.mubr.f32.mxu0 0.0
        %1813 = vmatmul.mubr.f32.gmra.mrb[0].mxu0 %v1190
        %v1814 = vpop.f32.mrb[0].mxu0
        %v1815 = vadd.f32 0.0, %v1814
        %v1816 = vpop.f32.mrb[0].mxu0
        %v1817 = vadd.f32 0.0, %v1816
        %1818 = vmatprep.mubr.f32.mxu0 0.0
        %1819 = vmatmul.mubr.f32.gmra.mrb[0].mxu0 %v1193
        %v1820 = vpop.f32.mrb[0].mxu0
        %v1821 = vadd.f32 0.0, %v1820
        %v1822 = vpop.f32.mrb[0].mxu0
        %v1823 = vadd.f32 0.0, %v1822
        %1824 = vmatprep.mubr.f32.mxu0 0.0
        %1825 = vmatmul.mubr.f32.gmra.mrb[0].mxu0 %v1196
        %v1826 = vpop.f32.mrb[0].mxu0
        %v1827 = vadd.f32 0.0, %v1826
        %v1828 = vpop.f32.mrb[0].mxu0
        %v1829 = vadd.f32 0.0, %v1828
        %1830 = vmatprep.mubr.f32.mxu0 0.0
        %1831 = vmatmul.mubr.f32.gmra.mrb[0].mxu0 %v1199
        %v1832 = vpop.f32.mrb[0].mxu0
        %v1833 = vadd.f32 0.0, %v1832
        %v1834 = vpop.f32.mrb[0].mxu0
        %v1835 = vadd.f32 0.0, %v1834
        %1836 = vmatprep.mubr.f32.mxu0 0.0
        %1837 = vmatmul.mubr.f32.gmra.mrb[0].mxu0 %v1202
        %v1838 = vpop.f32.mrb[0].mxu0
        %v1839 = vadd.f32 0.0, %v1838
        %v1840 = vpop.f32.mrb[0].mxu0
        %v1841 = vadd.f32 0.0, %v1840
        %1842 = vmatprep.mubr.f32.mxu0 0.0
        %1843 = vmatmul.mubr.f32.gmra.mrb[0].mxu0 %v1205
        %v1844 = vpop.f32.mrb[0].mxu0
        %v1845 = vadd.f32 0.0, %v1844
        %v1846 = vpop.f32.mrb[0].mxu0
        %v1847 = vadd.f32 0.0, %v1846
        %1848 = vmatprep.mubr.f32.mxu0 0.0
        %1849 = vmatmul.mubr.f32.gmra.mrb[0].mxu0 %v1208
        %v1850 = vpop.f32.mrb[0].mxu0
        %v1851 = vadd.f32 0.0, %v1850
        %v1852 = vpop.f32.mrb[0].mxu0
        %v1853 = vadd.f32 0.0, %v1852
        %1854 = vmatprep.mubr.f32.mxu0 0.0
        %1855 = vmatmul.mubr.f32.gmra.mrb[0].mxu0 %v1211
        %v1856 = vpop.f32.mrb[0].mxu0
        %v1857 = vadd.f32 0.0, %v1856
        %v1858 = vpop.f32.mrb[0].mxu0
        %v1859 = vadd.f32 0.0, %v1858
        %1860 = vmatprep.mubr.f32.mxu0 0.0
        %1861 = vmatmul.mubr.f32.gmra.mrb[0].mxu0 %v1214
        %v1862 = vpop.f32.mrb[0].mxu0
        %v1863 = vadd.f32 0.0, %v1862
        %v1864 = vpop.f32.mrb[0].mxu0
        %v1865 = vadd.f32 0.0, %v1864
        %1866 = vmatprep.mubr.f32.mxu0 0.0
        %1867 = vmatmul.mubr.f32.gmra.mrb[0].mxu0 %v1217
        %v1868 = vpop.f32.mrb[0].mxu0
        %v1869 = vadd.f32 0.0, %v1868
        %v1870 = vpop.f32.mrb[0].mxu0
        %v1871 = vadd.f32 0.0, %v1870
        %1872 = vdwg.mxu0
        %v1873 = vmul.f32 %v1588, %v1779
        %v1874 = vmul.f32 %v1589, %v1785
        %v1875 = vmul.f32 %v1590, %v1791
        %v1876 = vmul.f32 %v1591, %v1797
        %v1877 = vmul.f32 %v1592, %v1803
        %v1878 = vmul.f32 %v1593, %v1809
        %v1879 = vmul.f32 %v1594, %v1815
        %v1880 = vmul.f32 %v1595, %v1821
        %v1881 = vmul.f32 %v1596, %v1827
        %v1882 = vmul.f32 %v1597, %v1833
        %v1883 = vmul.f32 %v1598, %v1839
        %v1884 = vmul.f32 %v1599, %v1845
        %v1885 = vmul.f32 %v1600, %v1851
        %v1886 = vmul.f32 %v1601, %v1857
        %v1887 = vmul.f32 %v1602, %v1863
        %v1888 = vmul.f32 %v1603, %v1869
        %v1889 = vadd.f32 %v1873, %v1781
        %v1890 = vadd.f32 %v1874, %v1787
        %v1891 = vadd.f32 %v1875, %v1793
        %v1892 = vadd.f32 %v1876, %v1799
        %v1893 = vadd.f32 %v1877, %v1805
        %v1894 = vadd.f32 %v1878, %v1811
        %v1895 = vadd.f32 %v1879, %v1817
        %v1896 = vadd.f32 %v1880, %v1823
        %v1897 = vadd.f32 %v1881, %v1829
        %v1898 = vadd.f32 %v1882, %v1835
        %v1899 = vadd.f32 %v1883, %v1841
        %v1900 = vadd.f32 %v1884, %v1847
        %v1901 = vadd.f32 %v1885, %v1853
        %v1902 = vadd.f32 %v1886, %v1859
        %v1903 = vadd.f32 %v1887, %v1865
        %v1904 = vadd.f32 %v1888, %v1871
        %v1905 = vlaneseq
        %v1906 = vshrl.u32 %v1905, 7
        %v1907 = vadd.s32 %v1906, 8
        %v1908 = vadd.s32 %v1906, 16
        %v1909 = vadd.s32 %v1906, 24
        %v1910 = vadd.s32 %v1906, 32
        %v1911 = vadd.s32 %v1906, 40
        %v1912 = vadd.s32 %v1906, 48
        %v1913 = vadd.s32 %v1906, 56
        %v1914 = vadd.s32 %v1906, 64
        %v1915 = vadd.s32 %v1906, 72
        %v1916 = vadd.s32 %v1906, 80
        %v1917 = vadd.s32 %v1906, 88
        %v1918 = vadd.s32 %v1906, 96
        %v1919 = vadd.s32 %v1906, 104
        %v1920 = vadd.s32 %v1906, 112
        %v1921 = vadd.s32 %v1906, 120
        %vm1922 = vcmp.lt.s32.totalorder %v1906, 0
        %v1923 = vsub.s32 0, %v1906
        %v1924 = vsel %vm1922, %v1923, %v1906
        %v1925 = vshrl.u32 %v1924, 4
        %v1926 = vand.u32 %v1924, 15
        %v1927 = vsub.s32 0, %v1926
        %v1928 = vsel %vm1922, %v1927, %v1926
        %vm1929 = vcmp.lt.s32.totalorder %v1907, 0
        %v1930 = vsub.s32 0, %v1907
        %v1931 = vsel %vm1929, %v1930, %v1907
        %v1932 = vshrl.u32 %v1931, 4
        %v1933 = vand.u32 %v1931, 15
        %v1934 = vsub.s32 0, %v1933
        %v1935 = vsel %vm1929, %v1934, %v1933
        %vm1936 = vcmp.lt.s32.totalorder %v1908, 0
        %v1937 = vsub.s32 0, %v1908
        %v1938 = vsel %vm1936, %v1937, %v1908
        %v1939 = vshrl.u32 %v1938, 4
        %v1940 = vand.u32 %v1938, 15
        %v1941 = vsub.s32 0, %v1940
        %v1942 = vsel %vm1936, %v1941, %v1940
        %vm1943 = vcmp.lt.s32.totalorder %v1909, 0
        %v1944 = vsub.s32 0, %v1909
        %v1945 = vsel %vm1943, %v1944, %v1909
        %v1946 = vshrl.u32 %v1945, 4
        %v1947 = vand.u32 %v1945, 15
        %v1948 = vsub.s32 0, %v1947
        %v1949 = vsel %vm1943, %v1948, %v1947
        %vm1950 = vcmp.lt.s32.totalorder %v1910, 0
        %v1951 = vsub.s32 0, %v1910
        %v1952 = vsel %vm1950, %v1951, %v1910
        %v1953 = vshrl.u32 %v1952, 4
        %v1954 = vand.u32 %v1952, 15
        %v1955 = vsub.s32 0, %v1954
        %v1956 = vsel %vm1950, %v1955, %v1954
        %vm1957 = vcmp.lt.s32.totalorder %v1911, 0
        %v1958 = vsub.s32 0, %v1911
        %v1959 = vsel %vm1957, %v1958, %v1911
        %v1960 = vshrl.u32 %v1959, 4
        %v1961 = vand.u32 %v1959, 15
        %v1962 = vsub.s32 0, %v1961
        %v1963 = vsel %vm1957, %v1962, %v1961
        %vm1964 = vcmp.lt.s32.totalorder %v1912, 0
        %v1965 = vsub.s32 0, %v1912
        %v1966 = vsel %vm1964, %v1965, %v1912
        %v1967 = vshrl.u32 %v1966, 4
        %v1968 = vand.u32 %v1966, 15
        %v1969 = vsub.s32 0, %v1968
        %v1970 = vsel %vm1964, %v1969, %v1968
        %vm1971 = vcmp.lt.s32.totalorder %v1913, 0
        %v1972 = vsub.s32 0, %v1913
        %v1973 = vsel %vm1971, %v1972, %v1913
        %v1974 = vshrl.u32 %v1973, 4
        %v1975 = vand.u32 %v1973, 15
        %v1976 = vsub.s32 0, %v1975
        %v1977 = vsel %vm1971, %v1976, %v1975
        %vm1978 = vcmp.lt.s32.totalorder %v1914, 0
        %v1979 = vsub.s32 0, %v1914
        %v1980 = vsel %vm1978, %v1979, %v1914
        %v1981 = vshrl.u32 %v1980, 4
        %v1982 = vand.u32 %v1980, 15
        %v1983 = vsub.s32 0, %v1982
        %v1984 = vsel %vm1978, %v1983, %v1982
        %vm1985 = vcmp.lt.s32.totalorder %v1915, 0
        %v1986 = vsub.s32 0, %v1915
        %v1987 = vsel %vm1985, %v1986, %v1915
        %v1988 = vshrl.u32 %v1987, 4
        %v1989 = vand.u32 %v1987, 15
        %v1990 = vsub.s32 0, %v1989
        %v1991 = vsel %vm1985, %v1990, %v1989
        %vm1992 = vcmp.lt.s32.totalorder %v1916, 0
        %v1993 = vsub.s32 0, %v1916
        %v1994 = vsel %vm1992, %v1993, %v1916
        %v1995 = vshrl.u32 %v1994, 4
        %v1996 = vand.u32 %v1994, 15
        %v1997 = vsub.s32 0, %v1996
        %v1998 = vsel %vm1992, %v1997, %v1996
        %vm1999 = vcmp.lt.s32.totalorder %v1917, 0
        %v2000 = vsub.s32 0, %v1917
        %v2001 = vsel %vm1999, %v2000, %v1917
        %v2002 = vshrl.u32 %v2001, 4
        %v2003 = vand.u32 %v2001, 15
        %v2004 = vsub.s32 0, %v2003
        %v2005 = vsel %vm1999, %v2004, %v2003
        %vm2006 = vcmp.lt.s32.totalorder %v1918, 0
        %v2007 = vsub.s32 0, %v1918
        %v2008 = vsel %vm2006, %v2007, %v1918
        %v2009 = vshrl.u32 %v2008, 4
        %v2010 = vand.u32 %v2008, 15
        %v2011 = vsub.s32 0, %v2010
        %v2012 = vsel %vm2006, %v2011, %v2010
        %vm2013 = vcmp.lt.s32.totalorder %v1919, 0
        %v2014 = vsub.s32 0, %v1919
        %v2015 = vsel %vm2013, %v2014, %v1919
        %v2016 = vshrl.u32 %v2015, 4
        %v2017 = vand.u32 %v2015, 15
        %v2018 = vsub.s32 0, %v2017
        %v2019 = vsel %vm2013, %v2018, %v2017
        %vm2020 = vcmp.lt.s32.totalorder %v1920, 0
        %v2021 = vsub.s32 0, %v1920
        %v2022 = vsel %vm2020, %v2021, %v1920
        %v2023 = vshrl.u32 %v2022, 4
        %v2024 = vand.u32 %v2022, 15
        %v2025 = vsub.s32 0, %v2024
        %v2026 = vsel %vm2020, %v2025, %v2024
        %vm2027 = vcmp.lt.s32.totalorder %v1921, 0
        %v2028 = vsub.s32 0, %v1921
        %v2029 = vsel %vm2027, %v2028, %v1921
        %v2030 = vshrl.u32 %v2029, 4
        %v2031 = vand.u32 %v2029, 15
        %v2032 = vsub.s32 0, %v2031
        %v2033 = vsel %vm2027, %v2032, %v2031
        %vm2034 = vcmp.ne.s32.totalorder %v1928, 0
        %vm2035 = vcmp.ne.s32.totalorder %v1935, 0
        %vm2036 = vcmp.ne.s32.totalorder %v1942, 0
        %vm2037 = vcmp.ne.s32.totalorder %v1949, 0
        %vm2038 = vcmp.ne.s32.totalorder %v1956, 0
        %vm2039 = vcmp.ne.s32.totalorder %v1963, 0
        %vm2040 = vcmp.ne.s32.totalorder %v1970, 0
        %vm2041 = vcmp.ne.s32.totalorder %v1977, 0
        %vm2042 = vcmp.ne.s32.totalorder %v1984, 0
        %vm2043 = vcmp.ne.s32.totalorder %v1991, 0
        %vm2044 = vcmp.ne.s32.totalorder %v1998, 0
        %vm2045 = vcmp.ne.s32.totalorder %v2005, 0
        %vm2046 = vcmp.ne.s32.totalorder %v2012, 0
        %vm2047 = vcmp.ne.s32.totalorder %v2019, 0
        %vm2048 = vcmp.ne.s32.totalorder %v2026, 0
        %vm2049 = vcmp.ne.s32.totalorder %v2033, 0
        %vm2050 = vcmp.lt.s32.totalorder %v1928, 0
        %vm2051 = vcmp.lt.s32.totalorder %v1935, 0
        %vm2052 = vcmp.lt.s32.totalorder %v1942, 0
        %vm2053 = vcmp.lt.s32.totalorder %v1949, 0
        %vm2054 = vcmp.lt.s32.totalorder %v1956, 0
        %vm2055 = vcmp.lt.s32.totalorder %v1963, 0
        %vm2056 = vcmp.lt.s32.totalorder %v1970, 0
        %vm2057 = vcmp.lt.s32.totalorder %v1977, 0
        %vm2058 = vcmp.lt.s32.totalorder %v1984, 0
        %vm2059 = vcmp.lt.s32.totalorder %v1991, 0
        %vm2060 = vcmp.lt.s32.totalorder %v1998, 0
        %vm2061 = vcmp.lt.s32.totalorder %v2005, 0
        %vm2062 = vcmp.lt.s32.totalorder %v2012, 0
        %vm2063 = vcmp.lt.s32.totalorder %v2019, 0
        %vm2064 = vcmp.lt.s32.totalorder %v2026, 0
        %vm2065 = vcmp.lt.s32.totalorder %v2033, 0
        %vm2066 = vmand %vm2050, %vm2034
        %vm2067 = vmand %vm2051, %vm2035
        %vm2068 = vmand %vm2052, %vm2036
        %vm2069 = vmand %vm2053, %vm2037
        %vm2070 = vmand %vm2054, %vm2038
        %vm2071 = vmand %vm2055, %vm2039
        %vm2072 = vmand %vm2056, %vm2040
        %vm2073 = vmand %vm2057, %vm2041
        %vm2074 = vmand %vm2058, %vm2042
        %vm2075 = vmand %vm2059, %vm2043
        %vm2076 = vmand %vm2060, %vm2044
        %vm2077 = vmand %vm2061, %vm2045
        %vm2078 = vmand %vm2062, %vm2046
        %vm2079 = vmand %vm2063, %vm2047
        %vm2080 = vmand %vm2064, %vm2048
        %vm2081 = vmand %vm2065, %vm2049
        %v2082 = vadd.s32 %v1928, 16
        %v2083 = vadd.s32 %v1935, 16
        %v2084 = vadd.s32 %v1942, 16
        %v2085 = vadd.s32 %v1949, 16
        %v2086 = vadd.s32 %v1956, 16
        %v2087 = vadd.s32 %v1963, 16
        %v2088 = vadd.s32 %v1970, 16
        %v2089 = vadd.s32 %v1977, 16
        %v2090 = vadd.s32 %v1984, 16
        %v2091 = vadd.s32 %v1991, 16
        %v2092 = vadd.s32 %v1998, 16
        %v2093 = vadd.s32 %v2005, 16
        %v2094 = vadd.s32 %v2012, 16
        %v2095 = vadd.s32 %v2019, 16
        %v2096 = vadd.s32 %v2026, 16
        %v2097 = vadd.s32 %v2033, 16
        %v2098 = vsel %vm2066, %v2082, %v1928
        %v2099 = vsel %vm2067, %v2083, %v1935
        %v2100 = vsel %vm2068, %v2084, %v1942
        %v2101 = vsel %vm2069, %v2085, %v1949
        %v2102 = vsel %vm2070, %v2086, %v1956
        %v2103 = vsel %vm2071, %v2087, %v1963
        %v2104 = vsel %vm2072, %v2088, %v1970
        %v2105 = vsel %vm2073, %v2089, %v1977
        %v2106 = vsel %vm2074, %v2090, %v1984
        %v2107 = vsel %vm2075, %v2091, %v1991
        %v2108 = vsel %vm2076, %v2092, %v1998
        %v2109 = vsel %vm2077, %v2093, %v2005
        %v2110 = vsel %vm2078, %v2094, %v2012
        %v2111 = vsel %vm2079, %v2095, %v2019
        %v2112 = vsel %vm2080, %v2096, %v2026
        %v2113 = vsel %vm2081, %v2097, %v2033
        %v2114 = vrot.slane %v1889, 7
        %v2115 = vrot.slane %v1890, 7
        %v2116 = vrot.slane %v1891, 7
        %v2117 = vrot.slane %v1892, 7
        %v2118 = vrot.slane %v1893, 7
        %v2119 = vrot.slane %v1894, 7
        %v2120 = vrot.slane %v1895, 7
        %v2121 = vrot.slane %v1896, 7
        %v2122 = vrot.slane %v1897, 7
        %v2123 = vrot.slane %v1898, 7
        %v2124 = vrot.slane %v1899, 7
        %v2125 = vrot.slane %v1900, 7
        %v2126 = vrot.slane %v1901, 7
        %v2127 = vrot.slane %v1902, 7
        %v2128 = vrot.slane %v1903, 7
        %v2129 = vrot.slane %v1904, 7
        %vm2130 = vcmp.lt.s32.totalorder %v1906, 1
        %v2131 = vsel %vm2130, %v2128, %v2129
        %v2132 = vsel %vm2130, %v2127, %v2128
        %v2133 = vsel %vm2130, %v2126, %v2127
        %v2134 = vsel %vm2130, %v2125, %v2126
        %v2135 = vsel %vm2130, %v2124, %v2125
        %v2136 = vsel %vm2130, %v2123, %v2124
        %v2137 = vsel %vm2130, %v2122, %v2123
        %v2138 = vsel %vm2130, %v2121, %v2122
        %v2139 = vsel %vm2130, %v2120, %v2121
        %v2140 = vsel %vm2130, %v2119, %v2120
        %v2141 = vsel %vm2130, %v2118, %v2119
        %v2142 = vsel %vm2130, %v2117, %v2118
        %v2143 = vsel %vm2130, %v2116, %v2117
        %v2144 = vsel %vm2130, %v2115, %v2116
        %v2145 = vsel %vm2130, %v2114, %v2115
        %v2146 = vsel %vm2130, %v2129, %v2114
        %vm2147 = vcmp.ge.s32.totalorder %v2098, 1
        %vm2148 = vcmp.ge.s32.totalorder %v2099, 1
        %vm2149 = vcmp.ge.s32.totalorder %v2100, 1
        %vm2150 = vcmp.ge.s32.totalorder %v2101, 1
        %vm2151 = vcmp.ge.s32.totalorder %v2102, 1
        %vm2152 = vcmp.ge.s32.totalorder %v2103, 1
        %vm2153 = vcmp.ge.s32.totalorder %v2104, 1
        %vm2154 = vcmp.ge.s32.totalorder %v2105, 1
        %vm2155 = vcmp.ge.s32.totalorder %v2106, 1
        %vm2156 = vcmp.ge.s32.totalorder %v2107, 1
        %vm2157 = vcmp.ge.s32.totalorder %v2108, 1
        %vm2158 = vcmp.ge.s32.totalorder %v2109, 1
        %vm2159 = vcmp.ge.s32.totalorder %v2110, 1
        %vm2160 = vcmp.ge.s32.totalorder %v2111, 1
        %vm2161 = vcmp.ge.s32.totalorder %v2112, 1
        %vm2162 = vcmp.ge.s32.totalorder %v2113, 1
        %v2163 = vsel %vm2147, 1, 0
        %v2164 = vsel %vm2148, 1, 0
        %v2165 = vsel %vm2149, 1, 0
        %v2166 = vsel %vm2150, 1, 0
        %v2167 = vsel %vm2151, 1, 0
        %v2168 = vsel %vm2152, 1, 0
        %v2169 = vsel %vm2153, 1, 0
        %v2170 = vsel %vm2154, 1, 0
        %v2171 = vsel %vm2155, 1, 0
        %v2172 = vsel %vm2156, 1, 0
        %v2173 = vsel %vm2157, 1, 0
        %v2174 = vsel %vm2158, 1, 0
        %v2175 = vsel %vm2159, 1, 0
        %v2176 = vsel %vm2160, 1, 0
        %v2177 = vsel %vm2161, 1, 0
        %v2178 = vsel %vm2162, 1, 0
        %vm2179 = vcmp.eq.s32.totalorder %v2163, 1
        %vm2180 = vcmp.eq.s32.totalorder %v2164, 1
        %vm2181 = vcmp.eq.s32.totalorder %v2165, 1
        %vm2182 = vcmp.eq.s32.totalorder %v2166, 1
        %vm2183 = vcmp.eq.s32.totalorder %v2167, 1
        %vm2184 = vcmp.eq.s32.totalorder %v2168, 1
        %vm2185 = vcmp.eq.s32.totalorder %v2169, 1
        %vm2186 = vcmp.eq.s32.totalorder %v2170, 1
        %vm2187 = vcmp.eq.s32.totalorder %v2171, 1
        %vm2188 = vcmp.eq.s32.totalorder %v2172, 1
        %vm2189 = vcmp.eq.s32.totalorder %v2173, 1
        %vm2190 = vcmp.eq.s32.totalorder %v2174, 1
        %vm2191 = vcmp.eq.s32.totalorder %v2175, 1
        %vm2192 = vcmp.eq.s32.totalorder %v2176, 1
        %vm2193 = vcmp.eq.s32.totalorder %v2177, 1
        %vm2194 = vcmp.eq.s32.totalorder %v2178, 1
        %v2195 = vsel %vm2179, %v2146, 0.0
        %v2196 = vsel %vm2180, %v2145, 0.0
        %v2197 = vsel %vm2181, %v2144, 0.0
        %v2198 = vsel %vm2182, %v2143, 0.0
        %v2199 = vsel %vm2183, %v2142, 0.0
        %v2200 = vsel %vm2184, %v2141, 0.0
        %v2201 = vsel %vm2185, %v2140, 0.0
        %v2202 = vsel %vm2186, %v2139, 0.0
        %v2203 = vsel %vm2187, %v2138, 0.0
        %v2204 = vsel %vm2188, %v2137, 0.0
        %v2205 = vsel %vm2189, %v2136, 0.0
        %v2206 = vsel %vm2190, %v2135, 0.0
        %v2207 = vsel %vm2191, %v2134, 0.0
        %v2208 = vsel %vm2192, %v2133, 0.0
        %v2209 = vsel %vm2193, %v2132, 0.0
        %v2210 = vsel %vm2194, %v2131, 0.0
        %v2211 = vrot.slane %v1889, 1
        %v2212 = vrot.slane %v1890, 1
        %v2213 = vrot.slane %v1891, 1
        %v2214 = vrot.slane %v1892, 1
        %v2215 = vrot.slane %v1893, 1
        %v2216 = vrot.slane %v1894, 1
        %v2217 = vrot.slane %v1895, 1
        %v2218 = vrot.slane %v1896, 1
        %v2219 = vrot.slane %v1897, 1
        %v2220 = vrot.slane %v1898, 1
        %v2221 = vrot.slane %v1899, 1
        %v2222 = vrot.slane %v1900, 1
        %v2223 = vrot.slane %v1901, 1
        %v2224 = vrot.slane %v1902, 1
        %v2225 = vrot.slane %v1903, 1
        %v2226 = vrot.slane %v1904, 1
        %vm2227 = vcmp.lt.s32.totalorder %v1906, 7
        %v2228 = vsel %vm2227, %v2225, %v2226
        %v2229 = vsel %vm2227, %v2224, %v2225
        %v2230 = vsel %vm2227, %v2223, %v2224
        %v2231 = vsel %vm2227, %v2222, %v2223
        %v2232 = vsel %vm2227, %v2221, %v2222
        %v2233 = vsel %vm2227, %v2220, %v2221
        %v2234 = vsel %vm2227, %v2219, %v2220
        %v2235 = vsel %vm2227, %v2218, %v2219
        %v2236 = vsel %vm2227, %v2217, %v2218
        %v2237 = vsel %vm2227, %v2216, %v2217
        %v2238 = vsel %vm2227, %v2215, %v2216
        %v2239 = vsel %vm2227, %v2214, %v2215
        %v2240 = vsel %vm2227, %v2213, %v2214
        %v2241 = vsel %vm2227, %v2212, %v2213
        %v2242 = vsel %vm2227, %v2211, %v2212
        %v2243 = vsel %vm2227, %v2226, %v2211
        %vm2244 = vcmp.lt.s32.totalorder %v2098, 15
        %vm2245 = vcmp.lt.s32.totalorder %v2099, 15
        %vm2246 = vcmp.lt.s32.totalorder %v2100, 15
        %vm2247 = vcmp.lt.s32.totalorder %v2101, 15
        %vm2248 = vcmp.lt.s32.totalorder %v2102, 15
        %vm2249 = vcmp.lt.s32.totalorder %v2103, 15
        %vm2250 = vcmp.lt.s32.totalorder %v2104, 15
        %vm2251 = vcmp.lt.s32.totalorder %v2105, 15
        %vm2252 = vcmp.lt.s32.totalorder %v2106, 15
        %vm2253 = vcmp.lt.s32.totalorder %v2107, 15
        %vm2254 = vcmp.lt.s32.totalorder %v2108, 15
        %vm2255 = vcmp.lt.s32.totalorder %v2109, 15
        %vm2256 = vcmp.lt.s32.totalorder %v2110, 15
        %vm2257 = vcmp.lt.s32.totalorder %v2111, 15
        %vm2258 = vcmp.lt.s32.totalorder %v2112, 15
        %vm2259 = vcmp.lt.s32.totalorder %v2113, 15
        %v2260 = vsel %vm2244, 1, 0
        %v2261 = vsel %vm2245, 1, 0
        %v2262 = vsel %vm2246, 1, 0
        %v2263 = vsel %vm2247, 1, 0
        %v2264 = vsel %vm2248, 1, 0
        %v2265 = vsel %vm2249, 1, 0
        %v2266 = vsel %vm2250, 1, 0
        %v2267 = vsel %vm2251, 1, 0
        %v2268 = vsel %vm2252, 1, 0
        %v2269 = vsel %vm2253, 1, 0
        %v2270 = vsel %vm2254, 1, 0
        %v2271 = vsel %vm2255, 1, 0
        %v2272 = vsel %vm2256, 1, 0
        %v2273 = vsel %vm2257, 1, 0
        %v2274 = vsel %vm2258, 1, 0
        %v2275 = vsel %vm2259, 1, 0
        %vm2276 = vcmp.eq.s32.totalorder %v2260, 1
        %vm2277 = vcmp.eq.s32.totalorder %v2261, 1
        %vm2278 = vcmp.eq.s32.totalorder %v2262, 1
        %vm2279 = vcmp.eq.s32.totalorder %v2263, 1
        %vm2280 = vcmp.eq.s32.totalorder %v2264, 1
        %vm2281 = vcmp.eq.s32.totalorder %v2265, 1
        %vm2282 = vcmp.eq.s32.totalorder %v2266, 1
        %vm2283 = vcmp.eq.s32.totalorder %v2267, 1
        %vm2284 = vcmp.eq.s32.totalorder %v2268, 1
        %vm2285 = vcmp.eq.s32.totalorder %v2269, 1
        %vm2286 = vcmp.eq.s32.totalorder %v2270, 1
        %vm2287 = vcmp.eq.s32.totalorder %v2271, 1
        %vm2288 = vcmp.eq.s32.totalorder %v2272, 1
        %vm2289 = vcmp.eq.s32.totalorder %v2273, 1
        %vm2290 = vcmp.eq.s32.totalorder %v2274, 1
        %vm2291 = vcmp.eq.s32.totalorder %v2275, 1
        %v2292 = vsel %vm2276, %v2242, 0.0
        %v2293 = vsel %vm2277, %v2241, 0.0
        %v2294 = vsel %vm2278, %v2240, 0.0
        %v2295 = vsel %vm2279, %v2239, 0.0
        %v2296 = vsel %vm2280, %v2238, 0.0
        %v2297 = vsel %vm2281, %v2237, 0.0
        %v2298 = vsel %vm2282, %v2236, 0.0
        %v2299 = vsel %vm2283, %v2235, 0.0
        %v2300 = vsel %vm2284, %v2234, 0.0
        %v2301 = vsel %vm2285, %v2233, 0.0
        %v2302 = vsel %vm2286, %v2232, 0.0
        %v2303 = vsel %vm2287, %v2231, 0.0
        %v2304 = vsel %vm2288, %v2230, 0.0
        %v2305 = vsel %vm2289, %v2229, 0.0
        %v2306 = vsel %vm2290, %v2228, 0.0
        %v2307 = vsel %vm2291, %v2243, 0.0
        %v2308 = vld [vmem:[%s6] sm:$0xff]
        %v2309 = vld [vmem:[%s6 + $0x8] sm:$0xff]
        %v2310 = vld [vmem:[%s6 + $0x10] sm:$0xff]
        %v2311 = vld [vmem:[%s6 + $0x18] sm:$0xff]
        %v2312 = vld [vmem:[%s6 + $0x20] sm:$0xff]
        %v2313 = vld [vmem:[%s6 + $0x28] sm:$0xff]
        %v2314 = vld [vmem:[%s6 + $0x30] sm:$0xff]
        %v2315 = vld [vmem:[%s6 + $0x38] sm:$0xff]
        %v2316 = vld [vmem:[%s6 + $0x40] sm:$0xff]
        %v2317 = vld [vmem:[%s6 + $0x48] sm:$0xff]
        %v2318 = vld [vmem:[%s6 + $0x50] sm:$0xff]
        %v2319 = vld [vmem:[%s6 + $0x58] sm:$0xff]
        %v2320 = vld [vmem:[%s6 + $0x60] sm:$0xff]
        %v2321 = vld [vmem:[%s6 + $0x68] sm:$0xff]
        %v2322 = vld [vmem:[%s6 + $0x70] sm:$0xff]
        %v2323 = vld [vmem:[%s6 + $0x78] sm:$0xff]
        %v2324 = vld [vmem:[%s6 + $0x80] sm:$0xff]
        %v2325 = vld [vmem:[%s6 + $0x88] sm:$0xff]
        %v2326 = vld [vmem:[%s6 + $0x90] sm:$0xff]
        %v2327 = vld [vmem:[%s6 + $0x98] sm:$0xff]
        %v2328 = vld [vmem:[%s6 + $0xa0] sm:$0xff]
        %v2329 = vld [vmem:[%s6 + $0xa8] sm:$0xff]
        %v2330 = vld [vmem:[%s6 + $0xb0] sm:$0xff]
        %v2331 = vld [vmem:[%s6 + $0xb8] sm:$0xff]
        %v2332 = vld [vmem:[%s6 + $0xc0] sm:$0xff]
        %v2333 = vld [vmem:[%s6 + $0xc8] sm:$0xff]
        %v2334 = vld [vmem:[%s6 + $0xd0] sm:$0xff]
        %v2335 = vld [vmem:[%s6 + $0xd8] sm:$0xff]
        %v2336 = vld [vmem:[%s6 + $0xe0] sm:$0xff]
        %v2337 = vld [vmem:[%s6 + $0xe8] sm:$0xff]
        %v2338 = vld [vmem:[%s6 + $0xf0] sm:$0xff]
        %v2339 = vld [vmem:[%s6 + $0xf8] sm:$0xff]
        %v2340 = vld [vmem:[%s6 + $0x100] sm:$0xff]
        %v2341 = vld [vmem:[%s6 + $0x108] sm:$0xff]
        %v2342 = vld [vmem:[%s6 + $0x110] sm:$0xff]
        %v2343 = vld [vmem:[%s6 + $0x118] sm:$0xff]
        %v2344 = vld [vmem:[%s6 + $0x120] sm:$0xff]
        %v2345 = vld [vmem:[%s6 + $0x128] sm:$0xff]
        %v2346 = vld [vmem:[%s6 + $0x130] sm:$0xff]
        %v2347 = vld [vmem:[%s6 + $0x138] sm:$0xff]
        %v2348 = vld [vmem:[%s6 + $0x140] sm:$0xff]
        %v2349 = vld [vmem:[%s6 + $0x148] sm:$0xff]
        %v2350 = vld [vmem:[%s6 + $0x150] sm:$0xff]
        %v2351 = vld [vmem:[%s6 + $0x158] sm:$0xff]
        %v2352 = vld [vmem:[%s6 + $0x160] sm:$0xff]
        %v2353 = vld [vmem:[%s6 + $0x168] sm:$0xff]
        %v2354 = vld [vmem:[%s6 + $0x170] sm:$0xff]
        %v2355 = vld [vmem:[%s6 + $0x178] sm:$0xff]
        %v2356 = vld [vmem:[#allocation10] sm:$0x1]
        %v2358 = vlaneseq
        %v2359 = vshrl.u32 %v2358, 7
        %v2360 = vsub.s32 0, %v2359
        %v2361 = vrot.slane %v2356, %v2360
        %2363 = vmatprep.subr.mxu0 0.0
        %2364 = vmatpush1.msra.mxu0 %v2308
        %2365 = vmatprep.subr.mxu0 0.0
        %2366 = vmatpush1.msra.mxu0 %v2309
        %2367 = vmatprep.subr.mxu0 0.0
        %2368 = vmatpush1.msra.mxu0 %v2310
        %2369 = vmatprep.subr.mxu0 0.0
        %2370 = vmatpush1.msra.mxu0 %v2311
        %2371 = vmatprep.subr.mxu0 0.0
        %2372 = vmatpush1.msra.mxu0 %v2312
        %2373 = vmatprep.subr.mxu0 0.0
        %2374 = vmatpush1.msra.mxu0 %v2313
        %2375 = vmatprep.subr.mxu0 0.0
        %2376 = vmatpush1.msra.mxu0 %v2314
        %2377 = vmatprep.subr.mxu0 0.0
        %2378 = vmatpush1.msra.mxu0 %v2315
        %2379 = vmatprep.subr.mxu0 0.0
        %2380 = vmatpush1.msra.mxu0 %v2316
        %2381 = vmatprep.subr.mxu0 0.0
        %2382 = vmatpush1.msra.mxu0 %v2317
        %2383 = vmatprep.subr.mxu0 0.0
        %2384 = vmatpush1.msra.mxu0 %v2318
        %2385 = vmatprep.subr.mxu0 0.0
        %2386 = vmatpush1.msra.mxu0 %v2319
        %2387 = vmatprep.subr.mxu0 0.0
        %2388 = vmatpush1.msra.mxu0 %v2320
        %2389 = vmatprep.subr.mxu0 0.0
        %2390 = vmatpush1.msra.mxu0 %v2321
        %2391 = vmatprep.subr.mxu0 0.0
        %2392 = vmatpush1.msra.mxu0 %v2322
        %2393 = vmatprep.subr.mxu0 0.0
        %2394 = vmatpush1.msra.mxu0 %v2323
        %2395 = vmatprep.subr.mxu0 0.0
        %2396 = vmatpush1.msra.mxu0 %v2324
        %2397 = vmatprep.subr.mxu0 0.0
        %2398 = vmatpush1.msra.mxu0 %v2325
        %2399 = vmatprep.subr.mxu0 0.0
        %2400 = vmatpush1.msra.mxu0 %v2326
        %2401 = vmatprep.subr.mxu0 0.0
        %2402 = vmatpush1.msra.mxu0 %v2327
        %2403 = vmatprep.subr.mxu0 0.0
        %2404 = vmatpush1.msra.mxu0 %v2328
        %2405 = vmatprep.subr.mxu0 0.0
        %2406 = vmatpush1.msra.mxu0 %v2329
        %2407 = vmatprep.subr.mxu0 0.0
        %2408 = vmatpush1.msra.mxu0 %v2330
        %2409 = vmatprep.subr.mxu0 0.0
        %2410 = vmatpush1.msra.mxu0 %v2331
        %2411 = vmatprep.subr.mxu0 0.0
        %2412 = vmatpush1.msra.mxu0 %v2332
        %2413 = vmatprep.subr.mxu0 0.0
        %2414 = vmatpush1.msra.mxu0 %v2333
        %2415 = vmatprep.subr.mxu0 0.0
        %2416 = vmatpush1.msra.mxu0 %v2334
        %2417 = vmatprep.subr.mxu0 0.0
        %2418 = vmatpush1.msra.mxu0 %v2335
        %2419 = vmatprep.subr.mxu0 0.0
        %2420 = vmatpush1.msra.mxu0 %v2336
        %2421 = vmatprep.subr.mxu0 0.0
        %2422 = vmatpush1.msra.mxu0 %v2337
        %2423 = vmatprep.subr.mxu0 0.0
        %2424 = vmatpush1.msra.mxu0 %v2338
        %2425 = vmatprep.subr.mxu0 0.0
        %2426 = vmatpush1.msra.mxu0 %v2339
        %2427 = vmatprep.mubr.f32.mxu0 %v1889
        %2428 = vmatmul.mubr.f32.gmra.mrb[0].mxu0 %v2195
        %v2429 = vpop.f32.mrb[0].mxu0
        %v2430 = vadd.f32 %v2361, %v2429
        %v2431 = vpop.f32.mrb[0].mxu0
        %2432 = vmatprep.mubr.f32.mxu0 %v1890
        %2433 = vmatmul.mubr.f32.gmra.mrb[0].mxu0 %v2196
        %v2434 = vpop.f32.mrb[0].mxu0
        %v2435 = vadd.f32 %v2361, %v2434
        %v2436 = vpop.f32.mrb[0].mxu0
        %2437 = vmatprep.mubr.f32.mxu0 %v1891
        %2438 = vmatmul.mubr.f32.gmra.mrb[0].mxu0 %v2197
        %v2439 = vpop.f32.mrb[0].mxu0
        %v2440 = vadd.f32 %v2361, %v2439
        %v2441 = vpop.f32.mrb[0].mxu0
        %2442 = vmatprep.mubr.f32.mxu0 %v1892
        %2443 = vmatmul.mubr.f32.gmra.mrb[0].mxu0 %v2198
        %v2444 = vpop.f32.mrb[0].mxu0
        %v2445 = vadd.f32 %v2361, %v2444
        %v2446 = vpop.f32.mrb[0].mxu0
        %2447 = vmatprep.mubr.f32.mxu0 %v1893
        %2448 = vmatmul.mubr.f32.gmra.mrb[0].mxu0 %v2199
        %v2449 = vpop.f32.mrb[0].mxu0
        %v2450 = vadd.f32 %v2361, %v2449
        %v2451 = vpop.f32.mrb[0].mxu0
        %2452 = vmatprep.mubr.f32.mxu0 %v1894
        %2453 = vmatmul.mubr.f32.gmra.mrb[0].mxu0 %v2200
        %v2454 = vpop.f32.mrb[0].mxu0
        %v2455 = vadd.f32 %v2361, %v2454
        %v2456 = vpop.f32.mrb[0].mxu0
        %2457 = vmatprep.mubr.f32.mxu0 %v1895
        %2458 = vmatmul.mubr.f32.gmra.mrb[0].mxu0 %v2201
        %v2459 = vpop.f32.mrb[0].mxu0
        %v2460 = vadd.f32 %v2361, %v2459
        %v2461 = vpop.f32.mrb[0].mxu0
        %2462 = vmatprep.mubr.f32.mxu0 %v1896
        %2463 = vmatmul.mubr.f32.gmra.mrb[0].mxu0 %v2202
        %v2464 = vpop.f32.mrb[0].mxu0
        %v2465 = vadd.f32 %v2361, %v2464
        %v2466 = vpop.f32.mrb[0].mxu0
        %2467 = vmatprep.mubr.f32.mxu0 %v1897
        %2468 = vmatmul.mubr.f32.gmra.mrb[0].mxu0 %v2203
        %v2469 = vpop.f32.mrb[0].mxu0
        %v2470 = vadd.f32 %v2361, %v2469
        %v2471 = vpop.f32.mrb[0].mxu0
        %2472 = vmatprep.mubr.f32.mxu0 %v1898
        %2473 = vmatmul.mubr.f32.gmra.mrb[0].mxu0 %v2204
        %v2474 = vpop.f32.mrb[0].mxu0
        %v2475 = vadd.f32 %v2361, %v2474
        %v2476 = vpop.f32.mrb[0].mxu0
        %2477 = vmatprep.mubr.f32.mxu0 %v1899
        %2478 = vmatmul.mubr.f32.gmra.mrb[0].mxu0 %v2205
        %v2479 = vpop.f32.mrb[0].mxu0
        %v2480 = vadd.f32 %v2361, %v2479
        %v2481 = vpop.f32.mrb[0].mxu0
        %2482 = vmatprep.mubr.f32.mxu0 %v1900
        %2483 = vmatmul.mubr.f32.gmra.mrb[0].mxu0 %v2206
        %v2484 = vpop.f32.mrb[0].mxu0
        %v2485 = vadd.f32 %v2361, %v2484
        %v2486 = vpop.f32.mrb[0].mxu0
        %2487 = vmatprep.mubr.f32.mxu0 %v1901
        %2488 = vmatmul.mubr.f32.gmra.mrb[0].mxu0 %v2207
        %v2489 = vpop.f32.mrb[0].mxu0
        %v2490 = vadd.f32 %v2361, %v2489
        %v2491 = vpop.f32.mrb[0].mxu0
        %2492 = vmatprep.mubr.f32.mxu0 %v1902
        %2493 = vmatmul.mubr.f32.gmra.mrb[0].mxu0 %v2208
        %v2494 = vpop.f32.mrb[0].mxu0
        %v2495 = vadd.f32 %v2361, %v2494
        %v2496 = vpop.f32.mrb[0].mxu0
        %2497 = vmatprep.mubr.f32.mxu0 %v1903
        %2498 = vmatmul.mubr.f32.gmra.mrb[0].mxu0 %v2209
        %v2499 = vpop.f32.mrb[0].mxu0
        %v2500 = vadd.f32 %v2361, %v2499
        %v2501 = vpop.f32.mrb[0].mxu0
        %2502 = vmatprep.mubr.f32.mxu0 %v1904
        %2503 = vmatmul.mubr.f32.gmra.mrb[0].mxu0 %v2210
        %v2504 = vpop.f32.mrb[0].mxu0
        %v2505 = vadd.f32 %v2361, %v2504
        %v2506 = vpop.f32.mrb[0].mxu0
        %2507 = vdwg.mxu0
        %2508 = vmatprep.subr.mxu0 0.0
        %2509 = vmatpush1.msra.mxu0 %v2340
        %2510 = vmatprep.subr.mxu0 0.0
        %2511 = vmatpush1.msra.mxu0 %v2341
        %2512 = vmatprep.subr.mxu0 0.0
        %2513 = vmatpush1.msra.mxu0 %v2342
        %2514 = vmatprep.subr.mxu0 0.0
        %2515 = vmatpush1.msra.mxu0 %v2343
        %2516 = vmatprep.subr.mxu0 0.0
        %2517 = vmatpush1.msra.mxu0 %v2344
        %2518 = vmatprep.subr.mxu0 0.0
        %2519 = vmatpush1.msra.mxu0 %v2345
        %2520 = vmatprep.subr.mxu0 0.0
        %2521 = vmatpush1.msra.mxu0 %v2346
        %2522 = vmatprep.subr.mxu0 0.0
        %2523 = vmatpush1.msra.mxu0 %v2347
        %2524 = vmatprep.subr.mxu0 0.0
        %2525 = vmatpush1.msra.mxu0 %v2348
        %2526 = vmatprep.subr.mxu0 0.0
        %2527 = vmatpush1.msra.mxu0 %v2349
        %2528 = vmatprep.subr.mxu0 0.0
        %2529 = vmatpush1.msra.mxu0 %v2350
        %2530 = vmatprep.subr.mxu0 0.0
        %2531 = vmatpush1.msra.mxu0 %v2351
        %2532 = vmatprep.subr.mxu0 0.0
        %2533 = vmatpush1.msra.mxu0 %v2352
        %2534 = vmatprep.subr.mxu0 0.0
        %2535 = vmatpush1.msra.mxu0 %v2353
        %2536 = vmatprep.subr.mxu0 0.0
        %2537 = vmatpush1.msra.mxu0 %v2354
        %2538 = vmatprep.subr.mxu0 0.0
        %2539 = vmatpush1.msra.mxu0 %v2355
        %2540 = vmatprep.subr.mxu0 0.0
        %2541 = vmatpush1.msra.mxu0 0.0
        %2542 = vmatprep.subr.mxu0 0.0
        %2543 = vmatpush1.msra.mxu0 0.0
        %2544 = vmatprep.subr.mxu0 0.0
        %2545 = vmatpush1.msra.mxu0 0.0
        %2546 = vmatprep.subr.mxu0 0.0
        %2547 = vmatpush1.msra.mxu0 0.0
        %2548 = vmatprep.subr.mxu0 0.0
        %2549 = vmatpush1.msra.mxu0 0.0
        %2550 = vmatprep.subr.mxu0 0.0
        %2551 = vmatpush1.msra.mxu0 0.0
        %2552 = vmatprep.subr.mxu0 0.0
        %2553 = vmatpush1.msra.mxu0 0.0
        %2554 = vmatprep.subr.mxu0 0.0
        %2555 = vmatpush1.msra.mxu0 0.0
        %2556 = vmatprep.subr.mxu0 0.0
        %2557 = vmatpush1.msra.mxu0 0.0
        %2558 = vmatprep.subr.mxu0 0.0
        %2559 = vmatpush1.msra.mxu0 0.0
        %2560 = vmatprep.subr.mxu0 0.0
        %2561 = vmatpush1.msra.mxu0 0.0
        %2562 = vmatprep.subr.mxu0 0.0
        %2563 = vmatpush1.msra.mxu0 0.0
        %2564 = vmatprep.subr.mxu0 0.0
        %2565 = vmatpush1.msra.mxu0 0.0
        %2566 = vmatprep.subr.mxu0 0.0
        %2567 = vmatpush1.msra.mxu0 0.0
        %2568 = vmatprep.subr.mxu0 0.0
        %2569 = vmatpush1.msra.mxu0 0.0
        %2570 = vmatprep.subr.mxu0 0.0
        %2571 = vmatpush1.msra.mxu0 0.0
        %2572 = vmatprep.mubr.f32.mxu0 0.0
        %2573 = vmatmul.mubr.f32.gmra.mrb[0].mxu0 %v2292
        %v2574 = vpop.f32.mrb[0].mxu0
        %v2575 = vadd.f32 %v2430, %v2574
        %v2576 = vpop.f32.mrb[0].mxu0
        %2577 = vmatprep.mubr.f32.mxu0 0.0
        %2578 = vmatmul.mubr.f32.gmra.mrb[0].mxu0 %v2293
        %v2579 = vpop.f32.mrb[0].mxu0
        %v2580 = vadd.f32 %v2435, %v2579
        %v2581 = vpop.f32.mrb[0].mxu0
        %2582 = vmatprep.mubr.f32.mxu0 0.0
        %2583 = vmatmul.mubr.f32.gmra.mrb[0].mxu0 %v2294
        %v2584 = vpop.f32.mrb[0].mxu0
        %v2585 = vadd.f32 %v2440, %v2584
        %v2586 = vpop.f32.mrb[0].mxu0
        %2587 = vmatprep.mubr.f32.mxu0 0.0
        %2588 = vmatmul.mubr.f32.gmra.mrb[0].mxu0 %v2295
        %v2589 = vpop.f32.mrb[0].mxu0
        %v2590 = vadd.f32 %v2445, %v2589
        %v2591 = vpop.f32.mrb[0].mxu0
        %2592 = vmatprep.mubr.f32.mxu0 0.0
        %2593 = vmatmul.mubr.f32.gmra.mrb[0].mxu0 %v2296
        %v2594 = vpop.f32.mrb[0].mxu0
        %v2595 = vadd.f32 %v2450, %v2594
        %v2596 = vpop.f32.mrb[0].mxu0
        %2597 = vmatprep.mubr.f32.mxu0 0.0
        %2598 = vmatmul.mubr.f32.gmra.mrb[0].mxu0 %v2297
        %v2599 = vpop.f32.mrb[0].mxu0
        %v2600 = vadd.f32 %v2455, %v2599
        %v2601 = vpop.f32.mrb[0].mxu0
        %2602 = vmatprep.mubr.f32.mxu0 0.0
        %2603 = vmatmul.mubr.f32.gmra.mrb[0].mxu0 %v2298
        %v2604 = vpop.f32.mrb[0].mxu0
        %v2605 = vadd.f32 %v2460, %v2604
        %v2606 = vpop.f32.mrb[0].mxu0
        %2607 = vmatprep.mubr.f32.mxu0 0.0
        %2608 = vmatmul.mubr.f32.gmra.mrb[0].mxu0 %v2299
        %v2609 = vpop.f32.mrb[0].mxu0
        %v2610 = vadd.f32 %v2465, %v2609
        %v2611 = vpop.f32.mrb[0].mxu0
        %2612 = vmatprep.mubr.f32.mxu0 0.0
        %2613 = vmatmul.mubr.f32.gmra.mrb[0].mxu0 %v2300
        %v2614 = vpop.f32.mrb[0].mxu0
        %v2615 = vadd.f32 %v2470, %v2614
        %v2616 = vpop.f32.mrb[0].mxu0
        %2617 = vmatprep.mubr.f32.mxu0 0.0
        %2618 = vmatmul.mubr.f32.gmra.mrb[0].mxu0 %v2301
        %v2619 = vpop.f32.mrb[0].mxu0
        %v2620 = vadd.f32 %v2475, %v2619
        %v2621 = vpop.f32.mrb[0].mxu0
        %2622 = vmatprep.mubr.f32.mxu0 0.0
        %2623 = vmatmul.mubr.f32.gmra.mrb[0].mxu0 %v2302
        %v2624 = vpop.f32.mrb[0].mxu0
        %v2625 = vadd.f32 %v2480, %v2624
        %v2626 = vpop.f32.mrb[0].mxu0
        %2627 = vmatprep.mubr.f32.mxu0 0.0
        %2628 = vmatmul.mubr.f32.gmra.mrb[0].mxu0 %v2303
        %v2629 = vpop.f32.mrb[0].mxu0
        %v2630 = vadd.f32 %v2485, %v2629
        %v2631 = vpop.f32.mrb[0].mxu0
        %2632 = vmatprep.mubr.f32.mxu0 0.0
        %2633 = vmatmul.mubr.f32.gmra.mrb[0].mxu0 %v2304
        %v2634 = vpop.f32.mrb[0].mxu0
        %v2635 = vadd.f32 %v2490, %v2634
        %v2636 = vpop.f32.mrb[0].mxu0
        %2637 = vmatprep.mubr.f32.mxu0 0.0
        %2638 = vmatmul.mubr.f32.gmra.mrb[0].mxu0 %v2305
        %v2639 = vpop.f32.mrb[0].mxu0
        %v2640 = vadd.f32 %v2495, %v2639
        %v2641 = vpop.f32.mrb[0].mxu0
        %2642 = vmatprep.mubr.f32.mxu0 0.0
        %2643 = vmatmul.mubr.f32.gmra.mrb[0].mxu0 %v2306
        %v2644 = vpop.f32.mrb[0].mxu0
        %v2645 = vadd.f32 %v2500, %v2644
        %v2646 = vpop.f32.mrb[0].mxu0
        %2647 = vmatprep.mubr.f32.mxu0 0.0
        %2648 = vmatmul.mubr.f32.gmra.mrb[0].mxu0 %v2307
        %v2649 = vpop.f32.mrb[0].mxu0
        %v2650 = vadd.f32 %v2505, %v2649
        %v2651 = vpop.f32.mrb[0].mxu0
        %2652 = vdwg.mxu0
        %v2653 = vld [vmem:[#allocation11] sm:$0x1]
        %v2654 = vld [vmem:[#allocation13] sm:$0x1]
        %v2655 = vmul.f32 %v2575, %v2575
        %v2656 = vmul.f32 %v2580, %v2580
        %v2657 = vmul.f32 %v2585, %v2585
        %v2658 = vmul.f32 %v2590, %v2590
        %v2659 = vmul.f32 %v2595, %v2595
        %v2660 = vmul.f32 %v2600, %v2600
        %v2661 = vmul.f32 %v2605, %v2605
        %v2662 = vmul.f32 %v2610, %v2610
        %v2663 = vmul.f32 %v2615, %v2615
        %v2664 = vmul.f32 %v2620, %v2620
        %v2665 = vmul.f32 %v2625, %v2625
        %v2666 = vmul.f32 %v2630, %v2630
        %v2667 = vmul.f32 %v2635, %v2635
        %v2668 = vmul.f32 %v2640, %v2640
        %v2669 = vmul.f32 %v2645, %v2645
        %v2670 = vmul.f32 %v2650, %v2650
        %2671 = vmatprep.subr.mxu0 %v2655
        %2672 = vmatpush1.msra.mxu0 %v2575
        %2673 = vmatprep.subr.mxu0 %v2656
        %2674 = vmatpush1.msra.mxu0 %v2580
        %2675 = vmatprep.subr.mxu0 %v2657
        %2676 = vmatpush1.msra.mxu0 %v2585
        %2677 = vmatprep.subr.mxu0 %v2658
        %2678 = vmatpush1.msra.mxu0 %v2590
        %2679 = vmatprep.subr.mxu0 %v2659
        %2680 = vmatpush1.msra.mxu0 %v2595
        %2681 = vmatprep.subr.mxu0 %v2660
        %2682 = vmatpush1.msra.mxu0 %v2600
        %2683 = vmatprep.subr.mxu0 %v2661
        %2684 = vmatpush1.msra.mxu0 %v2605
        %2685 = vmatprep.subr.mxu0 %v2662
        %2686 = vmatpush1.msra.mxu0 %v2610
        %2687 = vmatprep.subr.mxu0 %v2663
        %2688 = vmatpush1.msra.mxu0 %v2615
        %2689 = vmatprep.subr.mxu0 %v2664
        %2690 = vmatpush1.msra.mxu0 %v2620
        %2691 = vmatprep.subr.mxu0 %v2665
        %2692 = vmatpush1.msra.mxu0 %v2625
        %2693 = vmatprep.subr.mxu0 %v2666
        %2694 = vmatpush1.msra.mxu0 %v2630
        %2695 = vmatprep.subr.mxu0 %v2667
        %2696 = vmatpush1.msra.mxu0 %v2635
        %2697 = vmatprep.subr.mxu0 %v2668
        %2698 = vmatpush1.msra.mxu0 %v2640
        %2699 = vmatprep.subr.mxu0 %v2669
        %2700 = vmatpush1.msra.mxu0 %v2645
        %2701 = vmatprep.subr.mxu0 %v2670
        %2702 = vmatpush1.msra.mxu0 %v2650
        %2703 = vmatprep.subr.mxu0 0.0
        %2704 = vmatpush1.msra.mxu0 0.0
        %2705 = vmatprep.subr.mxu0 0.0
        %2706 = vmatpush1.msra.mxu0 0.0
        %2707 = vmatprep.subr.mxu0 0.0
        %2708 = vmatpush1.msra.mxu0 0.0
        %2709 = vmatprep.subr.mxu0 0.0
        %2710 = vmatpush1.msra.mxu0 0.0
        %2711 = vmatprep.subr.mxu0 0.0
        %2712 = vmatpush1.msra.mxu0 0.0
        %2713 = vmatprep.subr.mxu0 0.0
        %2714 = vmatpush1.msra.mxu0 0.0
        %2715 = vmatprep.subr.mxu0 0.0
        %2716 = vmatpush1.msra.mxu0 0.0
        %2717 = vmatprep.subr.mxu0 0.0
        %2718 = vmatpush1.msra.mxu0 0.0
        %2719 = vmatprep.subr.mxu0 0.0
        %2720 = vmatpush1.msra.mxu0 0.0
        %2721 = vmatprep.subr.mxu0 0.0
        %2722 = vmatpush1.msra.mxu0 0.0
        %2723 = vmatprep.subr.mxu0 0.0
        %2724 = vmatpush1.msra.mxu0 0.0
        %2725 = vmatprep.subr.mxu0 0.0
        %2726 = vmatpush1.msra.mxu0 0.0
        %2727 = vmatprep.subr.mxu0 0.0
        %2728 = vmatpush1.msra.mxu0 0.0
        %2729 = vmatprep.subr.mxu0 0.0
        %2730 = vmatpush1.msra.mxu0 0.0
        %2731 = vmatprep.subr.mxu0 0.0
        %2732 = vmatpush1.msra.mxu0 0.0
        %2733 = vmatprep.subr.mxu0 0.0
        %2734 = vmatpush1.msra.mxu0 0.0
        %2735 = vmatprep.mubr.f32.mxu0 0.0
        %2736 = vmatmul.mubr.f32.gmra.mrb[0].mxu0 %v653
        %v2737 = vpop.f32.mrb[0].mxu0
        %v2738 = vadd.f32 0.0, %v2737
        %v2739 = vpop.f32.mrb[0].mxu0
        %v2740 = vadd.f32 0.0, %v2739
        %2741 = vdwg.mxu0
        %2742 = vmatprep.subr.mxu0 0.0
        %2743 = vmatpush1.msra.mxu0 %v637
        %2744 = vmatprep.subr.mxu0 0.0
        %2745 = vmatpush1.msra.mxu0 %v638
        %2746 = vmatprep.subr.mxu0 0.0
        %2747 = vmatpush1.msra.mxu0 %v639
        %2748 = vmatprep.subr.mxu0 0.0
        %2749 = vmatpush1.msra.mxu0 %v640
        %2750 = vmatprep.subr.mxu0 0.0
        %2751 = vmatpush1.msra.mxu0 %v641
        %2752 = vmatprep.subr.mxu0 0.0
        %2753 = vmatpush1.msra.mxu0 %v642
        %2754 = vmatprep.subr.mxu0 0.0
        %2755 = vmatpush1.msra.mxu0 %v643
        %2756 = vmatprep.subr.mxu0 0.0
        %2757 = vmatpush1.msra.mxu0 %v644
        %2758 = vmatprep.subr.mxu0 0.0
        %2759 = vmatpush1.msra.mxu0 %v645
        %2760 = vmatprep.subr.mxu0 0.0
        %2761 = vmatpush1.msra.mxu0 %v646
        %2762 = vmatprep.subr.mxu0 0.0
        %2763 = vmatpush1.msra.mxu0 %v647
        %2764 = vmatprep.subr.mxu0 0.0
        %2765 = vmatpush1.msra.mxu0 %v648
        %2766 = vmatprep.subr.mxu0 0.0
        %2767 = vmatpush1.msra.mxu0 %v649
        %2768 = vmatprep.subr.mxu0 0.0
        %2769 = vmatpush1.msra.mxu0 %v650
        %2770 = vmatprep.subr.mxu0 0.0
        %2771 = vmatpush1.msra.mxu0 %v651
        %2772 = vmatprep.subr.mxu0 0.0
        %2773 = vmatpush1.msra.mxu0 %v652
        %2774 = vmatprep.subr.mxu0 0.0
        %2775 = vmatpush1.msra.mxu0 0.0
        %2776 = vmatprep.subr.mxu0 0.0
        %2777 = vmatpush1.msra.mxu0 0.0
        %2778 = vmatprep.subr.mxu0 0.0
        %2779 = vmatpush1.msra.mxu0 0.0
        %2780 = vmatprep.subr.mxu0 0.0
        %2781 = vmatpush1.msra.mxu0 0.0
        %2782 = vmatprep.subr.mxu0 0.0
        %2783 = vmatpush1.msra.mxu0 0.0
        %2784 = vmatprep.subr.mxu0 0.0
        %2785 = vmatpush1.msra.mxu0 0.0
        %2786 = vmatprep.subr.mxu0 0.0
        %2787 = vmatpush1.msra.mxu0 0.0
        %2788 = vmatprep.subr.mxu0 0.0
        %2789 = vmatpush1.msra.mxu0 0.0
        %2790 = vmatprep.subr.mxu0 0.0
        %2791 = vmatpush1.msra.mxu0 0.0
        %2792 = vmatprep.subr.mxu0 0.0
        %2793 = vmatpush1.msra.mxu0 0.0
        %2794 = vmatprep.subr.mxu0 0.0
        %2795 = vmatpush1.msra.mxu0 0.0
        %2796 = vmatprep.subr.mxu0 0.0
        %2797 = vmatpush1.msra.mxu0 0.0
        %2798 = vmatprep.subr.mxu0 0.0
        %2799 = vmatpush1.msra.mxu0 0.0
        %2800 = vmatprep.subr.mxu0 0.0
        %2801 = vmatpush1.msra.mxu0 0.0
        %2802 = vmatprep.subr.mxu0 0.0
        %2803 = vmatpush1.msra.mxu0 0.0
        %2804 = vmatprep.subr.mxu0 0.0
        %2805 = vmatpush1.msra.mxu0 0.0
        %2806 = vmatprep.mubr.f32.mxu0 0.0
        %2807 = vmatmul.mubr.f32.gmra.mrb[0].mxu0 %v2738
        %v2808 = vpop.f32.mrb[0].mxu0
        %v2809 = vadd.f32 0.0, %v2808
        %v2810 = vpop.f32.mrb[0].mxu0
        %2811 = vdwg.mxu0
        %v2812 = vmul.f32 %v2809, 0.0625
        %2813 = vmatprep.subr.mxu0 0.0
        %2814 = vmatpush1.msra.mxu0 %v637
        %2815 = vmatprep.subr.mxu0 0.0
        %2816 = vmatpush1.msra.mxu0 %v638
        %2817 = vmatprep.subr.mxu0 0.0
        %2818 = vmatpush1.msra.mxu0 %v639
        %2819 = vmatprep.subr.mxu0 0.0
        %2820 = vmatpush1.msra.mxu0 %v640
        %2821 = vmatprep.subr.mxu0 0.0
        %2822 = vmatpush1.msra.mxu0 %v641
        %2823 = vmatprep.subr.mxu0 0.0
        %2824 = vmatpush1.msra.mxu0 %v642
        %2825 = vmatprep.subr.mxu0 0.0
        %2826 = vmatpush1.msra.mxu0 %v643
        %2827 = vmatprep.subr.mxu0 0.0
        %2828 = vmatpush1.msra.mxu0 %v644
        %2829 = vmatprep.subr.mxu0 0.0
        %2830 = vmatpush1.msra.mxu0 %v645
        %2831 = vmatprep.subr.mxu0 0.0
        %2832 = vmatpush1.msra.mxu0 %v646
        %2833 = vmatprep.subr.mxu0 0.0
        %2834 = vmatpush1.msra.mxu0 %v647
        %2835 = vmatprep.subr.mxu0 0.0
        %2836 = vmatpush1.msra.mxu0 %v648
        %2837 = vmatprep.subr.mxu0 0.0
        %2838 = vmatpush1.msra.mxu0 %v649
        %2839 = vmatprep.subr.mxu0 0.0
        %2840 = vmatpush1.msra.mxu0 %v650
        %2841 = vmatprep.subr.mxu0 0.0
        %2842 = vmatpush1.msra.mxu0 %v651
        %2843 = vmatprep.subr.mxu0 0.0
        %2844 = vmatpush1.msra.mxu0 %v652
        %2845 = vmatprep.subr.mxu0 0.0
        %2846 = vmatpush1.msra.mxu0 0.0
        %2847 = vmatprep.subr.mxu0 0.0
        %2848 = vmatpush1.msra.mxu0 0.0
        %2849 = vmatprep.subr.mxu0 0.0
        %2850 = vmatpush1.msra.mxu0 0.0
        %2851 = vmatprep.subr.mxu0 0.0
        %2852 = vmatpush1.msra.mxu0 0.0
        %2853 = vmatprep.subr.mxu0 0.0
        %2854 = vmatpush1.msra.mxu0 0.0
        %2855 = vmatprep.subr.mxu0 0.0
        %2856 = vmatpush1.msra.mxu0 0.0
        %2857 = vmatprep.subr.mxu0 0.0
        %2858 = vmatpush1.msra.mxu0 0.0
        %2859 = vmatprep.subr.mxu0 0.0
        %2860 = vmatpush1.msra.mxu0 0.0
        %2861 = vmatprep.subr.mxu0 0.0
        %2862 = vmatpush1.msra.mxu0 0.0
        %2863 = vmatprep.subr.mxu0 0.0
        %2864 = vmatpush1.msra.mxu0 0.0
        %2865 = vmatprep.subr.mxu0 0.0
        %2866 = vmatpush1.msra.mxu0 0.0
        %2867 = vmatprep.subr.mxu0 0.0
        %2868 = vmatpush1.msra.mxu0 0.0
        %2869 = vmatprep.subr.mxu0 0.0
        %2870 = vmatpush1.msra.mxu0 0.0
        %2871 = vmatprep.subr.mxu0 0.0
        %2872 = vmatpush1.msra.mxu0 0.0
        %2873 = vmatprep.subr.mxu0 0.0
        %2874 = vmatpush1.msra.mxu0 0.0
        %2875 = vmatprep.subr.mxu0 0.0
        %2876 = vmatpush1.msra.mxu0 0.0
        %2877 = vmatprep.mubr.f32.mxu0 0.0
        %2878 = vmatmul.mubr.f32.gmra.mrb[0].mxu0 %v2740
        %v2879 = vpop.f32.mrb[0].mxu0
        %v2880 = vadd.f32 0.0, %v2879
        %v2881 = vpop.f32.mrb[0].mxu0
        %2882 = vdwg.mxu0
        %v2883 = vmul.f32 %v2880, 0.0625
        %v2884 = vmul.f32 %v2812, %v2812
        %v2885 = vsub.f32 %v2883, %v2884
        %v2886 = vmax.f32 %v2885, 0.0
        %v2887 = vadd.f32 %v2886, 1e-05
        %v2888 = vrsqrt.pop %v2887
        %v2890 = vlaneseq
        %v2891 = vshrl.u32 %v2890, 7
        %v2892 = vsub.s32 0, %v2891
        %v2893 = vrot.slane %v2653, %v2892
        %v2895 = vmul.f32 %v2888, %v2893
        %v2896 = vmul.f32 %v2812, %v2895
        %v2898 = vlaneseq
        %v2899 = vshrl.u32 %v2898, 7
        %v2900 = vsub.s32 0, %v2899
        %v2901 = vrot.slane %v2654, %v2900
        %v2903 = vsub.f32 %v2901, %v2896
        %2904 = vmatprep.subr.mxu0 %v2903
        %2905 = vmatpush1.msra.mxu0 %v2895
        %2906 = vmatprep.subr.mxu0 0.0
        %2907 = vmatpush1.msra.mxu0 0.0
        %2908 = vmatprep.subr.mxu0 0.0
        %2909 = vmatpush1.msra.mxu0 0.0
        %2910 = vmatprep.subr.mxu0 0.0
        %2911 = vmatpush1.msra.mxu0 0.0
        %2912 = vmatprep.subr.mxu0 0.0
        %2913 = vmatpush1.msra.mxu0 0.0
        %2914 = vmatprep.subr.mxu0 0.0
        %2915 = vmatpush1.msra.mxu0 0.0
        %2916 = vmatprep.subr.mxu0 0.0
        %2917 = vmatpush1.msra.mxu0 0.0
        %2918 = vmatprep.subr.mxu0 0.0
        %2919 = vmatpush1.msra.mxu0 0.0
        %2920 = vmatprep.subr.mxu0 0.0
        %2921 = vmatpush1.msra.mxu0 0.0
        %2922 = vmatprep.subr.mxu0 0.0
        %2923 = vmatpush1.msra.mxu0 0.0
        %2924 = vmatprep.subr.mxu0 0.0
        %2925 = vmatpush1.msra.mxu0 0.0
        %2926 = vmatprep.subr.mxu0 0.0
        %2927 = vmatpush1.msra.mxu0 0.0
        %2928 = vmatprep.subr.mxu0 0.0
        %2929 = vmatpush1.msra.mxu0 0.0
        %2930 = vmatprep.subr.mxu0 0.0
        %2931 = vmatpush1.msra.mxu0 0.0
        %2932 = vmatprep.subr.mxu0 0.0
        %2933 = vmatpush1.msra.mxu0 0.0
        %2934 = vmatprep.subr.mxu0 0.0
        %2935 = vmatpush1.msra.mxu0 0.0
        %2936 = vmatprep.subr.mxu0 0.0
        %2937 = vmatpush1.msra.mxu0 0.0
        %2938 = vmatprep.subr.mxu0 0.0
        %2939 = vmatpush1.msra.mxu0 0.0
        %2940 = vmatprep.subr.mxu0 0.0
        %2941 = vmatpush1.msra.mxu0 0.0
        %2942 = vmatprep.subr.mxu0 0.0
        %2943 = vmatpush1.msra.mxu0 0.0
        %2944 = vmatprep.subr.mxu0 0.0
        %2945 = vmatpush1.msra.mxu0 0.0
        %2946 = vmatprep.subr.mxu0 0.0
        %2947 = vmatpush1.msra.mxu0 0.0
        %2948 = vmatprep.subr.mxu0 0.0
        %2949 = vmatpush1.msra.mxu0 0.0
        %2950 = vmatprep.subr.mxu0 0.0
        %2951 = vmatpush1.msra.mxu0 0.0
        %2952 = vmatprep.subr.mxu0 0.0
        %2953 = vmatpush1.msra.mxu0 0.0
        %2954 = vmatprep.subr.mxu0 0.0
        %2955 = vmatpush1.msra.mxu0 0.0
        %2956 = vmatprep.subr.mxu0 0.0
        %2957 = vmatpush1.msra.mxu0 0.0
        %2958 = vmatprep.subr.mxu0 0.0
        %2959 = vmatpush1.msra.mxu0 0.0
        %2960 = vmatprep.subr.mxu0 0.0
        %2961 = vmatpush1.msra.mxu0 0.0
        %2962 = vmatprep.subr.mxu0 0.0
        %2963 = vmatpush1.msra.mxu0 0.0
        %2964 = vmatprep.subr.mxu0 0.0
        %2965 = vmatpush1.msra.mxu0 0.0
        %2966 = vmatprep.subr.mxu0 0.0
        %2967 = vmatpush1.msra.mxu0 0.0
        %2968 = vmatprep.mubr.f32.mxu0 0.0
        %2969 = vmatmul.mubr.f32.gmra.mrb[0].mxu0 %v1172
        %v2970 = vpop.f32.mrb[0].mxu0
        %v2971 = vadd.f32 0.0, %v2970
        %v2972 = vpop.f32.mrb[0].mxu0
        %v2973 = vadd.f32 0.0, %v2972
        %2974 = vmatprep.mubr.f32.mxu0 0.0
        %2975 = vmatmul.mubr.f32.gmra.mrb[0].mxu0 %v1175
        %v2976 = vpop.f32.mrb[0].mxu0
        %v2977 = vadd.f32 0.0, %v2976
        %v2978 = vpop.f32.mrb[0].mxu0
        %v2979 = vadd.f32 0.0, %v2978
        %2980 = vmatprep.mubr.f32.mxu0 0.0
        %2981 = vmatmul.mubr.f32.gmra.mrb[0].mxu0 %v1178
        %v2982 = vpop.f32.mrb[0].mxu0
        %v2983 = vadd.f32 0.0, %v2982
        %v2984 = vpop.f32.mrb[0].mxu0
        %v2985 = vadd.f32 0.0, %v2984
        %2986 = vmatprep.mubr.f32.mxu0 0.0
        %2987 = vmatmul.mubr.f32.gmra.mrb[0].mxu0 %v1181
        %v2988 = vpop.f32.mrb[0].mxu0
        %v2989 = vadd.f32 0.0, %v2988
        %v2990 = vpop.f32.mrb[0].mxu0
        %v2991 = vadd.f32 0.0, %v2990
        %2992 = vmatprep.mubr.f32.mxu0 0.0
        %2993 = vmatmul.mubr.f32.gmra.mrb[0].mxu0 %v1184
        %v2994 = vpop.f32.mrb[0].mxu0
        %v2995 = vadd.f32 0.0, %v2994
        %v2996 = vpop.f32.mrb[0].mxu0
        %v2997 = vadd.f32 0.0, %v2996
        %2998 = vmatprep.mubr.f32.mxu0 0.0
        %2999 = vmatmul.mubr.f32.gmra.mrb[0].mxu0 %v1187
        %v3000 = vpop.f32.mrb[0].mxu0
        %v3001 = vadd.f32 0.0, %v3000
        %v3002 = vpop.f32.mrb[0].mxu0
        %v3003 = vadd.f32 0.0, %v3002
        %3004 = vmatprep.mubr.f32.mxu0 0.0
        %3005 = vmatmul.mubr.f32.gmra.mrb[0].mxu0 %v1190
        %v3006 = vpop.f32.mrb[0].mxu0
        %v3007 = vadd.f32 0.0, %v3006
        %v3008 = vpop.f32.mrb[0].mxu0
        %v3009 = vadd.f32 0.0, %v3008
        %3010 = vmatprep.mubr.f32.mxu0 0.0
        %3011 = vmatmul.mubr.f32.gmra.mrb[0].mxu0 %v1193
        %v3012 = vpop.f32.mrb[0].mxu0
        %v3013 = vadd.f32 0.0, %v3012
        %v3014 = vpop.f32.mrb[0].mxu0
        %v3015 = vadd.f32 0.0, %v3014
        %3016 = vmatprep.mubr.f32.mxu0 0.0
        %3017 = vmatmul.mubr.f32.gmra.mrb[0].mxu0 %v1196
        %v3018 = vpop.f32.mrb[0].mxu0
        %v3019 = vadd.f32 0.0, %v3018
        %v3020 = vpop.f32.mrb[0].mxu0
        %v3021 = vadd.f32 0.0, %v3020
        %3022 = vmatprep.mubr.f32.mxu0 0.0
        %3023 = vmatmul.mubr.f32.gmra.mrb[0].mxu0 %v1199
        %v3024 = vpop.f32.mrb[0].mxu0
        %v3025 = vadd.f32 0.0, %v3024
        %v3026 = vpop.f32.mrb[0].mxu0
        %v3027 = vadd.f32 0.0, %v3026
        %3028 = vmatprep.mubr.f32.mxu0 0.0
        %3029 = vmatmul.mubr.f32.gmra.mrb[0].mxu0 %v1202
        %v3030 = vpop.f32.mrb[0].mxu0
        %v3031 = vadd.f32 0.0, %v3030
        %v3032 = vpop.f32.mrb[0].mxu0
        %v3033 = vadd.f32 0.0, %v3032
        %3034 = vmatprep.mubr.f32.mxu0 0.0
        %3035 = vmatmul.mubr.f32.gmra.mrb[0].mxu0 %v1205
        %v3036 = vpop.f32.mrb[0].mxu0
        %v3037 = vadd.f32 0.0, %v3036
        %v3038 = vpop.f32.mrb[0].mxu0
        %v3039 = vadd.f32 0.0, %v3038
        %3040 = vmatprep.mubr.f32.mxu0 0.0
        %3041 = vmatmul.mubr.f32.gmra.mrb[0].mxu0 %v1208
        %v3042 = vpop.f32.mrb[0].mxu0
        %v3043 = vadd.f32 0.0, %v3042
        %v3044 = vpop.f32.mrb[0].mxu0
        %v3045 = vadd.f32 0.0, %v3044
        %3046 = vmatprep.mubr.f32.mxu0 0.0
        %3047 = vmatmul.mubr.f32.gmra.mrb[0].mxu0 %v1211
        %v3048 = vpop.f32.mrb[0].mxu0
        %v3049 = vadd.f32 0.0, %v3048
        %v3050 = vpop.f32.mrb[0].mxu0
        %v3051 = vadd.f32 0.0, %v3050
        %3052 = vmatprep.mubr.f32.mxu0 0.0
        %3053 = vmatmul.mubr.f32.gmra.mrb[0].mxu0 %v1214
        %v3054 = vpop.f32.mrb[0].mxu0
        %v3055 = vadd.f32 0.0, %v3054
        %v3056 = vpop.f32.mrb[0].mxu0
        %v3057 = vadd.f32 0.0, %v3056
        %3058 = vmatprep.mubr.f32.mxu0 0.0
        %3059 = vmatmul.mubr.f32.gmra.mrb[0].mxu0 %v1217
        %v3060 = vpop.f32.mrb[0].mxu0
        %v3061 = vadd.f32 0.0, %v3060
        %v3062 = vpop.f32.mrb[0].mxu0
        %v3063 = vadd.f32 0.0, %v3062
        %3064 = vdwg.mxu0
        %v3065 = vmul.f32 %v2575, %v2971
        %v3066 = vmul.f32 %v2580, %v2977
        %v3067 = vmul.f32 %v2585, %v2983
        %v3068 = vmul.f32 %v2590, %v2989
        %v3069 = vmul.f32 %v2595, %v2995
        %v3070 = vmul.f32 %v2600, %v3001
        %v3071 = vmul.f32 %v2605, %v3007
        %v3072 = vmul.f32 %v2610, %v3013
        %v3073 = vmul.f32 %v2615, %v3019
        %v3074 = vmul.f32 %v2620, %v3025
        %v3075 = vmul.f32 %v2625, %v3031
        %v3076 = vmul.f32 %v2630, %v3037
        %v3077 = vmul.f32 %v2635, %v3043
        %v3078 = vmul.f32 %v2640, %v3049
        %v3079 = vmul.f32 %v2645, %v3055
        %v3080 = vmul.f32 %v2650, %v3061
        %v3081 = vadd.f32 %v3065, %v2973
        %v3082 = vadd.f32 %v3066, %v2979
        %v3083 = vadd.f32 %v3067, %v2985
        %v3084 = vadd.f32 %v3068, %v2991
        %v3085 = vadd.f32 %v3069, %v2997
        %v3086 = vadd.f32 %v3070, %v3003
        %v3087 = vadd.f32 %v3071, %v3009
        %v3088 = vadd.f32 %v3072, %v3015
        %v3089 = vadd.f32 %v3073, %v3021
        %v3090 = vadd.f32 %v3074, %v3027
        %v3091 = vadd.f32 %v3075, %v3033
        %v3092 = vadd.f32 %v3076, %v3039
        %v3093 = vadd.f32 %v3077, %v3045
        %v3094 = vadd.f32 %v3078, %v3051
        %v3095 = vadd.f32 %v3079, %v3057
        %v3096 = vadd.f32 %v3080, %v3063
        %v3097 = vmin.f32 %v3081, 20.0
        %v3098 = vmin.f32 %v3082, 20.0
        %v3099 = vmin.f32 %v3083, 20.0
        %v3100 = vmin.f32 %v3084, 20.0
        %v3101 = vmin.f32 %v3085, 20.0
        %v3102 = vmin.f32 %v3086, 20.0
        %v3103 = vmin.f32 %v3087, 20.0
        %v3104 = vmin.f32 %v3088, 20.0
        %v3105 = vmin.f32 %v3089, 20.0
        %v3106 = vmin.f32 %v3090, 20.0
        %v3107 = vmin.f32 %v3091, 20.0
        %v3108 = vmin.f32 %v3092, 20.0
        %v3109 = vmin.f32 %v3093, 20.0
        %v3110 = vmin.f32 %v3094, 20.0
        %v3111 = vmin.f32 %v3095, 20.0
        %v3112 = vmin.f32 %v3096, 20.0
        %v3113 = vmul.f32 %v3097, 1.442695
        %v3114 = vpow.pop %v3113
        %v3115 = vmul.f32 %v3098, 1.442695
        %v3116 = vpow.pop %v3115
        %v3117 = vmul.f32 %v3099, 1.442695
        %v3118 = vpow.pop %v3117
        %v3119 = vmul.f32 %v3100, 1.442695
        %v3120 = vpow.pop %v3119
        %v3121 = vmul.f32 %v3101, 1.442695
        %v3122 = vpow.pop %v3121
        %v3123 = vmul.f32 %v3102, 1.442695
        %v3124 = vpow.pop %v3123
        %v3125 = vmul.f32 %v3103, 1.442695
        %v3126 = vpow.pop %v3125
        %v3127 = vmul.f32 %v3104, 1.442695
        %v3128 = vpow.pop %v3127
        %v3129 = vmul.f32 %v3105, 1.442695
        %v3130 = vpow.pop %v3129
        %v3131 = vmul.f32 %v3106, 1.442695
        %v3132 = vpow.pop %v3131
        %v3133 = vmul.f32 %v3107, 1.442695
        %v3134 = vpow.pop %v3133
        %v3135 = vmul.f32 %v3108, 1.442695
        %v3136 = vpow.pop %v3135
        %v3137 = vmul.f32 %v3109, 1.442695
        %v3138 = vpow.pop %v3137
        %v3139 = vmul.f32 %v3110, 1.442695
        %v3140 = vpow.pop %v3139
        %v3141 = vmul.f32 %v3111, 1.442695
        %v3142 = vpow.pop %v3141
        %v3143 = vmul.f32 %v3112, 1.442695
        %v3144 = vpow.pop %v3143
        %v3145 = vadd.f32 %v3114, 1.0
        %v3146 = vadd.f32 %v3116, 1.0
        %v3147 = vadd.f32 %v3118, 1.0
        %v3148 = vadd.f32 %v3120, 1.0
        %v3149 = vadd.f32 %v3122, 1.0
        %v3150 = vadd.f32 %v3124, 1.0
        %v3151 = vadd.f32 %v3126, 1.0
        %v3152 = vadd.f32 %v3128, 1.0
        %v3153 = vadd.f32 %v3130, 1.0
        %v3154 = vadd.f32 %v3132, 1.0
        %v3155 = vadd.f32 %v3134, 1.0
        %v3156 = vadd.f32 %v3136, 1.0
        %v3157 = vadd.f32 %v3138, 1.0
        %v3158 = vadd.f32 %v3140, 1.0
        %v3159 = vadd.f32 %v3142, 1.0
        %v3160 = vadd.f32 %v3144, 1.0
        %v3161 = vmul.f32 %v3145, %v3145
        %v3162 = vmul.f32 %v3146, %v3146
        %v3163 = vmul.f32 %v3147, %v3147
        %v3164 = vmul.f32 %v3148, %v3148
        %v3165 = vmul.f32 %v3149, %v3149
        %v3166 = vmul.f32 %v3150, %v3150
        %v3167 = vmul.f32 %v3151, %v3151
        %v3168 = vmul.f32 %v3152, %v3152
        %v3169 = vmul.f32 %v3153, %v3153
        %v3170 = vmul.f32 %v3154, %v3154
        %v3171 = vmul.f32 %v3155, %v3155
        %v3172 = vmul.f32 %v3156, %v3156
        %v3173 = vmul.f32 %v3157, %v3157
        %v3174 = vmul.f32 %v3158, %v3158
        %v3175 = vmul.f32 %v3159, %v3159
        %v3176 = vmul.f32 %v3160, %v3160
        %v3177 = vsub.f32 %v3161, 1.0
        %v3178 = vsub.f32 %v3162, 1.0
        %v3179 = vsub.f32 %v3163, 1.0
        %v3180 = vsub.f32 %v3164, 1.0
        %v3181 = vsub.f32 %v3165, 1.0
        %v3182 = vsub.f32 %v3166, 1.0
        %v3183 = vsub.f32 %v3167, 1.0
        %v3184 = vsub.f32 %v3168, 1.0
        %v3185 = vsub.f32 %v3169, 1.0
        %v3186 = vsub.f32 %v3170, 1.0
        %v3187 = vsub.f32 %v3171, 1.0
        %v3188 = vsub.f32 %v3172, 1.0
        %v3189 = vsub.f32 %v3173, 1.0
        %v3190 = vsub.f32 %v3174, 1.0
        %v3191 = vsub.f32 %v3175, 1.0
        %v3192 = vsub.f32 %v3176, 1.0
        %v3193 = vadd.f32 %v3161, 1.0
        %v3194 = vadd.f32 %v3162, 1.0
        %v3195 = vadd.f32 %v3163, 1.0
        %v3196 = vadd.f32 %v3164, 1.0
        %v3197 = vadd.f32 %v3165, 1.0
        %v3198 = vadd.f32 %v3166, 1.0
        %v3199 = vadd.f32 %v3167, 1.0
        %v3200 = vadd.f32 %v3168, 1.0
        %v3201 = vadd.f32 %v3169, 1.0
        %v3202 = vadd.f32 %v3170, 1.0
        %v3203 = vadd.f32 %v3171, 1.0
        %v3204 = vadd.f32 %v3172, 1.0
        %v3205 = vadd.f32 %v3173, 1.0
        %v3206 = vadd.f32 %v3174, 1.0
        %v3207 = vadd.f32 %v3175, 1.0
        %v3208 = vadd.f32 %v3176, 1.0
        %v3209 = vrcp.pop %v3193
        %v3210 = vrcp.pop %v3194
        %v3211 = vrcp.pop %v3195
        %v3212 = vrcp.pop %v3196
        %v3213 = vrcp.pop %v3197
        %v3214 = vrcp.pop %v3198
        %v3215 = vrcp.pop %v3199
        %v3216 = vrcp.pop %v3200
        %v3217 = vrcp.pop %v3201
        %v3218 = vrcp.pop %v3202
        %v3219 = vrcp.pop %v3203
        %v3220 = vrcp.pop %v3204
        %v3221 = vrcp.pop %v3205
        %v3222 = vrcp.pop %v3206
        %v3223 = vrcp.pop %v3207
        %v3224 = vrcp.pop %v3208
        %v3225 = vmul.f32 %v3177, %v3209
        %v3226 = vmul.f32 %v3178, %v3210
        %v3227 = vmul.f32 %v3179, %v3211
        %v3228 = vmul.f32 %v3180, %v3212
        %v3229 = vmul.f32 %v3181, %v3213
        %v3230 = vmul.f32 %v3182, %v3214
        %v3231 = vmul.f32 %v3183, %v3215
        %v3232 = vmul.f32 %v3184, %v3216
        %v3233 = vmul.f32 %v3185, %v3217
        %v3234 = vmul.f32 %v3186, %v3218
        %v3235 = vmul.f32 %v3187, %v3219
        %v3236 = vmul.f32 %v3188, %v3220
        %v3237 = vmul.f32 %v3189, %v3221
        %v3238 = vmul.f32 %v3190, %v3222
        %v3239 = vmul.f32 %v3191, %v3223
        %v3240 = vmul.f32 %v3192, %v3224
        %vm3241 = vcmp.gt.f32.partialorder %v3081, 20.0
        %vm3242 = vcmp.gt.f32.partialorder %v3082, 20.0
        %vm3243 = vcmp.gt.f32.partialorder %v3083, 20.0
        %vm3244 = vcmp.gt.f32.partialorder %v3084, 20.0
        %vm3245 = vcmp.gt.f32.partialorder %v3085, 20.0
        %vm3246 = vcmp.gt.f32.partialorder %v3086, 20.0
        %vm3247 = vcmp.gt.f32.partialorder %v3087, 20.0
        %vm3248 = vcmp.gt.f32.partialorder %v3088, 20.0
        %vm3249 = vcmp.gt.f32.partialorder %v3089, 20.0
        %vm3250 = vcmp.gt.f32.partialorder %v3090, 20.0
        %vm3251 = vcmp.gt.f32.partialorder %v3091, 20.0
        %vm3252 = vcmp.gt.f32.partialorder %v3092, 20.0
        %vm3253 = vcmp.gt.f32.partialorder %v3093, 20.0
        %vm3254 = vcmp.gt.f32.partialorder %v3094, 20.0
        %vm3255 = vcmp.gt.f32.partialorder %v3095, 20.0
        %vm3256 = vcmp.gt.f32.partialorder %v3096, 20.0
        %v3257 = vmul.f32 %v3081, %v3225
        %v3258 = vmul.f32 %v3082, %v3226
        %v3259 = vmul.f32 %v3083, %v3227
        %v3260 = vmul.f32 %v3084, %v3228
        %v3261 = vmul.f32 %v3085, %v3229
        %v3262 = vmul.f32 %v3086, %v3230
        %v3263 = vmul.f32 %v3087, %v3231
        %v3264 = vmul.f32 %v3088, %v3232
        %v3265 = vmul.f32 %v3089, %v3233
        %v3266 = vmul.f32 %v3090, %v3234
        %v3267 = vmul.f32 %v3091, %v3235
        %v3268 = vmul.f32 %v3092, %v3236
        %v3269 = vmul.f32 %v3093, %v3237
        %v3270 = vmul.f32 %v3094, %v3238
        %v3271 = vmul.f32 %v3095, %v3239
        %v3272 = vmul.f32 %v3096, %v3240
        %v3273 = vsel %vm3241, %v3081, %v3257
        %v3274 = vsel %vm3242, %v3082, %v3258
        %v3275 = vsel %vm3243, %v3083, %v3259
        %v3276 = vsel %vm3244, %v3084, %v3260
        %v3277 = vsel %vm3245, %v3085, %v3261
        %v3278 = vsel %vm3246, %v3086, %v3262
        %v3279 = vsel %vm3247, %v3087, %v3263
        %v3280 = vsel %vm3248, %v3088, %v3264
        %v3281 = vsel %vm3249, %v3089, %v3265
        %v3282 = vsel %vm3250, %v3090, %v3266
        %v3283 = vsel %vm3251, %v3091, %v3267
        %v3284 = vsel %vm3252, %v3092, %v3268
        %v3285 = vsel %vm3253, %v3093, %v3269
        %v3286 = vsel %vm3254, %v3094, %v3270
        %v3287 = vsel %vm3255, %v3095, %v3271
        %v3288 = vsel %vm3256, %v3096, %v3272
        %v3289 = vadd.f32 %v3273, %v827
        %v3290 = vadd.f32 %v3274, %v833
        %v3291 = vadd.f32 %v3275, %v839
        %v3292 = vadd.f32 %v3276, %v845
        %v3293 = vadd.f32 %v3277, %v851
        %v3294 = vadd.f32 %v3278, %v857
        %v3295 = vadd.f32 %v3279, %v863
        %v3296 = vadd.f32 %v3280, %v869
        %v3297 = vadd.f32 %v3281, %v875
        %v3298 = vadd.f32 %v3282, %v881
        %v3299 = vadd.f32 %v3283, %v887
        %v3300 = vadd.f32 %v3284, %v893
        %v3301 = vadd.f32 %v3285, %v899
        %v3302 = vadd.f32 %v3286, %v905
        %v3303 = vadd.f32 %v3287, %v911
        %v3304 = vadd.f32 %v3288, %v917
        %3305 = vst [vmem:[%s629] sm:$0xff] %v3289
        %3306 = vst [vmem:[%s629 + $0x8] sm:$0xff] %v3290
        %3307 = vst [vmem:[%s629 + $0x10] sm:$0xff] %v3291
        %3308 = vst [vmem:[%s629 + $0x18] sm:$0xff] %v3292
        %3309 = vst [vmem:[%s629 + $0x20] sm:$0xff] %v3293
        %3310 = vst [vmem:[%s629 + $0x28] sm:$0xff] %v3294
        %3311 = vst [vmem:[%s629 + $0x30] sm:$0xff] %v3295
        %3312 = vst [vmem:[%s629 + $0x38] sm:$0xff] %v3296
        %3313 = vst [vmem:[%s629 + $0x40] sm:$0xff] %v3297
        %3314 = vst [vmem:[%s629 + $0x48] sm:$0xff] %v3298
        %3315 = vst [vmem:[%s629 + $0x50] sm:$0xff] %v3299
        %3316 = vst [vmem:[%s629 + $0x58] sm:$0xff] %v3300
        %3317 = vst [vmem:[%s629 + $0x60] sm:$0xff] %v3301
        %3318 = vst [vmem:[%s629 + $0x68] sm:$0xff] %v3302
        %3319 = vst [vmem:[%s629 + $0x70] sm:$0xff] %v3303
        %3320 = vst [vmem:[%s629 + $0x78] sm:$0xff] %v3304
        %s3321 = sand.u32 %s369, 1
        %s3322 = scalar_lea.sflag [#allocation4], %s3321
        %s3323 = sand.u32 %s369, 1
        %s3324 = smul.addr %s3323, 128
        %s3325 = scalar_lea.vmem [#allocation17], %s3324
        // Predicated region
        $region117: #{tpu_custom_call.1} parent=79 // pred_check
          %p3326 = pneg %p379
        $region118: #{tpu_custom_call.1} parent=79 // pred_check_branch
          %3328 = sbr.rel (%p3326) target = $region120
        $region119: #{tpu_custom_call.1} parent=79 // pred_region
          %s3329 = smul.u32 16, %s36
          %s3331 = ssub.s32 2048, 2048
          %3332 = vsyncadd %s3322, %s3331
          %s3333 = smul.addr %s3329, 128
          %s3334 = scalar_lea.hbm %s15, %s3333
          %s3335 = sshll.u32 %s3325, 4
          %s3336 = int_to_ptr.vmem [resolvable:$true] %s3335
          %3341 = dma.vmem_to_hbm [thread:$0]  %s3336, 2048, %s3334, %s3322, 128, 128, 8
        $region120: #{tpu_custom_call.1} parent=79 // pred_fallthru
          _
      $region80: #{tpu_custom_call.1} parent=5 // pred_fallthru
        _
      %p3342 = scmp.le.s32.totalorder 2, %s31
      // Predicated region
      $region121: #{tpu_custom_call.1} parent=5 // pred_check
        %p3343 = pneg %p3342
      $region122: #{tpu_custom_call.1} parent=5 // pred_check_branch
        %3345 = sbr.rel (%p3343) target = $region124
      $region123: #{tpu_custom_call.1} parent=5 // pred_region
        %s3346 = ssub.s32 %s31, 2
        // Predicated region
        $region125: #{tpu_custom_call.1} parent=123 // pred_check
          %p3347 = pneg %p385
        $region126: #{tpu_custom_call.1} parent=123 // pred_check_branch
          %3349 = sbr.rel (%p3347) target = $region128
        $region127: #{tpu_custom_call.1} parent=123 // pred_region
          %s3350 = sand.u32 %s370, 1
          %s3351 = scalar_lea.sflag [#allocation4], %s3350
          %s3352 = sand.u32 %s370, 1
          %s3353 = smul.addr %s3352, 128
          %s3354 = scalar_lea.vmem [#allocation17], %s3353
          %3355 = dma.done %s3351, 2048
        $region128: #{tpu_custom_call.1} parent=123 // pred_fallthru
          _
      $region124: #{tpu_custom_call.1} parent=5 // pred_fallthru
        _
    $region6: #{tpu_custom_call.1} parent=1 // loop_footer
      %s35 = sadd.s32 1, %s31
    $region7: #{tpu_custom_call.1} parent=1 // loop_footer_branch
      %30 = sbr.rel target = $region3
    $region8: #{tpu_custom_call.1} parent=1 // loop_exit
      _
    %3356 = vsyncpa [#allocation3], 1
    %s3357 = scalar_lea.sflag [#allocation3], 1
    %3358 = vsyncpa %s3357, 1
    %3359 = vsyncpa [#allocation6], 1
    %3360 = vsyncpa [#allocation9], 1
    %3361 = vsyncpa [#allocation12], 1
    %3362 = vsyncpa [#allocation15], 1
    %3363 = vsyncpa [#allocation4], 1
    %s3364 = scalar_lea.sflag [#allocation4], 1
    %3365 = vsyncpa %s3364, 1

</llo_original>
